<compile_context>
chip_gen: v7x
topology: tpu7x:2x2x1
jax: 0.10.0
libtpu: 0.0.40
codegen_flags: <defaults>
</compile_context>

<pallas_src>
import functools

import numpy as np
import jax
import jax.numpy as jnp
from jax.experimental import pallas as pl
from jax.experimental.pallas import tpu as pltpu

_LANE = 128          # lane width
_CPAD = 128          # fixed channel padding for all activations


def _ceil_to(x, m):
    return ((x + m - 1) // m) * m


def _pad2d(a, shape, dtype):
    a = a.astype(dtype)
    if tuple(a.shape) == tuple(shape):
        return a
    return jnp.zeros(shape, dtype).at[:a.shape[0], :a.shape[1]].set(a)


# ---------------------------------------------------------------------------
# Pallas kernel 1: single-shot matmul (bf16 operands, f32 accum on the MXU)
# with fused bias (+ residual) (+ ReLU).  K is a single full block, so there
# is no k loop and no accumulator scratch.
# ---------------------------------------------------------------------------
def _mm_kernel(x_ref, w_ref, b_ref, o_ref, *, relu):
    y = jnp.dot(x_ref[...], w_ref[...], preferred_element_type=jnp.float32)
    y = y + b_ref[...]
    if relu:
        y = jnp.maximum(y, 0.0)
    o_ref[...] = y.astype(o_ref.dtype)


def _mm_res_kernel(x_ref, w_ref, b_ref, r_ref, o_ref, *, relu):
    y = jnp.dot(x_ref[...], w_ref[...], preferred_element_type=jnp.float32)
    y = y + b_ref[...] + r_ref[...]
    if relu:
        y = jnp.maximum(y, 0.0)
    o_ref[...] = y.astype(o_ref.dtype)


def matmul_bias_act(x, w, bias=None, residual=None, relu=False, tn=_LANE):
    """act(x @ w + bias [+ residual]).  Returns the padded (Mp, Np) f32 result."""
    M, K = x.shape
    K2, N = w.shape
    assert K == K2
    tm = min(256, _ceil_to(M, 8))          # right-size M tile, 8-aligned
    Mp = _ceil_to(M, tm)
    Kp = _ceil_to(K, 16)                   # one full-K block, bf16-sublane aligned
    Np = _ceil_to(N, tn)                   # lane-dense output (128 multiple)

    xp = _pad2d(x, (Mp, Kp), jnp.bfloat16)
    wp = _pad2d(w, (Kp, Np), jnp.bfloat16)
    bp = jnp.zeros((1, Np), jnp.float32)
    if bias is not None:
        bp = bp.at[0, :N].set(bias.astype(jnp.float32))

    x_spec = pl.BlockSpec((tm, Kp), lambda i, j: (i, 0))
    w_spec = pl.BlockSpec((Kp, tn), lambda i, j: (0, j))
    b_spec = pl.BlockSpec((1, tn), lambda i, j: (0, j))
    o_spec = pl.BlockSpec((tm, tn), lambda i, j: (i, j))

    if residual is None:
        kernel = functools.partial(_mm_kernel, relu=relu)
        in_specs = [x_spec, w_spec, b_spec]
        args = (xp, wp, bp)
    else:
        rp = _pad2d(residual, (Mp, Np), jnp.float32)
        kernel = functools.partial(_mm_res_kernel, relu=relu)
        in_specs = [x_spec, w_spec, b_spec,
                    pl.BlockSpec((tm, tn), lambda i, j: (i, j))]
        args = (xp, wp, bp, rp)

    # TODO(synk): on v7x (2 TensorCores) switch the M axis to pltpu.CORE_PARALLEL
    # so multi-tile matmuls (conv1 / layer1) split across cores; also set
    # vmem_limit_bytes explicitly if the model is run at 224x224 resolution.
    return pl.pallas_call(
        kernel,
        out_shape=jax.ShapeDtypeStruct((Mp, Np), jnp.float32),
        grid_spec=pltpu.PrefetchScalarGridSpec(
            num_scalar_prefetch=0,
            grid=(Mp // tm, Np // tn),
            in_specs=in_specs,
            out_specs=o_spec),
        compiler_params=pltpu.CompilerParams(
            dimension_semantics=("parallel", "parallel")),
    )(*args)


# ---------------------------------------------------------------------------
# Pallas kernel 2: 3x3 / stride 2 / pad 1 max pool.  The stride-2 sampling is
# expressed as four parity phases (cheap wrapper-side strided slices, ~1x the
# input bytes), and the kernel takes the 9-way max with unit-stride shifted
# slices on the VPU — no 9x HBM stack.
# ---------------------------------------------------------------------------
def _maxpool_kernel(ee_ref, eo_ref, oe_ref, oo_ref, o_ref, *, Ho, Wo):
    ee = ee_ref[...]
    eo = eo_ref[...]
    oe = oe_ref[...]
    oo = oo_ref[...]
    m = ee[:Ho, :Wo]
    m = jnp.maximum(m, ee[:Ho, 1:Wo + 1])
    m = jnp.maximum(m, ee[1:Ho + 1, :Wo])
    m = jnp.maximum(m, ee[1:Ho + 1, 1:Wo + 1])
    m = jnp.maximum(m, eo[:Ho, :Wo])
    m = jnp.maximum(m, eo[1:Ho + 1, :Wo])
    m = jnp.maximum(m, oe[:Ho, :Wo])
    m = jnp.maximum(m, oe[:Ho, 1:Wo + 1])
    m = jnp.maximum(m, oo[:Ho, :Wo])
    o_ref[...] = m


def maxpool_3x3_s2_p1(x):
    """x: (H, W, C) -> (Ho, Wo, C); matches nn.MaxPool2d(3, stride=2, padding=1)."""
    H, W, C = x.shape
    Ho = (H - 1) // 2 + 1
    Wo = (W - 1) // 2 + 1
    NEG = jnp.float32(-1e30)      # pad sentinel; inputs are post-ReLU (>= 0)
    xp = jnp.full((2 * Ho + 2, 2 * Wo + 2, C), NEG, jnp.float32)
    xp = xp.at[1:H + 1, 1:W + 1, :].set(x.astype(jnp.float32))
    phases = (xp[0::2, 0::2, :], xp[0::2, 1::2, :],
              xp[1::2, 0::2, :], xp[1::2, 1::2, :])   # each (Ho+1, Wo+1, C)
    in_spec = pl.BlockSpec((Ho + 1, Wo + 1, C), lambda i: (0, 0, 0))
    return pl.pallas_call(
        functools.partial(_maxpool_kernel, Ho=Ho, Wo=Wo),
        out_shape=jax.ShapeDtypeStruct((Ho, Wo, C), jnp.float32),
        grid_spec=pltpu.PrefetchScalarGridSpec(
            num_scalar_prefetch=0,
            grid=(1,),
            in_specs=[in_spec] * 4,
            out_specs=pl.BlockSpec((Ho, Wo, C), lambda i: (0, 0, 0))),
        compiler_params=pltpu.CompilerParams(
            dimension_semantics=("arbitrary",)),
    )(*phases)


# ---------------------------------------------------------------------------
# Conv / BN / block plumbing (im2col gather + parameter prep in plain JAX)
# ---------------------------------------------------------------------------
def _im2col(x, kh, kw, cin, stride, pad):
    """Patch matrix (Ho*Wo, kh*kw*cin).  Only the first `cin` channels of the
    (lane-padded) activation are gathered, so K stays tight."""
    H, W, _ = x.shape
    xp = jnp.pad(x[:, :, :cin], ((pad, pad), (pad, pad), (0, 0)))
    Ho = (H + 2 * pad - kh) // stride + 1
    Wo = (W + 2 * pad - kw) // stride + 1
    cols = [xp[i:i + Ho * stride:stride, j:j + Wo * stride:stride, :]
            for i in range(kh) for j in range(kw)]
    patches = jnp.concatenate(cols, axis=-1)          # (Ho, Wo, kh*kw*cin)
    return patches.reshape(Ho * Wo, kh * kw * cin), Ho, Wo


def _bn_affine(bn, eps=1e-5):
    scale = bn["gamma"] / jnp.sqrt(bn["var"] + eps)
    bias = bn["beta"] - bn["mean"] * scale
    return scale, bias


def conv_bn(x, w_hwio, bn, stride, pad, relu, residual=None):
    # TODO(synk): fuse the im2col window gather into the matmul kernel
    # (per-tap shifted windows accumulated in-kernel) to avoid the kh*kw
    # activation re-read at real ResNet resolutions.
    kh, kw, cin, cout = w_hwio.shape
    assert cout <= _CPAD
    patches, Ho, Wo = _im2col(x, kh, kw, cin, stride, pad)
    scale, bias = _bn_affine(bn)
    w2d = w_hwio.reshape(kh * kw * cin, cout) * scale[None, :]   # fold BN scale
    res2d = residual.reshape(-1, residual.shape[-1]) if residual is not None else None
    y = matmul_bias_act(patches, w2d, bias, res2d, relu)         # (Mp, _CPAD)
    M = Ho * Wo
    if y.shape[0] != M:
        y = y[:M]
    return y.reshape(Ho, Wo, _CPAD)


def basic_block(x, p, stride):
    # torchvision BasicBlock: relu(bn2(conv2(relu(bn1(conv1(x))))) + identity)
    out = conv_bn(x, p["w1"], p["bn1"], stride, 1, relu=True)
    if "wd" in p:
        identity = conv_bn(x, p["wd"], p["bnd"], stride, 0, relu=False)
    else:
        identity = x
    out = conv_bn(out, p["w2"], p["bn2"], 1, 1, relu=True, residual=identity)
    return out


def _adaptive_pool_matrix(in_size, out_size):
    # Exact F.adaptive_avg_pool2d bin semantics: [floor(i*n/o), ceil((i+1)*n/o))
    P = np.zeros((out_size, in_size), np.float32)
    for i in range(out_size):
        s = (i * in_size) // out_size
        e = -((-(i + 1) * in_size) // out_size)
        P[i, s:e] = 1.0 / (e - s)
    return jnp.asarray(P)


def head_pool(x, n_channels):
    """fc = spatial mean; att = cat(adaptive_pool 7x7, 14x14) rows (HW-major, C last)."""
    H, W, CP = x.shape
    X = x.reshape(H * W, CP)
    mean_row = jnp.full((1, H * W), 1.0 / (H * W), jnp.float32)
    Q7 = jnp.kron(_adaptive_pool_matrix(H, 7), _adaptive_pool_matrix(W, 7))
    Q14 = jnp.kron(_adaptive_pool_matrix(H, 14), _adaptive_pool_matrix(W, 14))
    A = jnp.concatenate([mean_row, Q7, Q14], axis=0)     # (1 + 49 + 196, H*W)
    out = matmul_bias_act(A, X, bias=None, residual=None, relu=False)
    n_rows = 1 + 7 * 7 + 14 * 14
    fc = out[0, :n_channels]          # == x.mean(3).mean(2).squeeze()
    att = out[1:n_rows, :n_channels]  # == cat([att1, att2], 0)
    return fc, att


def my_resnet_forward(params, img, att_size=14):
    # img: (3, H, W) CHW like PyTorch; batch dim of 1 is implicit and dropped.
    x = jnp.transpose(img, (1, 2, 0)).astype(jnp.float32)            # -> HWC
    x = conv_bn(x, params["conv1"], params["bn1"], stride=2, pad=3, relu=True)
    x = maxpool_3x3_s2_p1(x)
    x = basic_block(x, params["layer1"], stride=1)
    x = basic_block(x, params["layer2"], stride=2)
    x = basic_block(x, params["layer3"], stride=2)
    x = basic_block(x, params["layer4"], stride=2)
    n_channels = params["layer4"]["bn2"]["gamma"].shape[0]
    fc, att = head_pool(x, n_channels)
    return fc, att


# ---------------------------------------------------------------------------
# Deterministic synthetic parameters (tiny ResNet-ish backbone, 1 block/layer)
# ---------------------------------------------------------------------------
def _make_bn(key, c):
    k1, k2, k3, k4 = jax.random.split(key, 4)
    return dict(
        gamma=1.0 + 0.1 * jax.random.normal(k1, (c,), jnp.float32),
        beta=0.1 * jax.random.normal(k2, (c,), jnp.float32),
        mean=0.1 * jax.random.normal(k3, (c,), jnp.float32),
        var=1.0 + 0.1 * jax.random.uniform(k4, (c,), jnp.float32),
    )


def _make_conv(key, kh, kw, cin, cout):
    fan_in = kh * kw * cin
    return jax.random.normal(key, (kh, kw, cin, cout), jnp.float32) * np.sqrt(2.0 / fan_in)


def make_params(key, widths=(8, 8, 16, 32, 64)):
    stem_c, c1, c2, c3, c4 = widths
    keys = iter(jax.random.split(key, 64))
    params = dict(
        conv1=_make_conv(next(keys), 7, 7, 3, stem_c),
        bn1=_make_bn(next(keys), stem_c),
    )

    def block(cin, cout, downsample):
        p = dict(
            w1=_make_conv(next(keys), 3, 3, cin, cout),
            bn1=_make_bn(next(keys), cout),
            w2=_make_conv(next(keys), 3, 3, cout, cout),
            bn2=_make_bn(next(keys), cout),
        )
        if downsample:
            p["wd"] = _make_conv(next(keys), 1, 1, cin, cout)
            p["bnd"] = _make_bn(next(keys), cout)
        return p

    params["layer1"] = block(stem_c, c1, downsample=False)
    params["layer2"] = block(c1, c2, downsample=True)
    params["layer3"] = block(c2, c3, downsample=True)
    params["layer4"] = block(c3, c4, downsample=True)
    return params


if __name__ == "__main__":
    key = jax.random.PRNGKey(0)
    pkey, xkey = jax.random.split(key)
    params = make_params(pkey)
    img = jax.random.normal(xkey, (3, 64, 64), jnp.float32)   # CHW, like PyTorch

    fwd = jax.jit(my_resnet_forward)
    fc, att = fwd(params, img)
    jax.block_until_ready((fc, att))

    assert fc.shape == (64,), fc.shape                 # final channel count
    assert att.shape == (7 * 7 + 14 * 14, 64), att.shape
    print("KERNEL_OK")
</pallas_src>

<mosaic_0001>
module attributes {stable_mosaic.version = 11 : i64} {
  func.func @_mm_kernel(%arg0: i32, %arg1: i32, %arg2: memref<256x160xbf16, #tpu.memory_space<vmem>>, %arg3: memref<160x128xbf16, #tpu.memory_space<vmem>>, %arg4: memref<1x128xf32, #tpu.memory_space<vmem>>, %arg5: memref<256x128xf32, #tpu.memory_space<vmem>>) attributes {dimension_semantics = [#tpu.dimension_semantics<parallel>, #tpu.dimension_semantics<parallel>], iteration_bounds = array<i64: 4, 1>, scalar_prefetch = 0 : i64, scratch_operands = 0 : i64, tpu.core_type = #tpu.core_type<tc>, window_params = [{transform_indices = @transform_0, window_bounds = array<i64: 256, 160>}, {transform_indices = @transform_1, window_bounds = array<i64: 160, 128>}, {transform_indices = @transform_2, window_bounds = array<i64: 1, 128>}, {transform_indices = @transform_3, window_bounds = array<i64: 256, 128>}]} {
    %c0 = arith.constant 0 : index
    %c0_0 = arith.constant 0 : index
    %0 = vector.load %arg2[%c0, %c0_0] : memref<256x160xbf16, #tpu.memory_space<vmem>>, vector<256x160xbf16>
    %c0_1 = arith.constant 0 : index
    %c0_2 = arith.constant 0 : index
    %1 = vector.load %arg3[%c0_1, %c0_2] : memref<160x128xbf16, #tpu.memory_space<vmem>>, vector<160x128xbf16>
    %cst = arith.constant dense<0.000000e+00> : vector<256x128xf32>
    %2 = tpu.matmul %0, %1, %cst {dimension_numbers = #tpu.dot_dimension_numbers<[1], [0], [0], [1], [0, 0, 1, 1], [], []>} : vector<256x160xbf16>, vector<160x128xbf16>, vector<256x128xf32> -> vector<256x128xf32>
    %c0_3 = arith.constant 0 : index
    %c0_4 = arith.constant 0 : index
    %3 = vector.load %arg4[%c0_3, %c0_4] : memref<1x128xf32, #tpu.memory_space<vmem>>, vector<1x128xf32>
    %4 = vector.broadcast %3 : vector<1x128xf32> to vector<256x128xf32>
    %5 = arith.addf %2, %4 : vector<256x128xf32>
    %cst_5 = arith.constant 0.000000e+00 : f32
    %6 = vector.broadcast %cst_5 : f32 to vector<256x128xf32>
    %7 = arith.maximumf %5, %6 : vector<256x128xf32>
    %c0_6 = arith.constant 0 : index
    %c0_7 = arith.constant 0 : index
    %8 = vector.load %arg5[%c0_6, %c0_7] : memref<256x128xf32, #tpu.memory_space<vmem>>, vector<256x128xf32>
    tpu.vector_store %arg5[%c0_6, %c0_7], %7 {strides = array<i32>} : memref<256x128xf32, #tpu.memory_space<vmem>>, vector<256x128xf32>,
    return
  }
  func.func @transform_0(%arg0: i32, %arg1: i32) -> (i32, i32) {
    %c0_i32 = arith.constant 0 : i32
    %c0_i32_0 = arith.constant 0 : i32
    return %arg0, %c0_i32 : i32, i32
  }
  func.func @transform_1(%arg0: i32, %arg1: i32) -> (i32, i32) {
    %c0_i32 = arith.constant 0 : i32
    %c0_i32_0 = arith.constant 0 : i32
    return %c0_i32, %arg1 : i32, i32
  }
  func.func @transform_2(%arg0: i32, %arg1: i32) -> (i32, i32) {
    %c0_i32 = arith.constant 0 : i32
    %c0_i32_0 = arith.constant 0 : i32
    return %c0_i32, %arg1 : i32, i32
  }
  func.func @transform_3(%arg0: i32, %arg1: i32) -> (i32, i32) {
    %c0_i32 = arith.constant 0 : i32
    return %arg0, %arg1 : i32, i32
  }
}

module attributes {stable_mosaic.version = 11 : i64} {
  func.func @_maxpool_kernel(%arg0: i32, %arg1: memref<17x17x128xf32, #tpu.memory_space<vmem>>, %arg2: memref<17x17x128xf32, #tpu.memory_space<vmem>>, %arg3: memref<17x17x128xf32, #tpu.memory_space<vmem>>, %arg4: memref<17x17x128xf32, #tpu.memory_space<vmem>>, %arg5: memref<16x16x128xf32, #tpu.memory_space<vmem>>) attributes {dimension_semantics = [#tpu.dimension_semantics<arbitrary>], iteration_bounds = array<i64: 1>, scalar_prefetch = 0 : i64, scratch_operands = 0 : i64, tpu.core_type = #tpu.core_type<tc>, window_params = [{pipeline_mode = #tpu.pipeline_mode<synchronous>, transform_indices = @transform_0, window_bounds = array<i64: 17, 17, 128>}, {pipeline_mode = #tpu.pipeline_mode<synchronous>, transform_indices = @transform_1, window_bounds = array<i64: 17, 17, 128>}, {pipeline_mode = #tpu.pipeline_mode<synchronous>, transform_indices = @transform_2, window_bounds = array<i64: 17, 17, 128>}, {pipeline_mode = #tpu.pipeline_mode<synchronous>, transform_indices = @transform_3, window_bounds = array<i64: 17, 17, 128>}, {pipeline_mode = #tpu.pipeline_mode<synchronous>, transform_indices = @transform_4, window_bounds = array<i64: 16, 16, 128>}]} {
    %c0 = arith.constant 0 : index
    %c0_0 = arith.constant 0 : index
    %c0_1 = arith.constant 0 : index
    %0 = vector.load %arg1[%c0, %c0_0, %c0_1] : memref<17x17x128xf32, #tpu.memory_space<vmem>>, vector<17x17x128xf32>
    %c0_2 = arith.constant 0 : index
    %c0_3 = arith.constant 0 : index
    %c0_4 = arith.constant 0 : index
    %1 = vector.load %arg2[%c0_2, %c0_3, %c0_4] : memref<17x17x128xf32, #tpu.memory_space<vmem>>, vector<17x17x128xf32>
    %c0_5 = arith.constant 0 : index
    %c0_6 = arith.constant 0 : index
    %c0_7 = arith.constant 0 : index
    %2 = vector.load %arg3[%c0_5, %c0_6, %c0_7] : memref<17x17x128xf32, #tpu.memory_space<vmem>>, vector<17x17x128xf32>
    %c0_8 = arith.constant 0 : index
    %c0_9 = arith.constant 0 : index
    %c0_10 = arith.constant 0 : index
    %3 = vector.load %arg4[%c0_8, %c0_9, %c0_10] : memref<17x17x128xf32, #tpu.memory_space<vmem>>, vector<17x17x128xf32>
    %4 = vector.extract_strided_slice %0 {offsets = [0, 0, 0], sizes = [16, 16, 128], strides = [1, 1, 1]} : vector<17x17x128xf32> to vector<16x16x128xf32>
    %5 = vector.extract_strided_slice %0 {offsets = [0, 1, 0], sizes = [16, 16, 128], strides = [1, 1, 1]} : vector<17x17x128xf32> to vector<16x16x128xf32>
    %6 = arith.maximumf %4, %5 : vector<16x16x128xf32>
    %7 = vector.extract_strided_slice %0 {offsets = [1, 0, 0], sizes = [16, 16, 128], strides = [1, 1, 1]} : vector<17x17x128xf32> to vector<16x16x128xf32>
    %8 = arith.maximumf %6, %7 : vector<16x16x128xf32>
    %9 = vector.extract_strided_slice %0 {offsets = [1, 1, 0], sizes = [16, 16, 128], strides = [1, 1, 1]} : vector<17x17x128xf32> to vector<16x16x128xf32>
    %10 = arith.maximumf %8, %9 : vector<16x16x128xf32>
    %11 = vector.extract_strided_slice %1 {offsets = [0, 0, 0], sizes = [16, 16, 128], strides = [1, 1, 1]} : vector<17x17x128xf32> to vector<16x16x128xf32>
    %12 = arith.maximumf %10, %11 : vector<16x16x128xf32>
    %13 = vector.extract_strided_slice %1 {offsets = [1, 0, 0], sizes = [16, 16, 128], strides = [1, 1, 1]} : vector<17x17x128xf32> to vector<16x16x128xf32>
    %14 = arith.maximumf %12, %13 : vector<16x16x128xf32>
    %15 = vector.extract_strided_slice %2 {offsets = [0, 0, 0], sizes = [16, 16, 128], strides = [1, 1, 1]} : vector<17x17x128xf32> to vector<16x16x128xf32>
    %16 = arith.maximumf %14, %15 : vector<16x16x128xf32>
    %17 = vector.extract_strided_slice %2 {offsets = [0, 1, 0], sizes = [16, 16, 128], strides = [1, 1, 1]} : vector<17x17x128xf32> to vector<16x16x128xf32>
    %18 = arith.maximumf %16, %17 : vector<16x16x128xf32>
    %19 = vector.extract_strided_slice %3 {offsets = [0, 0, 0], sizes = [16, 16, 128], strides = [1, 1, 1]} : vector<17x17x128xf32> to vector<16x16x128xf32>
    %20 = arith.maximumf %18, %19 : vector<16x16x128xf32>
    %c0_11 = arith.constant 0 : index
    %c0_12 = arith.constant 0 : index
    %c0_13 = arith.constant 0 : index
    %21 = vector.load %arg5[%c0_11, %c0_12, %c0_13] : memref<16x16x128xf32, #tpu.memory_space<vmem>>, vector<16x16x128xf32>
    tpu.vector_store %arg5[%c0_11, %c0_12, %c0_13], %20 {strides = array<i32>} : memref<16x16x128xf32, #tpu.memory_space<vmem>>, vector<16x16x128xf32>,
    return
  }
  func.func @transform_0(%arg0: i32) -> (i32, i32, i32) {
    %c0_i32 = arith.constant 0 : i32
    %c0_i32_0 = arith.constant 0 : i32
    %c0_i32_1 = arith.constant 0 : i32
    %c0_i32_2 = arith.constant 0 : i32
    return %c0_i32, %c0_i32_0, %c0_i32_1 : i32, i32, i32
  }
  func.func @transform_1(%arg0: i32) -> (i32, i32, i32) {
    %c0_i32 = arith.constant 0 : i32
    %c0_i32_0 = arith.constant 0 : i32
    %c0_i32_1 = arith.constant 0 : i32
    %c0_i32_2 = arith.constant 0 : i32
    return %c0_i32, %c0_i32_0, %c0_i32_1 : i32, i32, i32
  }
  func.func @transform_2(%arg0: i32) -> (i32, i32, i32) {
    %c0_i32 = arith.constant 0 : i32
    %c0_i32_0 = arith.constant 0 : i32
    %c0_i32_1 = arith.constant 0 : i32
    %c0_i32_2 = arith.constant 0 : i32
    return %c0_i32, %c0_i32_0, %c0_i32_1 : i32, i32, i32
  }
  func.func @transform_3(%arg0: i32) -> (i32, i32, i32) {
    %c0_i32 = arith.constant 0 : i32
    %c0_i32_0 = arith.constant 0 : i32
    %c0_i32_1 = arith.constant 0 : i32
    %c0_i32_2 = arith.constant 0 : i32
    return %c0_i32, %c0_i32_0, %c0_i32_1 : i32, i32, i32
  }
  func.func @transform_4(%arg0: i32) -> (i32, i32, i32) {
    %c0_i32 = arith.constant 0 : i32
    %c0_i32_0 = arith.constant 0 : i32
    %c0_i32_1 = arith.constant 0 : i32
    %c0_i32_2 = arith.constant 0 : i32
    return %c0_i32, %c0_i32_0, %c0_i32_1 : i32, i32, i32
  }
}

module attributes {stable_mosaic.version = 11 : i64} {
  func.func @_mm_kernel(%arg0: i32, %arg1: i32, %arg2: memref<256x80xbf16, #tpu.memory_space<vmem>>, %arg3: memref<80x128xbf16, #tpu.memory_space<vmem>>, %arg4: memref<1x128xf32, #tpu.memory_space<vmem>>, %arg5: memref<256x128xf32, #tpu.memory_space<vmem>>) attributes {dimension_semantics = [#tpu.dimension_semantics<parallel>, #tpu.dimension_semantics<parallel>], iteration_bounds = array<i64: 1, 1>, scalar_prefetch = 0 : i64, scratch_operands = 0 : i64, tpu.core_type = #tpu.core_type<tc>, window_params = [{transform_indices = @transform_0, window_bounds = array<i64: 256, 80>}, {transform_indices = @transform_1, window_bounds = array<i64: 80, 128>}, {transform_indices = @transform_2, window_bounds = array<i64: 1, 128>}, {transform_indices = @transform_3, window_bounds = array<i64: 256, 128>}]} {
    %c0 = arith.constant 0 : index
    %c0_0 = arith.constant 0 : index
    %0 = vector.load %arg2[%c0, %c0_0] : memref<256x80xbf16, #tpu.memory_space<vmem>>, vector<256x80xbf16>
    %c0_1 = arith.constant 0 : index
    %c0_2 = arith.constant 0 : index
    %1 = vector.load %arg3[%c0_1, %c0_2] : memref<80x128xbf16, #tpu.memory_space<vmem>>, vector<80x128xbf16>
    %cst = arith.constant dense<0.000000e+00> : vector<256x128xf32>
    %2 = tpu.matmul %0, %1, %cst {dimension_numbers = #tpu.dot_dimension_numbers<[1], [0], [0], [1], [0, 0, 1, 1], [], []>} : vector<256x80xbf16>, vector<80x128xbf16>, vector<256x128xf32> -> vector<256x128xf32>
    %c0_3 = arith.constant 0 : index
    %c0_4 = arith.constant 0 : index
    %3 = vector.load %arg4[%c0_3, %c0_4] : memref<1x128xf32, #tpu.memory_space<vmem>>, vector<1x128xf32>
    %4 = vector.broadcast %3 : vector<1x128xf32> to vector<256x128xf32>
    %5 = arith.addf %2, %4 : vector<256x128xf32>
    %cst_5 = arith.constant 0.000000e+00 : f32
    %6 = vector.broadcast %cst_5 : f32 to vector<256x128xf32>
    %7 = arith.maximumf %5, %6 : vector<256x128xf32>
    %c0_6 = arith.constant 0 : index
    %c0_7 = arith.constant 0 : index
    %8 = vector.load %arg5[%c0_6, %c0_7] : memref<256x128xf32, #tpu.memory_space<vmem>>, vector<256x128xf32>
    tpu.vector_store %arg5[%c0_6, %c0_7], %7 {strides = array<i32>} : memref<256x128xf32, #tpu.memory_space<vmem>>, vector<256x128xf32>,
    return
  }
  func.func @transform_0(%arg0: i32, %arg1: i32) -> (i32, i32) {
    %c0_i32 = arith.constant 0 : i32
    %c0_i32_0 = arith.constant 0 : i32
    return %arg0, %c0_i32 : i32, i32
  }
  func.func @transform_1(%arg0: i32, %arg1: i32) -> (i32, i32) {
    %c0_i32 = arith.constant 0 : i32
    %c0_i32_0 = arith.constant 0 : i32
    return %c0_i32, %arg1 : i32, i32
  }
  func.func @transform_2(%arg0: i32, %arg1: i32) -> (i32, i32) {
    %c0_i32 = arith.constant 0 : i32
    %c0_i32_0 = arith.constant 0 : i32
    return %c0_i32, %arg1 : i32, i32
  }
  func.func @transform_3(%arg0: i32, %arg1: i32) -> (i32, i32) {
    %c0_i32 = arith.constant 0 : i32
    return %arg0, %arg1 : i32, i32
  }
}

module attributes {stable_mosaic.version = 11 : i64} {
  func.func @_mm_res_kernel(%arg0: i32, %arg1: i32, %arg2: memref<256x80xbf16, #tpu.memory_space<vmem>>, %arg3: memref<80x128xbf16, #tpu.memory_space<vmem>>, %arg4: memref<1x128xf32, #tpu.memory_space<vmem>>, %arg5: memref<256x128xf32, #tpu.memory_space<vmem>>, %arg6: memref<256x128xf32, #tpu.memory_space<vmem>>) attributes {dimension_semantics = [#tpu.dimension_semantics<parallel>, #tpu.dimension_semantics<parallel>], iteration_bounds = array<i64: 1, 1>, scalar_prefetch = 0 : i64, scratch_operands = 0 : i64, tpu.core_type = #tpu.core_type<tc>, window_params = [{transform_indices = @transform_0, window_bounds = array<i64: 256, 80>}, {transform_indices = @transform_1, window_bounds = array<i64: 80, 128>}, {transform_indices = @transform_2, window_bounds = array<i64: 1, 128>}, {transform_indices = @transform_3, window_bounds = array<i64: 256, 128>}, {transform_indices = @transform_4, window_bounds = array<i64: 256, 128>}]} {
    %c0 = arith.constant 0 : index
    %c0_0 = arith.constant 0 : index
    %0 = vector.load %arg2[%c0, %c0_0] : memref<256x80xbf16, #tpu.memory_space<vmem>>, vector<256x80xbf16>
    %c0_1 = arith.constant 0 : index
    %c0_2 = arith.constant 0 : index
    %1 = vector.load %arg3[%c0_1, %c0_2] : memref<80x128xbf16, #tpu.memory_space<vmem>>, vector<80x128xbf16>
    %cst = arith.constant dense<0.000000e+00> : vector<256x128xf32>
    %2 = tpu.matmul %0, %1, %cst {dimension_numbers = #tpu.dot_dimension_numbers<[1], [0], [0], [1], [0, 0, 1, 1], [], []>} : vector<256x80xbf16>, vector<80x128xbf16>, vector<256x128xf32> -> vector<256x128xf32>
    %c0_3 = arith.constant 0 : index
    %c0_4 = arith.constant 0 : index
    %3 = vector.load %arg4[%c0_3, %c0_4] : memref<1x128xf32, #tpu.memory_space<vmem>>, vector<1x128xf32>
    %4 = vector.broadcast %3 : vector<1x128xf32> to vector<256x128xf32>
    %5 = arith.addf %2, %4 : vector<256x128xf32>
    %c0_5 = arith.constant 0 : index
    %c0_6 = arith.constant 0 : index
    %6 = vector.load %arg5[%c0_5, %c0_6] : memref<256x128xf32, #tpu.memory_space<vmem>>, vector<256x128xf32>
    %7 = arith.addf %5, %6 : vector<256x128xf32>
    %cst_7 = arith.constant 0.000000e+00 : f32
    %8 = vector.broadcast %cst_7 : f32 to vector<256x128xf32>
    %9 = arith.maximumf %7, %8 : vector<256x128xf32>
    %c0_8 = arith.constant 0 : index
    %c0_9 = arith.constant 0 : index
    %10 = vector.load %arg6[%c0_8, %c0_9] : memref<256x128xf32, #tpu.memory_space<vmem>>, vector<256x128xf32>
    tpu.vector_store %arg6[%c0_8, %c0_9], %9 {strides = array<i32>} : memref<256x128xf32, #tpu.memory_space<vmem>>, vector<256x128xf32>,
    return
  }
  func.func @transform_0(%arg0: i32, %arg1: i32) -> (i32, i32) {
    %c0_i32 = arith.constant 0 : i32
    %c0_i32_0 = arith.constant 0 : i32
    return %arg0, %c0_i32 : i32, i32
  }
  func.func @transform_1(%arg0: i32, %arg1: i32) -> (i32, i32) {
    %c0_i32 = arith.constant 0 : i32
    %c0_i32_0 = arith.constant 0 : i32
    return %c0_i32, %arg1 : i32, i32
  }
  func.func @transform_2(%arg0: i32, %arg1: i32) -> (i32, i32) {
    %c0_i32 = arith.constant 0 : i32
    %c0_i32_0 = arith.constant 0 : i32
    return %c0_i32, %arg1 : i32, i32
  }
  func.func @transform_3(%arg0: i32, %arg1: i32) -> (i32, i32) {
    %c0_i32 = arith.constant 0 : i32
    return %arg0, %arg1 : i32, i32
  }
  func.func @transform_4(%arg0: i32, %arg1: i32) -> (i32, i32) {
    %c0_i32 = arith.constant 0 : i32
    return %arg0, %arg1 : i32, i32
  }
}

module attributes {stable_mosaic.version = 11 : i64} {
  func.func @_mm_kernel(%arg0: i32, %arg1: i32, %arg2: memref<64x80xbf16, #tpu.memory_space<vmem>>, %arg3: memref<80x128xbf16, #tpu.memory_space<vmem>>, %arg4: memref<1x128xf32, #tpu.memory_space<vmem>>, %arg5: memref<64x128xf32, #tpu.memory_space<vmem>>) attributes {dimension_semantics = [#tpu.dimension_semantics<parallel>, #tpu.dimension_semantics<parallel>], iteration_bounds = array<i64: 1, 1>, scalar_prefetch = 0 : i64, scratch_operands = 0 : i64, tpu.core_type = #tpu.core_type<tc>, window_params = [{transform_indices = @transform_0, window_bounds = array<i64: 64, 80>}, {transform_indices = @transform_1, window_bounds = array<i64: 80, 128>}, {transform_indices = @transform_2, window_bounds = array<i64: 1, 128>}, {transform_indices = @transform_3, window_bounds = array<i64: 64, 128>}]} {
    %c0 = arith.constant 0 : index
    %c0_0 = arith.constant 0 : index
    %0 = vector.load %arg2[%c0, %c0_0] : memref<64x80xbf16, #tpu.memory_space<vmem>>, vector<64x80xbf16>
    %c0_1 = arith.constant 0 : index
    %c0_2 = arith.constant 0 : index
    %1 = vector.load %arg3[%c0_1, %c0_2] : memref<80x128xbf16, #tpu.memory_space<vmem>>, vector<80x128xbf16>
    %cst = arith.constant dense<0.000000e+00> : vector<64x128xf32>
    %2 = tpu.matmul %0, %1, %cst {dimension_numbers = #tpu.dot_dimension_numbers<[1], [0], [0], [1], [0, 0, 1, 1], [], []>} : vector<64x80xbf16>, vector<80x128xbf16>, vector<64x128xf32> -> vector<64x128xf32>
    %c0_3 = arith.constant 0 : index
    %c0_4 = arith.constant 0 : index
    %3 = vector.load %arg4[%c0_3, %c0_4] : memref<1x128xf32, #tpu.memory_space<vmem>>, vector<1x128xf32>
    %4 = vector.broadcast %3 : vector<1x128xf32> to vector<64x128xf32>
    %5 = arith.addf %2, %4 : vector<64x128xf32>
    %cst_5 = arith.constant 0.000000e+00 : f32
    %6 = vector.broadcast %cst_5 : f32 to vector<64x128xf32>
    %7 = arith.maximumf %5, %6 : vector<64x128xf32>
    %c0_6 = arith.constant 0 : index
    %c0_7 = arith.constant 0 : index
    %8 = vector.load %arg5[%c0_6, %c0_7] : memref<64x128xf32, #tpu.memory_space<vmem>>, vector<64x128xf32>
    tpu.vector_store %arg5[%c0_6, %c0_7], %7 {strides = array<i32>} : memref<64x128xf32, #tpu.memory_space<vmem>>, vector<64x128xf32>,
    return
  }
  func.func @transform_0(%arg0: i32, %arg1: i32) -> (i32, i32) {
    %c0_i32 = arith.constant 0 : i32
    %c0_i32_0 = arith.constant 0 : i32
    return %arg0, %c0_i32 : i32, i32
  }
  func.func @transform_1(%arg0: i32, %arg1: i32) -> (i32, i32) {
    %c0_i32 = arith.constant 0 : i32
    %c0_i32_0 = arith.constant 0 : i32
    return %c0_i32, %arg1 : i32, i32
  }
  func.func @transform_2(%arg0: i32, %arg1: i32) -> (i32, i32) {
    %c0_i32 = arith.constant 0 : i32
    %c0_i32_0 = arith.constant 0 : i32
    return %c0_i32, %arg1 : i32, i32
  }
  func.func @transform_3(%arg0: i32, %arg1: i32) -> (i32, i32) {
    %c0_i32 = arith.constant 0 : i32
    return %arg0, %arg1 : i32, i32
  }
}

module attributes {stable_mosaic.version = 11 : i64} {
  func.func @_mm_res_kernel(%arg0: i32, %arg1: i32, %arg2: memref<64x144xbf16, #tpu.memory_space<vmem>>, %arg3: memref<144x128xbf16, #tpu.memory_space<vmem>>, %arg4: memref<1x128xf32, #tpu.memory_space<vmem>>, %arg5: memref<64x128xf32, #tpu.memory_space<vmem>>, %arg6: memref<64x128xf32, #tpu.memory_space<vmem>>) attributes {dimension_semantics = [#tpu.dimension_semantics<parallel>, #tpu.dimension_semantics<parallel>], iteration_bounds = array<i64: 1, 1>, scalar_prefetch = 0 : i64, scratch_operands = 0 : i64, tpu.core_type = #tpu.core_type<tc>, window_params = [{transform_indices = @transform_0, window_bounds = array<i64: 64, 144>}, {transform_indices = @transform_1, window_bounds = array<i64: 144, 128>}, {transform_indices = @transform_2, window_bounds = array<i64: 1, 128>}, {transform_indices = @transform_3, window_bounds = array<i64: 64, 128>}, {transform_indices = @transform_4, window_bounds = array<i64: 64, 128>}]} {
    %c0 = arith.constant 0 : index
    %c0_0 = arith.constant 0 : index
    %0 = vector.load %arg2[%c0, %c0_0] : memref<64x144xbf16, #tpu.memory_space<vmem>>, vector<64x144xbf16>
    %c0_1 = arith.constant 0 : index
    %c0_2 = arith.constant 0 : index
    %1 = vector.load %arg3[%c0_1, %c0_2] : memref<144x128xbf16, #tpu.memory_space<vmem>>, vector<144x128xbf16>
    %cst = arith.constant dense<0.000000e+00> : vector<64x128xf32>
    %2 = tpu.matmul %0, %1, %cst {dimension_numbers = #tpu.dot_dimension_numbers<[1], [0], [0], [1], [0, 0, 1, 1], [], []>} : vector<64x144xbf16>, vector<144x128xbf16>, vector<64x128xf32> -> vector<64x128xf32>
    %c0_3 = arith.constant 0 : index
    %c0_4 = arith.constant 0 : index
    %3 = vector.load %arg4[%c0_3, %c0_4] : memref<1x128xf32, #tpu.memory_space<vmem>>, vector<1x128xf32>
    %4 = vector.broadcast %3 : vector<1x128xf32> to vector<64x128xf32>
    %5 = arith.addf %2, %4 : vector<64x128xf32>
    %c0_5 = arith.constant 0 : index
    %c0_6 = arith.constant 0 : index
    %6 = vector.load %arg5[%c0_5, %c0_6] : memref<64x128xf32, #tpu.memory_space<vmem>>, vector<64x128xf32>
    %7 = arith.addf %5, %6 : vector<64x128xf32>
    %cst_7 = arith.constant 0.000000e+00 : f32
    %8 = vector.broadcast %cst_7 : f32 to vector<64x128xf32>
    %9 = arith.maximumf %7, %8 : vector<64x128xf32>
    %c0_8 = arith.constant 0 : index
    %c0_9 = arith.constant 0 : index
    %10 = vector.load %arg6[%c0_8, %c0_9] : memref<64x128xf32, #tpu.memory_space<vmem>>, vector<64x128xf32>
    tpu.vector_store %arg6[%c0_8, %c0_9], %9 {strides = array<i32>} : memref<64x128xf32, #tpu.memory_space<vmem>>, vector<64x128xf32>,
    return
  }
  func.func @transform_0(%arg0: i32, %arg1: i32) -> (i32, i32) {
    %c0_i32 = arith.constant 0 : i32
    %c0_i32_0 = arith.constant 0 : i32
    return %arg0, %c0_i32 : i32, i32
  }
  func.func @transform_1(%arg0: i32, %arg1: i32) -> (i32, i32) {
    %c0_i32 = arith.constant 0 : i32
    %c0_i32_0 = arith.constant 0 : i32
    return %c0_i32, %arg1 : i32, i32
  }
  func.func @transform_2(%arg0: i32, %arg1: i32) -> (i32, i32) {
    %c0_i32 = arith.constant 0 : i32
    %c0_i32_0 = arith.constant 0 : i32
    return %c0_i32, %arg1 : i32, i32
  }
  func.func @transform_3(%arg0: i32, %arg1: i32) -> (i32, i32) {
    %c0_i32 = arith.constant 0 : i32
    return %arg0, %arg1 : i32, i32
  }
  func.func @transform_4(%arg0: i32, %arg1: i32) -> (i32, i32) {
    %c0_i32 = arith.constant 0 : i32
    return %arg0, %arg1 : i32, i32
  }
}

module attributes {stable_mosaic.version = 11 : i64} {
  func.func @_mm_kernel(%arg0: i32, %arg1: i32, %arg2: memref<64x16xbf16, #tpu.memory_space<vmem>>, %arg3: memref<16x128xbf16, #tpu.memory_space<vmem>>, %arg4: memref<1x128xf32, #tpu.memory_space<vmem>>, %arg5: memref<64x128xf32, #tpu.memory_space<vmem>>) attributes {dimension_semantics = [#tpu.dimension_semantics<parallel>, #tpu.dimension_semantics<parallel>], iteration_bounds = array<i64: 1, 1>, scalar_prefetch = 0 : i64, scratch_operands = 0 : i64, tpu.core_type = #tpu.core_type<tc>, window_params = [{transform_indices = @transform_0, window_bounds = array<i64: 64, 16>}, {transform_indices = @transform_1, window_bounds = array<i64: 16, 128>}, {transform_indices = @transform_2, window_bounds = array<i64: 1, 128>}, {transform_indices = @transform_3, window_bounds = array<i64: 64, 128>}]} {
    %c0 = arith.constant 0 : index
    %c0_0 = arith.constant 0 : index
    %0 = vector.load %arg2[%c0, %c0_0] : memref<64x16xbf16, #tpu.memory_space<vmem>>, vector<64x16xbf16>
    %c0_1 = arith.constant 0 : index
    %c0_2 = arith.constant 0 : index
    %1 = vector.load %arg3[%c0_1, %c0_2] : memref<16x128xbf16, #tpu.memory_space<vmem>>, vector<16x128xbf16>
    %cst = arith.constant dense<0.000000e+00> : vector<64x128xf32>
    %2 = tpu.matmul %0, %1, %cst {dimension_numbers = #tpu.dot_dimension_numbers<[1], [0], [0], [1], [0, 0, 1, 1], [], []>} : vector<64x16xbf16>, vector<16x128xbf16>, vector<64x128xf32> -> vector<64x128xf32>
    %c0_3 = arith.constant 0 : index
    %c0_4 = arith.constant 0 : index
    %3 = vector.load %arg4[%c0_3, %c0_4] : memref<1x128xf32, #tpu.memory_space<vmem>>, vector<1x128xf32>
    %4 = vector.broadcast %3 : vector<1x128xf32> to vector<64x128xf32>
    %5 = arith.addf %2, %4 : vector<64x128xf32>
    %c0_5 = arith.constant 0 : index
    %c0_6 = arith.constant 0 : index
    %6 = vector.load %arg5[%c0_5, %c0_6] : memref<64x128xf32, #tpu.memory_space<vmem>>, vector<64x128xf32>
    tpu.vector_store %arg5[%c0_5, %c0_6], %5 {strides = array<i32>} : memref<64x128xf32, #tpu.memory_space<vmem>>, vector<64x128xf32>,
    return
  }
  func.func @transform_0(%arg0: i32, %arg1: i32) -> (i32, i32) {
    %c0_i32 = arith.constant 0 : i32
    %c0_i32_0 = arith.constant 0 : i32
    return %arg0, %c0_i32 : i32, i32
  }
  func.func @transform_1(%arg0: i32, %arg1: i32) -> (i32, i32) {
    %c0_i32 = arith.constant 0 : i32
    %c0_i32_0 = arith.constant 0 : i32
    return %c0_i32, %arg1 : i32, i32
  }
  func.func @transform_2(%arg0: i32, %arg1: i32) -> (i32, i32) {
    %c0_i32 = arith.constant 0 : i32
    %c0_i32_0 = arith.constant 0 : i32
    return %c0_i32, %arg1 : i32, i32
  }
  func.func @transform_3(%arg0: i32, %arg1: i32) -> (i32, i32) {
    %c0_i32 = arith.constant 0 : i32
    return %arg0, %arg1 : i32, i32
  }
}

module attributes {stable_mosaic.version = 11 : i64} {
  func.func @_mm_kernel(%arg0: i32, %arg1: i32, %arg2: memref<16x144xbf16, #tpu.memory_space<vmem>>, %arg3: memref<144x128xbf16, #tpu.memory_space<vmem>>, %arg4: memref<1x128xf32, #tpu.memory_space<vmem>>, %arg5: memref<16x128xf32, #tpu.memory_space<vmem>>) attributes {dimension_semantics = [#tpu.dimension_semantics<parallel>, #tpu.dimension_semantics<parallel>], iteration_bounds = array<i64: 1, 1>, scalar_prefetch = 0 : i64, scratch_operands = 0 : i64, tpu.core_type = #tpu.core_type<tc>, window_params = [{transform_indices = @transform_0, window_bounds = array<i64: 16, 144>}, {transform_indices = @transform_1, window_bounds = array<i64: 144, 128>}, {transform_indices = @transform_2, window_bounds = array<i64: 1, 128>}, {transform_indices = @transform_3, window_bounds = array<i64: 16, 128>}]} {
    %c0 = arith.constant 0 : index
    %c0_0 = arith.constant 0 : index
    %0 = vector.load %arg2[%c0, %c0_0] : memref<16x144xbf16, #tpu.memory_space<vmem>>, vector<16x144xbf16>
    %c0_1 = arith.constant 0 : index
    %c0_2 = arith.constant 0 : index
    %1 = vector.load %arg3[%c0_1, %c0_2] : memref<144x128xbf16, #tpu.memory_space<vmem>>, vector<144x128xbf16>
    %cst = arith.constant dense<0.000000e+00> : vector<16x128xf32>
    %2 = tpu.matmul %0, %1, %cst {dimension_numbers = #tpu.dot_dimension_numbers<[1], [0], [0], [1], [0, 0, 1, 1], [], []>} : vector<16x144xbf16>, vector<144x128xbf16>, vector<16x128xf32> -> vector<16x128xf32>
    %c0_3 = arith.constant 0 : index
    %c0_4 = arith.constant 0 : index
    %3 = vector.load %arg4[%c0_3, %c0_4] : memref<1x128xf32, #tpu.memory_space<vmem>>, vector<1x128xf32>
    %4 = vector.broadcast %3 : vector<1x128xf32> to vector<16x128xf32>
    %5 = arith.addf %2, %4 : vector<16x128xf32>
    %cst_5 = arith.constant 0.000000e+00 : f32
    %6 = vector.broadcast %cst_5 : f32 to vector<16x128xf32>
    %7 = arith.maximumf %5, %6 : vector<16x128xf32>
    %c0_6 = arith.constant 0 : index
    %c0_7 = arith.constant 0 : index
    %8 = vector.load %arg5[%c0_6, %c0_7] : memref<16x128xf32, #tpu.memory_space<vmem>>, vector<16x128xf32>
    tpu.vector_store %arg5[%c0_6, %c0_7], %7 {strides = array<i32>} : memref<16x128xf32, #tpu.memory_space<vmem>>, vector<16x128xf32>,
    return
  }
  func.func @transform_0(%arg0: i32, %arg1: i32) -> (i32, i32) {
    %c0_i32 = arith.constant 0 : i32
    %c0_i32_0 = arith.constant 0 : i32
    return %arg0, %c0_i32 : i32, i32
  }
  func.func @transform_1(%arg0: i32, %arg1: i32) -> (i32, i32) {
    %c0_i32 = arith.constant 0 : i32
    %c0_i32_0 = arith.constant 0 : i32
    return %c0_i32, %arg1 : i32, i32
  }
  func.func @transform_2(%arg0: i32, %arg1: i32) -> (i32, i32) {
    %c0_i32 = arith.constant 0 : i32
    %c0_i32_0 = arith.constant 0 : i32
    return %c0_i32, %arg1 : i32, i32
  }
  func.func @transform_3(%arg0: i32, %arg1: i32) -> (i32, i32) {
    %c0_i32 = arith.constant 0 : i32
    return %arg0, %arg1 : i32, i32
  }
}

module attributes {stable_mosaic.version = 11 : i64} {
  func.func @_mm_kernel(%arg0: i32, %arg1: i32, %arg2: memref<16x16xbf16, #tpu.memory_space<vmem>>, %arg3: memref<16x128xbf16, #tpu.memory_space<vmem>>, %arg4: memref<1x128xf32, #tpu.memory_space<vmem>>, %arg5: memref<16x128xf32, #tpu.memory_space<vmem>>) attributes {dimension_semantics = [#tpu.dimension_semantics<parallel>, #tpu.dimension_semantics<parallel>], iteration_bounds = array<i64: 1, 1>, scalar_prefetch = 0 : i64, scratch_operands = 0 : i64, tpu.core_type = #tpu.core_type<tc>, window_params = [{transform_indices = @transform_0, window_bounds = array<i64: 16, 16>}, {transform_indices = @transform_1, window_bounds = array<i64: 16, 128>}, {transform_indices = @transform_2, window_bounds = array<i64: 1, 128>}, {transform_indices = @transform_3, window_bounds = array<i64: 16, 128>}]} {
    %c0 = arith.constant 0 : index
    %c0_0 = arith.constant 0 : index
    %0 = vector.load %arg2[%c0, %c0_0] : memref<16x16xbf16, #tpu.memory_space<vmem>>, vector<16x16xbf16>
    %c0_1 = arith.constant 0 : index
    %c0_2 = arith.constant 0 : index
    %1 = vector.load %arg3[%c0_1, %c0_2] : memref<16x128xbf16, #tpu.memory_space<vmem>>, vector<16x128xbf16>
    %cst = arith.constant dense<0.000000e+00> : vector<16x128xf32>
    %2 = tpu.matmul %0, %1, %cst {dimension_numbers = #tpu.dot_dimension_numbers<[1], [0], [0], [1], [0, 0, 1, 1], [], []>} : vector<16x16xbf16>, vector<16x128xbf16>, vector<16x128xf32> -> vector<16x128xf32>
    %c0_3 = arith.constant 0 : index
    %c0_4 = arith.constant 0 : index
    %3 = vector.load %arg4[%c0_3, %c0_4] : memref<1x128xf32, #tpu.memory_space<vmem>>, vector<1x128xf32>
    %4 = vector.broadcast %3 : vector<1x128xf32> to vector<16x128xf32>
    %5 = arith.addf %2, %4 : vector<16x128xf32>
    %c0_5 = arith.constant 0 : index
    %c0_6 = arith.constant 0 : index
    %6 = vector.load %arg5[%c0_5, %c0_6] : memref<16x128xf32, #tpu.memory_space<vmem>>, vector<16x128xf32>
    tpu.vector_store %arg5[%c0_5, %c0_6], %5 {strides = array<i32>} : memref<16x128xf32, #tpu.memory_space<vmem>>, vector<16x128xf32>,
    return
  }
  func.func @transform_0(%arg0: i32, %arg1: i32) -> (i32, i32) {
    %c0_i32 = arith.constant 0 : i32
    %c0_i32_0 = arith.constant 0 : i32
    return %arg0, %c0_i32 : i32, i32
  }
  func.func @transform_1(%arg0: i32, %arg1: i32) -> (i32, i32) {
    %c0_i32 = arith.constant 0 : i32
    %c0_i32_0 = arith.constant 0 : i32
    return %c0_i32, %arg1 : i32, i32
  }
  func.func @transform_2(%arg0: i32, %arg1: i32) -> (i32, i32) {
    %c0_i32 = arith.constant 0 : i32
    %c0_i32_0 = arith.constant 0 : i32
    return %c0_i32, %arg1 : i32, i32
  }
  func.func @transform_3(%arg0: i32, %arg1: i32) -> (i32, i32) {
    %c0_i32 = arith.constant 0 : i32
    return %arg0, %arg1 : i32, i32
  }
}

module attributes {stable_mosaic.version = 11 : i64} {
  func.func @_mm_res_kernel(%arg0: i32, %arg1: i32, %arg2: memref<16x288xbf16, #tpu.memory_space<vmem>>, %arg3: memref<288x128xbf16, #tpu.memory_space<vmem>>, %arg4: memref<1x128xf32, #tpu.memory_space<vmem>>, %arg5: memref<16x128xf32, #tpu.memory_space<vmem>>, %arg6: memref<16x128xf32, #tpu.memory_space<vmem>>) attributes {dimension_semantics = [#tpu.dimension_semantics<parallel>, #tpu.dimension_semantics<parallel>], iteration_bounds = array<i64: 1, 1>, scalar_prefetch = 0 : i64, scratch_operands = 0 : i64, tpu.core_type = #tpu.core_type<tc>, window_params = [{transform_indices = @transform_0, window_bounds = array<i64: 16, 288>}, {transform_indices = @transform_1, window_bounds = array<i64: 288, 128>}, {transform_indices = @transform_2, window_bounds = array<i64: 1, 128>}, {transform_indices = @transform_3, window_bounds = array<i64: 16, 128>}, {transform_indices = @transform_4, window_bounds = array<i64: 16, 128>}]} {
    %c0 = arith.constant 0 : index
    %c0_0 = arith.constant 0 : index
    %0 = vector.load %arg2[%c0, %c0_0] : memref<16x288xbf16, #tpu.memory_space<vmem>>, vector<16x288xbf16>
    %c0_1 = arith.constant 0 : index
    %c0_2 = arith.constant 0 : index
    %1 = vector.load %arg3[%c0_1, %c0_2] : memref<288x128xbf16, #tpu.memory_space<vmem>>, vector<288x128xbf16>
    %cst = arith.constant dense<0.000000e+00> : vector<16x128xf32>
    %2 = tpu.matmul %0, %1, %cst {dimension_numbers = #tpu.dot_dimension_numbers<[1], [0], [0], [1], [0, 0, 1, 1], [], []>} : vector<16x288xbf16>, vector<288x128xbf16>, vector<16x128xf32> -> vector<16x128xf32>
    %c0_3 = arith.constant 0 : index
    %c0_4 = arith.constant 0 : index
    %3 = vector.load %arg4[%c0_3, %c0_4] : memref<1x128xf32, #tpu.memory_space<vmem>>, vector<1x128xf32>
    %4 = vector.broadcast %3 : vector<1x128xf32> to vector<16x128xf32>
    %5 = arith.addf %2, %4 : vector<16x128xf32>
    %c0_5 = arith.constant 0 : index
    %c0_6 = arith.constant 0 : index
    %6 = vector.load %arg5[%c0_5, %c0_6] : memref<16x128xf32, #tpu.memory_space<vmem>>, vector<16x128xf32>
    %7 = arith.addf %5, %6 : vector<16x128xf32>
    %cst_7 = arith.constant 0.000000e+00 : f32
    %8 = vector.broadcast %cst_7 : f32 to vector<16x128xf32>
    %9 = arith.maximumf %7, %8 : vector<16x128xf32>
    %c0_8 = arith.constant 0 : index
    %c0_9 = arith.constant 0 : index
    %10 = vector.load %arg6[%c0_8, %c0_9] : memref<16x128xf32, #tpu.memory_space<vmem>>, vector<16x128xf32>
    tpu.vector_store %arg6[%c0_8, %c0_9], %9 {strides = array<i32>} : memref<16x128xf32, #tpu.memory_space<vmem>>, vector<16x128xf32>,
    return
  }
  func.func @transform_0(%arg0: i32, %arg1: i32) -> (i32, i32) {
    %c0_i32 = arith.constant 0 : i32
    %c0_i32_0 = arith.constant 0 : i32
    return %arg0, %c0_i32 : i32, i32
  }
  func.func @transform_1(%arg0: i32, %arg1: i32) -> (i32, i32) {
    %c0_i32 = arith.constant 0 : i32
    %c0_i32_0 = arith.constant 0 : i32
    return %c0_i32, %arg1 : i32, i32
  }
  func.func @transform_2(%arg0: i32, %arg1: i32) -> (i32, i32) {
    %c0_i32 = arith.constant 0 : i32
    %c0_i32_0 = arith.constant 0 : i32
    return %c0_i32, %arg1 : i32, i32
  }
  func.func @transform_3(%arg0: i32, %arg1: i32) -> (i32, i32) {
    %c0_i32 = arith.constant 0 : i32
    return %arg0, %arg1 : i32, i32
  }
  func.func @transform_4(%arg0: i32, %arg1: i32) -> (i32, i32) {
    %c0_i32 = arith.constant 0 : i32
    return %arg0, %arg1 : i32, i32
  }
}

module attributes {stable_mosaic.version = 11 : i64} {
  func.func @_mm_kernel(%arg0: i32, %arg1: i32, %arg2: memref<8x32xbf16, #tpu.memory_space<vmem>>, %arg3: memref<32x128xbf16, #tpu.memory_space<vmem>>, %arg4: memref<1x128xf32, #tpu.memory_space<vmem>>, %arg5: memref<8x128xf32, #tpu.memory_space<vmem>>) attributes {dimension_semantics = [#tpu.dimension_semantics<parallel>, #tpu.dimension_semantics<parallel>], iteration_bounds = array<i64: 1, 1>, scalar_prefetch = 0 : i64, scratch_operands = 0 : i64, tpu.core_type = #tpu.core_type<tc>, window_params = [{transform_indices = @transform_0, window_bounds = array<i64: 8, 32>}, {transform_indices = @transform_1, window_bounds = array<i64: 32, 128>}, {transform_indices = @transform_2, window_bounds = array<i64: 1, 128>}, {transform_indices = @transform_3, window_bounds = array<i64: 8, 128>}]} {
    %c0 = arith.constant 0 : index
    %c0_0 = arith.constant 0 : index
    %0 = vector.load %arg2[%c0, %c0_0] : memref<8x32xbf16, #tpu.memory_space<vmem>>, vector<8x32xbf16>
    %c0_1 = arith.constant 0 : index
    %c0_2 = arith.constant 0 : index
    %1 = vector.load %arg3[%c0_1, %c0_2] : memref<32x128xbf16, #tpu.memory_space<vmem>>, vector<32x128xbf16>
    %cst = arith.constant dense<0.000000e+00> : vector<8x128xf32>
    %2 = tpu.matmul %0, %1, %cst {dimension_numbers = #tpu.dot_dimension_numbers<[1], [0], [0], [1], [0, 0, 1, 1], [], []>} : vector<8x32xbf16>, vector<32x128xbf16>, vector<8x128xf32> -> vector<8x128xf32>
    %c0_3 = arith.constant 0 : index
    %c0_4 = arith.constant 0 : index
    %3 = vector.load %arg4[%c0_3, %c0_4] : memref<1x128xf32, #tpu.memory_space<vmem>>, vector<1x128xf32>
    %4 = vector.broadcast %3 : vector<1x128xf32> to vector<8x128xf32>
    %5 = arith.addf %2, %4 : vector<8x128xf32>
    %c0_5 = arith.constant 0 : index
    %c0_6 = arith.constant 0 : index
    %6 = vector.load %arg5[%c0_5, %c0_6] : memref<8x128xf32, #tpu.memory_space<vmem>>, vector<8x128xf32>
    tpu.vector_store %arg5[%c0_5, %c0_6], %5 {strides = array<i32>} : memref<8x128xf32, #tpu.memory_space<vmem>>, vector<8x128xf32>,
    return
  }
  func.func @transform_0(%arg0: i32, %arg1: i32) -> (i32, i32) {
    %c0_i32 = arith.constant 0 : i32
    %c0_i32_0 = arith.constant 0 : i32
    return %arg0, %c0_i32 : i32, i32
  }
  func.func @transform_1(%arg0: i32, %arg1: i32) -> (i32, i32) {
    %c0_i32 = arith.constant 0 : i32
    %c0_i32_0 = arith.constant 0 : i32
    return %c0_i32, %arg1 : i32, i32
  }
  func.func @transform_2(%arg0: i32, %arg1: i32) -> (i32, i32) {
    %c0_i32 = arith.constant 0 : i32
    %c0_i32_0 = arith.constant 0 : i32
    return %c0_i32, %arg1 : i32, i32
  }
  func.func @transform_3(%arg0: i32, %arg1: i32) -> (i32, i32) {
    %c0_i32 = arith.constant 0 : i32
    return %arg0, %arg1 : i32, i32
  }
}

module attributes {stable_mosaic.version = 11 : i64} {
  func.func @_mm_kernel(%arg0: i32, %arg1: i32, %arg2: memref<8x288xbf16, #tpu.memory_space<vmem>>, %arg3: memref<288x128xbf16, #tpu.memory_space<vmem>>, %arg4: memref<1x128xf32, #tpu.memory_space<vmem>>, %arg5: memref<8x128xf32, #tpu.memory_space<vmem>>) attributes {dimension_semantics = [#tpu.dimension_semantics<parallel>, #tpu.dimension_semantics<parallel>], iteration_bounds = array<i64: 1, 1>, scalar_prefetch = 0 : i64, scratch_operands = 0 : i64, tpu.core_type = #tpu.core_type<tc>, window_params = [{transform_indices = @transform_0, window_bounds = array<i64: 8, 288>}, {transform_indices = @transform_1, window_bounds = array<i64: 288, 128>}, {transform_indices = @transform_2, window_bounds = array<i64: 1, 128>}, {transform_indices = @transform_3, window_bounds = array<i64: 8, 128>}]} {
    %c0 = arith.constant 0 : index
    %c0_0 = arith.constant 0 : index
    %0 = vector.load %arg2[%c0, %c0_0] : memref<8x288xbf16, #tpu.memory_space<vmem>>, vector<8x288xbf16>
    %c0_1 = arith.constant 0 : index
    %c0_2 = arith.constant 0 : index
    %1 = vector.load %arg3[%c0_1, %c0_2] : memref<288x128xbf16, #tpu.memory_space<vmem>>, vector<288x128xbf16>
    %cst = arith.constant dense<0.000000e+00> : vector<8x128xf32>
    %2 = tpu.matmul %0, %1, %cst {dimension_numbers = #tpu.dot_dimension_numbers<[1], [0], [0], [1], [0, 0, 1, 1], [], []>} : vector<8x288xbf16>, vector<288x128xbf16>, vector<8x128xf32> -> vector<8x128xf32>
    %c0_3 = arith.constant 0 : index
    %c0_4 = arith.constant 0 : index
    %3 = vector.load %arg4[%c0_3, %c0_4] : memref<1x128xf32, #tpu.memory_space<vmem>>, vector<1x128xf32>
    %4 = vector.broadcast %3 : vector<1x128xf32> to vector<8x128xf32>
    %5 = arith.addf %2, %4 : vector<8x128xf32>
    %cst_5 = arith.constant 0.000000e+00 : f32
    %6 = vector.broadcast %cst_5 : f32 to vector<8x128xf32>
    %7 = arith.maximumf %5, %6 : vector<8x128xf32>
    %c0_6 = arith.constant 0 : index
    %c0_7 = arith.constant 0 : index
    %8 = vector.load %arg5[%c0_6, %c0_7] : memref<8x128xf32, #tpu.memory_space<vmem>>, vector<8x128xf32>
    tpu.vector_store %arg5[%c0_6, %c0_7], %7 {strides = array<i32>} : memref<8x128xf32, #tpu.memory_space<vmem>>, vector<8x128xf32>,
    return
  }
  func.func @transform_0(%arg0: i32, %arg1: i32) -> (i32, i32) {
    %c0_i32 = arith.constant 0 : i32
    %c0_i32_0 = arith.constant 0 : i32
    return %arg0, %c0_i32 : i32, i32
  }
  func.func @transform_1(%arg0: i32, %arg1: i32) -> (i32, i32) {
    %c0_i32 = arith.constant 0 : i32
    %c0_i32_0 = arith.constant 0 : i32
    return %c0_i32, %arg1 : i32, i32
  }
  func.func @transform_2(%arg0: i32, %arg1: i32) -> (i32, i32) {
    %c0_i32 = arith.constant 0 : i32
    %c0_i32_0 = arith.constant 0 : i32
    return %c0_i32, %arg1 : i32, i32
  }
  func.func @transform_3(%arg0: i32, %arg1: i32) -> (i32, i32) {
    %c0_i32 = arith.constant 0 : i32
    return %arg0, %arg1 : i32, i32
  }
}

module attributes {stable_mosaic.version = 11 : i64} {
  func.func @_mm_res_kernel(%arg0: i32, %arg1: i32, %arg2: memref<8x576xbf16, #tpu.memory_space<vmem>>, %arg3: memref<576x128xbf16, #tpu.memory_space<vmem>>, %arg4: memref<1x128xf32, #tpu.memory_space<vmem>>, %arg5: memref<8x128xf32, #tpu.memory_space<vmem>>, %arg6: memref<8x128xf32, #tpu.memory_space<vmem>>) attributes {dimension_semantics = [#tpu.dimension_semantics<parallel>, #tpu.dimension_semantics<parallel>], iteration_bounds = array<i64: 1, 1>, scalar_prefetch = 0 : i64, scratch_operands = 0 : i64, tpu.core_type = #tpu.core_type<tc>, window_params = [{transform_indices = @transform_0, window_bounds = array<i64: 8, 576>}, {transform_indices = @transform_1, window_bounds = array<i64: 576, 128>}, {transform_indices = @transform_2, window_bounds = array<i64: 1, 128>}, {transform_indices = @transform_3, window_bounds = array<i64: 8, 128>}, {transform_indices = @transform_4, window_bounds = array<i64: 8, 128>}]} {
    %c0 = arith.constant 0 : index
    %c0_0 = arith.constant 0 : index
    %0 = vector.load %arg2[%c0, %c0_0] : memref<8x576xbf16, #tpu.memory_space<vmem>>, vector<8x576xbf16>
    %c0_1 = arith.constant 0 : index
    %c0_2 = arith.constant 0 : index
    %1 = vector.load %arg3[%c0_1, %c0_2] : memref<576x128xbf16, #tpu.memory_space<vmem>>, vector<576x128xbf16>
    %cst = arith.constant dense<0.000000e+00> : vector<8x128xf32>
    %2 = tpu.matmul %0, %1, %cst {dimension_numbers = #tpu.dot_dimension_numbers<[1], [0], [0], [1], [0, 0, 1, 1], [], []>} : vector<8x576xbf16>, vector<576x128xbf16>, vector<8x128xf32> -> vector<8x128xf32>
    %c0_3 = arith.constant 0 : index
    %c0_4 = arith.constant 0 : index
    %3 = vector.load %arg4[%c0_3, %c0_4] : memref<1x128xf32, #tpu.memory_space<vmem>>, vector<1x128xf32>
    %4 = vector.broadcast %3 : vector<1x128xf32> to vector<8x128xf32>
    %5 = arith.addf %2, %4 : vector<8x128xf32>
    %c0_5 = arith.constant 0 : index
    %c0_6 = arith.constant 0 : index
    %6 = vector.load %arg5[%c0_5, %c0_6] : memref<8x128xf32, #tpu.memory_space<vmem>>, vector<8x128xf32>
    %7 = arith.addf %5, %6 : vector<8x128xf32>
    %cst_7 = arith.constant 0.000000e+00 : f32
    %8 = vector.broadcast %cst_7 : f32 to vector<8x128xf32>
    %9 = arith.maximumf %7, %8 : vector<8x128xf32>
    %c0_8 = arith.constant 0 : index
    %c0_9 = arith.constant 0 : index
    %10 = vector.load %arg6[%c0_8, %c0_9] : memref<8x128xf32, #tpu.memory_space<vmem>>, vector<8x128xf32>
    tpu.vector_store %arg6[%c0_8, %c0_9], %9 {strides = array<i32>} : memref<8x128xf32, #tpu.memory_space<vmem>>, vector<8x128xf32>,
    return
  }
  func.func @transform_0(%arg0: i32, %arg1: i32) -> (i32, i32) {
    %c0_i32 = arith.constant 0 : i32
    %c0_i32_0 = arith.constant 0 : i32
    return %arg0, %c0_i32 : i32, i32
  }
  func.func @transform_1(%arg0: i32, %arg1: i32) -> (i32, i32) {
    %c0_i32 = arith.constant 0 : i32
    %c0_i32_0 = arith.constant 0 : i32
    return %c0_i32, %arg1 : i32, i32
  }
  func.func @transform_2(%arg0: i32, %arg1: i32) -> (i32, i32) {
    %c0_i32 = arith.constant 0 : i32
    %c0_i32_0 = arith.constant 0 : i32
    return %c0_i32, %arg1 : i32, i32
  }
  func.func @transform_3(%arg0: i32, %arg1: i32) -> (i32, i32) {
    %c0_i32 = arith.constant 0 : i32
    return %arg0, %arg1 : i32, i32
  }
  func.func @transform_4(%arg0: i32, %arg1: i32) -> (i32, i32) {
    %c0_i32 = arith.constant 0 : i32
    return %arg0, %arg1 : i32, i32
  }
}

module attributes {stable_mosaic.version = 11 : i64} {
  func.func @_mm_kernel(%arg0: i32, %arg1: i32, %arg2: memref<248x16xbf16, #tpu.memory_space<vmem>>, %arg3: memref<16x128xbf16, #tpu.memory_space<vmem>>, %arg4: memref<1x128xf32, #tpu.memory_space<vmem>>, %arg5: memref<248x128xf32, #tpu.memory_space<vmem>>) attributes {dimension_semantics = [#tpu.dimension_semantics<parallel>, #tpu.dimension_semantics<parallel>], iteration_bounds = array<i64: 1, 1>, scalar_prefetch = 0 : i64, scratch_operands = 0 : i64, tpu.core_type = #tpu.core_type<tc>, window_params = [{transform_indices = @transform_0, window_bounds = array<i64: 248, 16>}, {transform_indices = @transform_1, window_bounds = array<i64: 16, 128>}, {transform_indices = @transform_2, window_bounds = array<i64: 1, 128>}, {transform_indices = @transform_3, window_bounds = array<i64: 248, 128>}]} {
    %c0 = arith.constant 0 : index
    %c0_0 = arith.constant 0 : index
    %0 = vector.load %arg2[%c0, %c0_0] : memref<248x16xbf16, #tpu.memory_space<vmem>>, vector<248x16xbf16>
    %c0_1 = arith.constant 0 : index
    %c0_2 = arith.constant 0 : index
    %1 = vector.load %arg3[%c0_1, %c0_2] : memref<16x128xbf16, #tpu.memory_space<vmem>>, vector<16x128xbf16>
    %cst = arith.constant dense<0.000000e+00> : vector<248x128xf32>
    %2 = tpu.matmul %0, %1, %cst {dimension_numbers = #tpu.dot_dimension_numbers<[1], [0], [0], [1], [0, 0, 1, 1], [], []>} : vector<248x16xbf16>, vector<16x128xbf16>, vector<248x128xf32> -> vector<248x128xf32>
    %c0_3 = arith.constant 0 : index
    %c0_4 = arith.constant 0 : index
    %3 = vector.load %arg4[%c0_3, %c0_4] : memref<1x128xf32, #tpu.memory_space<vmem>>, vector<1x128xf32>
    %4 = vector.broadcast %3 : vector<1x128xf32> to vector<248x128xf32>
    %5 = arith.addf %2, %4 : vector<248x128xf32>
    %c0_5 = arith.constant 0 : index
    %c0_6 = arith.constant 0 : index
    %6 = vector.load %arg5[%c0_5, %c0_6] : memref<248x128xf32, #tpu.memory_space<vmem>>, vector<248x128xf32>
    tpu.vector_store %arg5[%c0_5, %c0_6], %5 {strides = array<i32>} : memref<248x128xf32, #tpu.memory_space<vmem>>, vector<248x128xf32>,
    return
  }
  func.func @transform_0(%arg0: i32, %arg1: i32) -> (i32, i32) {
    %c0_i32 = arith.constant 0 : i32
    %c0_i32_0 = arith.constant 0 : i32
    return %arg0, %c0_i32 : i32, i32
  }
  func.func @transform_1(%arg0: i32, %arg1: i32) -> (i32, i32) {
    %c0_i32 = arith.constant 0 : i32
    %c0_i32_0 = arith.constant 0 : i32
    return %c0_i32, %arg1 : i32, i32
  }
  func.func @transform_2(%arg0: i32, %arg1: i32) -> (i32, i32) {
    %c0_i32 = arith.constant 0 : i32
    %c0_i32_0 = arith.constant 0 : i32
    return %c0_i32, %arg1 : i32, i32
  }
  func.func @transform_3(%arg0: i32, %arg1: i32) -> (i32, i32) {
    %c0_i32 = arith.constant 0 : i32
    return %arg0, %arg1 : i32, i32
  }
}

</mosaic_0001>

<llo_original>
// kernel: my_resnet_forward.14
$region0: #{my_resnet_forward.14}
  #allocation0 [shape = 'u32[]', space=smem, size = 0x4, offset = 0x4, fixed_abs, tag = 'smem constant byte address 0x4 - core index']
  #allocation1 [shape = 'u32[144,128]{1,0:T(1,128)}', space=vmem, size = 0x12000, scoped, tag = 'internal scratch']
  %s0 = inlined_call_operand.vmem [shape: bf16[1024,160], index: 0, kind: input, shape index: {}]
  %s1 = inlined_call_operand.vmem [shape: bf16[160,128], index: 1, kind: input, shape index: {}]
  %s2 = inlined_call_operand.vmem [shape: f32[1,128], index: 2, kind: input, shape index: {}]
  %s3 = inlined_call_operand.vmem [shape: f32[1024,128], index: 3, kind: output, shape index: {}]
  %s4 = sld [smem:[#allocation0]]
  $region45: #{my_resnet_forward.14} parent=0
    _
  %s6 = ssub.s32 1, %s4
  %s7 = scalar_select 0, %s6, %s4
  loop: start=0, step=1, limit=6
  $region2: #{my_resnet_forward.14} parent=0 // loop_pre_header
    _
  $region3: #{my_resnet_forward.14} parent=0 // loop_header
    %s9 = sphi 0, %s13
    %p10 = scmp.ge.s32.totalorder %s9, 6
    %s16 = sphi 0, %s28
    %s17 = sphi 0, %s24
    %s18 = sphi 0, %s16
    %s19 = sphi 0, %s17
    %s20 = sphi 0, %s18
    %s21 = sphi 0, %s19
    %s31 = sphi 0, %s33
    %s34 = sphi 0, %s31
    %s35 = sphi 0, %s34
    %s51 = sphi 0, %s35
    %s57 = sphi 0, %s59
    %s60 = sphi 0, %s57
    %s61 = sphi 0, %s60
    %s77 = sphi 0, %s61
    %s83 = sphi 0, %s85
    %s86 = sphi 0, %s83
    %s87 = sphi 0, %s86
    %s103 = sphi 0, %s87
    %s111 = sphi 0, %s113
    %s114 = sphi 0, %s111
    %s115 = sphi 0, %s114
    %s131 = sphi 0, %s115
  $region4: #{my_resnet_forward.14} parent=0 // loop_header_branch
    %12 = sbr.rel (%p10) target = $region8
  $region5: #{my_resnet_forward.14} parent=0 // loop_body
    %s14 = ssub.s32 %s9, 1
    %s15 = ssub.s32 %s9, 2
    %s22 = sadd.s32 1, %s17
    %p23 = scmp.ge.s32.totalorder %s22, 1
    %s24 = scalar_select %p23, 0, %s22
    %s25 = sadd.s32 1, %s16
    %s26 = scalar_select %p23, %s25, %s16
    %p27 = scmp.ge.s32.totalorder %s26, 4
    %s28 = scalar_select %p27, 0, %s26
    %s29 = ssub.s32 %s16, %s28
    %p30 = scmp.eq.s32.totalorder %s29, 0
    %s32 = sadd.s32 %s31, 1
    %s33 = scalar_select %p30, %s31, %s32
    %p36 = pneg %p30
    %p37 = scmp.eq.s32.totalorder %s9, 3
    %p38 = por %p36, %p37
    %p39 = scmp.ne.s32.totalorder %s31, %s34
    %p40 = scmp.eq.s32.totalorder %s9, 0
    %p41 = por %p39, %p40
    %p42 = scmp.ne.s32.totalorder %s31, %s34
    %p43 = scmp.eq.s32.totalorder %s14, 3
    %p44 = por %p42, %p43
    %p45 = scmp.ne.s32.totalorder %s34, %s35
    %p46 = scmp.eq.s32.totalorder %s14, 0
    %p47 = por %p45, %p46
    %p48 = scmp.ne.s32.totalorder %s34, %s35
    %p49 = scmp.eq.s32.totalorder %s15, 3
    %p50 = por %p48, %p49
    %p52 = scmp.ne.s32.totalorder %s35, %s51
    %p53 = scmp.eq.s32.totalorder %s15, 0
    %p54 = por %p52, %p53
    %s55 = ssub.s32 %s17, %s24
    %p56 = scmp.eq.s32.totalorder %s55, 0
    %s58 = sadd.s32 %s57, 1
    %s59 = scalar_select %p56, %s57, %s58
    %p62 = pneg %p56
    %p63 = scmp.eq.s32.totalorder %s9, 3
    %p64 = por %p62, %p63
    %p65 = scmp.ne.s32.totalorder %s57, %s60
    %p66 = scmp.eq.s32.totalorder %s9, 0
    %p67 = por %p65, %p66
    %p68 = scmp.ne.s32.totalorder %s57, %s60
    %p69 = scmp.eq.s32.totalorder %s14, 3
    %p70 = por %p68, %p69
    %p71 = scmp.ne.s32.totalorder %s60, %s61
    %p72 = scmp.eq.s32.totalorder %s14, 0
    %p73 = por %p71, %p72
    %p74 = scmp.ne.s32.totalorder %s60, %s61
    %p75 = scmp.eq.s32.totalorder %s15, 3
    %p76 = por %p74, %p75
    %p78 = scmp.ne.s32.totalorder %s61, %s77
    %p79 = scmp.eq.s32.totalorder %s15, 0
    %p80 = por %p78, %p79
    %s81 = ssub.s32 %s17, %s24
    %p82 = scmp.eq.s32.totalorder %s81, 0
    %s84 = sadd.s32 %s83, 1
    %s85 = scalar_select %p82, %s83, %s84
    %p88 = pneg %p82
    %p89 = scmp.eq.s32.totalorder %s9, 3
    %p90 = por %p88, %p89
    %p91 = scmp.ne.s32.totalorder %s83, %s86
    %p92 = scmp.eq.s32.totalorder %s9, 0
    %p93 = por %p91, %p92
    %p94 = scmp.ne.s32.totalorder %s83, %s86
    %p95 = scmp.eq.s32.totalorder %s14, 3
    %p96 = por %p94, %p95
    %p97 = scmp.ne.s32.totalorder %s86, %s87
    %p98 = scmp.eq.s32.totalorder %s14, 0
    %p99 = por %p97, %p98
    %p100 = scmp.ne.s32.totalorder %s86, %s87
    %p101 = scmp.eq.s32.totalorder %s15, 3
    %p102 = por %p100, %p101
    %p104 = scmp.ne.s32.totalorder %s87, %s103
    %p105 = scmp.eq.s32.totalorder %s15, 0
    %p106 = por %p104, %p105
    %s107 = ssub.s32 %s16, %s28
    %s108 = ssub.s32 %s17, %s24
    %s109 = sor.u32 %s107, %s108
    %p110 = scmp.eq.s32.totalorder %s109, 0
    %s112 = sadd.s32 %s111, 1
    %s113 = scalar_select %p110, %s111, %s112
    %p116 = pneg %p110
    %p117 = scmp.eq.s32.totalorder %s9, 3
    %p118 = por %p116, %p117
    %p119 = scmp.ne.s32.totalorder %s111, %s114
    %p120 = scmp.eq.s32.totalorder %s9, 0
    %p121 = por %p119, %p120
    %p122 = scmp.ne.s32.totalorder %s111, %s114
    %p123 = scmp.eq.s32.totalorder %s14, 3
    %p124 = por %p122, %p123
    %p125 = scmp.ne.s32.totalorder %s114, %s115
    %p126 = scmp.eq.s32.totalorder %s14, 0
    %p127 = por %p125, %p126
    %p128 = scmp.ne.s32.totalorder %s114, %s115
    %p129 = scmp.eq.s32.totalorder %s15, 3
    %p130 = por %p128, %p129
    %p132 = scmp.ne.s32.totalorder %s115, %s131
    %p133 = scmp.eq.s32.totalorder %s15, 0
    %p134 = por %p132, %p133
    %p135 = scmp.le.s32.totalorder 1, %s9
    %p136 = scmp.lt.s32.totalorder %s9, 5
    %p137 = pnand %p135, %p136
    %p138 = pneg %p137
    // Predicated region
    $region9: #{my_resnet_forward.14} parent=5 // pred_check
      _
    $region10: #{my_resnet_forward.14} parent=5 // pred_check_branch
      %140 = sbr.rel (%p137) target = $region12
    $region11: #{my_resnet_forward.14} parent=5 // pred_region
      %s141 = ssub.s32 %s9, 1
      // Predicated region
      $region13: #{my_resnet_forward.14} parent=11 // pred_check
        %p142 = pneg %p73
      $region14: #{my_resnet_forward.14} parent=11 // pred_check_branch
        %144 = sbr.rel (%p142) target = $region16
      $region15: #{my_resnet_forward.14} parent=11 // pred_region
        %p145 = scmp.lt.s32.totalorder %s19, 0
        %s146 = scalar_select %p145, %s19, 0
        %s147 = smul.addr %s146, 4
        %s148 = scalar_lea.vmem %s1, %s147
      $region16: #{my_resnet_forward.14} parent=11 // pred_fallthru
        _
      // Predicated region
      $region17: #{my_resnet_forward.14} parent=11 // pred_check
        %p149 = pneg %p99
      $region18: #{my_resnet_forward.14} parent=11 // pred_check_branch
        %151 = sbr.rel (%p149) target = $region20
      $region19: #{my_resnet_forward.14} parent=11 // pred_region
        %p152 = scmp.lt.s32.totalorder %s19, 0
        %s153 = scalar_select %p152, %s19, 0
        %s154 = scalar_lea.vmem %s2, %s153
      $region20: #{my_resnet_forward.14} parent=11 // pred_fallthru
        _
    $region12: #{my_resnet_forward.14} parent=5 // pred_fallthru
      _
    %p155 = scmp.lt.s32.totalorder %s9, 4
    // Predicated region
    $region21: #{my_resnet_forward.14} parent=5 // pred_check
      %p156 = pneg %p155
    $region22: #{my_resnet_forward.14} parent=5 // pred_check_branch
      %158 = sbr.rel (%p156) target = $region24
    $region23: #{my_resnet_forward.14} parent=5 // pred_region
      // Predicated region
      $region25: #{my_resnet_forward.14} parent=23 // pred_check
        %p159 = pneg %p41
      $region26: #{my_resnet_forward.14} parent=23 // pred_check_branch
        %161 = sbr.rel (%p159) target = $region28
      $region27: #{my_resnet_forward.14} parent=23 // pred_region
        %s162 = smul.u32 32, %s16
        %p163 = scmp.lt.s32.totalorder %s162, 127
        %s164 = scalar_select %p163, %s162, 127
        %s165 = smul.addr %s164, 2
        %s166 = smul.addr %s165, 4
        %s167 = scalar_lea.vmem %s0, %s166
        %s168 = smul.u32 32, %s16
      $region28: #{my_resnet_forward.14} parent=23 // pred_fallthru
        _
    $region24: #{my_resnet_forward.14} parent=5 // pred_fallthru
      _
    %p169 = scmp.le.s32.totalorder 1, %s9
    %p170 = scmp.lt.s32.totalorder %s9, 5
    %p171 = pnand %p169, %p170
    %p172 = pneg %p171
    // Predicated region
    $region29: #{my_resnet_forward.14} parent=5 // pred_check
      _
    $region30: #{my_resnet_forward.14} parent=5 // pred_check_branch
      %174 = sbr.rel (%p171) target = $region32
    $region31: #{my_resnet_forward.14} parent=5 // pred_region
      %s175 = ssub.s32 %s9, 1
      %s176 = smul.u32 32, %s18
      %p177 = scmp.lt.s32.totalorder %s176, 127
      %s178 = scalar_select %p177, %s176, 127
      %s179 = smul.addr %s178, 2
      %s180 = smul.addr %s179, 4
      %s181 = scalar_lea.vmem %s0, %s180
      %p182 = pneg %p47
      %p183 = pneg %p44
      %p184 = scmp.lt.s32.totalorder %s19, 0
      %s185 = scalar_select %p184, %s19, 0
      %s186 = smul.addr %s185, 4
      %s187 = scalar_lea.vmem %s1, %s186
      %p188 = pneg %p73
      %p189 = pneg %p70
      %p190 = scmp.lt.s32.totalorder %s19, 0
      %s191 = scalar_select %p190, %s19, 0
      %s192 = scalar_lea.vmem %s2, %s191
      %p193 = pneg %p99
      %p194 = pneg %p96
      %p195 = pneg %p127
      %p196 = pneg %p124
      %s197 = smul.u32 32, %s18
      %p198 = scmp.lt.s32.totalorder %s197, 127
      %s199 = scalar_select %p198, %s197, 127
      %p200 = scmp.lt.s32.totalorder %s19, 0
      %s201 = scalar_select %p200, %s19, 0
      %s202 = sadd.s32 %s201, %s199
      %s203 = smul.addr %s202, 8
      %s204 = scalar_lea.vmem %s3, %s203
      %s205 = smul.u32 32, %s18
      %p206 = scmp.lt.s32.totalorder %s205, 127
      %s207 = scalar_select %p206, %s205, 127
      %s208 = smul.addr %s207, 2
      %s209 = smul.addr %s208, 4
      %s210 = scalar_lea.vmem %s0, %s209
      %s211 = smul.u32 32, %s18
      %p212 = scmp.lt.s32.totalorder %s19, 0
      %s213 = scalar_select %p212, %s19, 0
      %s214 = smul.addr %s213, 4
      %s215 = scalar_lea.vmem %s1, %s214
      %p216 = scmp.lt.s32.totalorder %s19, 0
      %s217 = scalar_select %p216, %s19, 0
      %s218 = scalar_lea.vmem %s2, %s217
      %s219 = smul.u32 32, %s18
      %p220 = scmp.lt.s32.totalorder %s219, 127
      %s221 = scalar_select %p220, %s219, 127
      %p222 = scmp.lt.s32.totalorder %s19, 0
      %s223 = scalar_select %p222, %s19, 0
      %s224 = sadd.s32 %s223, %s221
      %s225 = smul.addr %s224, 8
      %s226 = scalar_lea.vmem %s3, %s225
      %s227 = smul.u32 32, %s18
      %v229 = vld [vmem:[%s210] sm:$0xff]
      %v230 = vld [vmem:[%s210 + $0x8] sm:$0xff]
      %v231 = vld [vmem:[%s210 + $0x10] sm:$0xff]
      %v232 = vld [vmem:[%s210 + $0x18] sm:$0xff]
      %v233 = vld [vmem:[%s210 + $0x20] sm:$0xff]
      %v234 = vld [vmem:[%s210 + $0x28] sm:$0xff]
      %v235 = vld [vmem:[%s210 + $0x30] sm:$0xff]
      %v236 = vld [vmem:[%s210 + $0x38] sm:$0xff]
      %v237 = vld [vmem:[%s210 + $0x40] sm:$0xff]
      %v238 = vld [vmem:[%s210 + $0x48] sm:$0xff]
      %v239 = vld [vmem:[%s210 + $0x50] sm:$0xff]
      %v240 = vld [vmem:[%s210 + $0x58] sm:$0xff]
      %v241 = vld [vmem:[%s210 + $0x60] sm:$0xff]
      %v242 = vld [vmem:[%s210 + $0x68] sm:$0xff]
      %v243 = vld [vmem:[%s210 + $0x70] sm:$0xff]
      %v244 = vld [vmem:[%s210 + $0x78] sm:$0xff]
      %v245 = vld [vmem:[%s210 + $0x80] sm:$0xff]
      %v246 = vld [vmem:[%s210 + $0x88] sm:$0xff]
      %v247 = vld [vmem:[%s210 + $0x90] sm:$0xff]
      %v248 = vld [vmem:[%s210 + $0x98] sm:$0xff]
      %v249 = vld [vmem:[%s210 + $0xa0] sm:$0xff]
      %v250 = vld [vmem:[%s210 + $0xa8] sm:$0xff]
      %v251 = vld [vmem:[%s210 + $0xb0] sm:$0xff]
      %v252 = vld [vmem:[%s210 + $0xb8] sm:$0xff]
      %v253 = vld [vmem:[%s210 + $0xc0] sm:$0xff]
      %v254 = vld [vmem:[%s210 + $0xc8] sm:$0xff]
      %v255 = vld [vmem:[%s210 + $0xd0] sm:$0xff]
      %v256 = vld [vmem:[%s210 + $0xd8] sm:$0xff]
      %v257 = vld [vmem:[%s210 + $0xe0] sm:$0xff]
      %v258 = vld [vmem:[%s210 + $0xe8] sm:$0xff]
      %v259 = vld [vmem:[%s210 + $0xf0] sm:$0xff]
      %v260 = vld [vmem:[%s210 + $0xf8] sm:$0xff]
      %v261 = vld [vmem:[%s215] sm:$0xf]
      %v262 = vld [vmem:[%s215 + $0x4] sm:$0xf]
      %v263 = vld [vmem:[%s215 + $0x8] sm:$0xf]
      %v264 = vld [vmem:[%s215 + $0xc] sm:$0xf]
      %v265 = vld [vmem:[%s215 + $0x10] sm:$0xf]
      %v266 = vld [vmem:[%s215 + $0x14] sm:$0xf]
      %v267 = vld [vmem:[%s215 + $0x18] sm:$0xf]
      %v268 = vld [vmem:[%s215 + $0x1c] sm:$0xf]
      %v269 = vld [vmem:[%s215 + $0x20] sm:$0xf]
      %v270 = vld [vmem:[%s215 + $0x24] sm:$0xf]
      %v271 = vld [vmem:[%s215 + $0x28] sm:$0xf]
      %v272 = vld [vmem:[%s215 + $0x2c] sm:$0xf]
      %v273 = vld [vmem:[%s215 + $0x30] sm:$0xf]
      %v274 = vld [vmem:[%s215 + $0x34] sm:$0xf]
      %v275 = vld [vmem:[%s215 + $0x38] sm:$0xf]
      %v276 = vld [vmem:[%s215 + $0x3c] sm:$0xf]
      %v277 = vld [vmem:[%s215 + $0x40] sm:$0xf]
      %v278 = vld [vmem:[%s215 + $0x44] sm:$0xf]
      %v279 = vld [vmem:[%s215 + $0x48] sm:$0xf]
      %v280 = vld [vmem:[%s215 + $0x4c] sm:$0xf]
      %v281 = vld [vmem:[%s218] sm:$0x1]
      %v283 = vlaneseq
      %v284 = vshrl.u32 %v283, 7
      %v285 = vsub.s32 0, %v284
      %v286 = vrot.slane %v281, %v285
      %v320 = vunpack.c.l.b16 %v229
      %v321 = vunpack.c.h.b16 %v229
      %v322 = vunpack.c.l.b16 %v230
      %v323 = vunpack.c.h.b16 %v230
      %v324 = vunpack.c.l.b16 %v231
      %v325 = vunpack.c.h.b16 %v231
      %v326 = vunpack.c.l.b16 %v232
      %v327 = vunpack.c.h.b16 %v232
      %v328 = vunpack.c.l.b16 %v233
      %v329 = vunpack.c.h.b16 %v233
      %v330 = vunpack.c.l.b16 %v234
      %v331 = vunpack.c.h.b16 %v234
      %v332 = vunpack.c.l.b16 %v235
      %v333 = vunpack.c.h.b16 %v235
      %v334 = vunpack.c.l.b16 %v236
      %v335 = vunpack.c.h.b16 %v236
      %v336 = vunpack.c.l.b16 %v237
      %v337 = vunpack.c.h.b16 %v237
      %v338 = vunpack.c.l.b16 %v238
      %v339 = vunpack.c.h.b16 %v238
      %v340 = vunpack.c.l.b16 %v239
      %v341 = vunpack.c.h.b16 %v239
      %v342 = vunpack.c.l.b16 %v240
      %v343 = vunpack.c.h.b16 %v240
      %v344 = vunpack.c.l.b16 %v241
      %v345 = vunpack.c.h.b16 %v241
      %v346 = vunpack.c.l.b16 %v242
      %v347 = vunpack.c.h.b16 %v242
      %v348 = vunpack.c.l.b16 %v243
      %v349 = vunpack.c.h.b16 %v243
      %v350 = vunpack.c.l.b16 %v244
      %v351 = vunpack.c.h.b16 %v244
      %v352 = vunpack.c.l.b16 %v245
      %v353 = vunpack.c.h.b16 %v245
      %v354 = vunpack.c.l.b16 %v246
      %v355 = vunpack.c.h.b16 %v246
      %v356 = vunpack.c.l.b16 %v247
      %v357 = vunpack.c.h.b16 %v247
      %v358 = vunpack.c.l.b16 %v248
      %v359 = vunpack.c.h.b16 %v248
      %v360 = vunpack.c.l.b16 %v249
      %v361 = vunpack.c.h.b16 %v249
      %v362 = vunpack.c.l.b16 %v250
      %v363 = vunpack.c.h.b16 %v250
      %v364 = vunpack.c.l.b16 %v251
      %v365 = vunpack.c.h.b16 %v251
      %v366 = vunpack.c.l.b16 %v252
      %v367 = vunpack.c.h.b16 %v252
      %v368 = vunpack.c.l.b16 %v253
      %v369 = vunpack.c.h.b16 %v253
      %v370 = vunpack.c.l.b16 %v254
      %v371 = vunpack.c.h.b16 %v254
      %v372 = vunpack.c.l.b16 %v255
      %v373 = vunpack.c.h.b16 %v255
      %v374 = vunpack.c.l.b16 %v256
      %v375 = vunpack.c.h.b16 %v256
      %v376 = vunpack.c.l.b16 %v257
      %v377 = vunpack.c.h.b16 %v257
      %v378 = vunpack.c.l.b16 %v258
      %v379 = vunpack.c.h.b16 %v258
      %v380 = vunpack.c.l.b16 %v259
      %v381 = vunpack.c.h.b16 %v259
      %v382 = vunpack.c.l.b16 %v260
      %v383 = vunpack.c.h.b16 %v260
      %v384 = vpack.c.b16 %v322, %v320
      %v385 = vpack.c.b16 %v323, %v321
      %v386 = vpack.c.b16 %v326, %v324
      %v387 = vpack.c.b16 %v327, %v325
      %v388 = vpack.c.b16 %v330, %v328
      %v389 = vpack.c.b16 %v331, %v329
      %v390 = vpack.c.b16 %v334, %v332
      %v391 = vpack.c.b16 %v335, %v333
      %v392 = vpack.c.b16 %v338, %v336
      %v393 = vpack.c.b16 %v339, %v337
      %v394 = vpack.c.b16 %v342, %v340
      %v395 = vpack.c.b16 %v343, %v341
      %v396 = vpack.c.b16 %v346, %v344
      %v397 = vpack.c.b16 %v347, %v345
      %v398 = vpack.c.b16 %v350, %v348
      %v399 = vpack.c.b16 %v351, %v349
      %v400 = vpack.c.b16 %v354, %v352
      %v401 = vpack.c.b16 %v355, %v353
      %v402 = vpack.c.b16 %v358, %v356
      %v403 = vpack.c.b16 %v359, %v357
      %v404 = vpack.c.b16 %v362, %v360
      %v405 = vpack.c.b16 %v363, %v361
      %v406 = vpack.c.b16 %v366, %v364
      %v407 = vpack.c.b16 %v367, %v365
      %v408 = vpack.c.b16 %v370, %v368
      %v409 = vpack.c.b16 %v371, %v369
      %v410 = vpack.c.b16 %v374, %v372
      %v411 = vpack.c.b16 %v375, %v373
      %v412 = vpack.c.b16 %v378, %v376
      %v413 = vpack.c.b16 %v379, %v377
      %v414 = vpack.c.b16 %v382, %v380
      %v415 = vpack.c.b16 %v383, %v381
      %v452 = vunpack.c.l.b16 %v261
      %v453 = vunpack.c.l.b16 %v262
      %v454 = vunpack.c.l.b16 %v263
      %v455 = vunpack.c.l.b16 %v264
      %v456 = vunpack.c.l.b16 %v265
      %v457 = vunpack.c.l.b16 %v266
      %v458 = vunpack.c.l.b16 %v267
      %v459 = vunpack.c.l.b16 %v268
      %v460 = vunpack.c.l.b16 %v269
      %v461 = vunpack.c.l.b16 %v270
      %v462 = vunpack.c.l.b16 %v271
      %v463 = vunpack.c.l.b16 %v272
      %v464 = vunpack.c.l.b16 %v273
      %v465 = vunpack.c.l.b16 %v274
      %v466 = vunpack.c.l.b16 %v275
      %v467 = vunpack.c.l.b16 %v276
      %v468 = vunpack.c.l.b16 %v277
      %v469 = vunpack.c.l.b16 %v278
      %v470 = vunpack.c.l.b16 %v279
      %v471 = vunpack.c.l.b16 %v280
      %v472 = vpack.c.b16 %v453, %v452
      %v473 = vpack.c.b16 %v455, %v454
      %v474 = vpack.c.b16 %v457, %v456
      %v475 = vpack.c.b16 %v459, %v458
      %v476 = vpack.c.b16 %v461, %v460
      %v477 = vpack.c.b16 %v463, %v462
      %v478 = vpack.c.b16 %v465, %v464
      %v479 = vpack.c.b16 %v467, %v466
      %v480 = vpack.c.b16 %v469, %v468
      %v481 = vpack.c.b16 %v471, %v470
      %vm492 = vcmask 261120
      %v494 = vsel %vm492, %v385, 0
      %v497 = vsel %vm492, %v387, 0
      %v500 = vsel %vm492, %v389, 0
      %v503 = vsel %vm492, %v391, 0
      %v506 = vsel %vm492, %v393, 0
      %v509 = vsel %vm492, %v395, 0
      %v512 = vsel %vm492, %v397, 0
      %v515 = vsel %vm492, %v399, 0
      %v518 = vsel %vm492, %v401, 0
      %v521 = vsel %vm492, %v403, 0
      %v524 = vsel %vm492, %v405, 0
      %v527 = vsel %vm492, %v407, 0
      %v530 = vsel %vm492, %v409, 0
      %v533 = vsel %vm492, %v411, 0
      %v536 = vsel %vm492, %v413, 0
      %v539 = vsel %vm492, %v415, 0
      %541 = vmatprep.subr.bf16.mxu0 0
      %542 = vmatpush1.bf16.msra.mxu0 %v472
      %543 = vmatprep.subr.bf16.mxu0 0
      %544 = vmatpush1.bf16.msra.mxu0 %v473
      %545 = vmatprep.subr.bf16.mxu0 0
      %546 = vmatpush1.bf16.msra.mxu0 %v474
      %547 = vmatprep.subr.bf16.mxu0 0
      %548 = vmatpush1.bf16.msra.mxu0 %v475
      %549 = vmatprep.subr.bf16.mxu0 0
      %550 = vmatpush1.bf16.msra.mxu0 %v476
      %551 = vmatprep.subr.bf16.mxu0 0
      %552 = vmatpush1.bf16.msra.mxu0 %v477
      %553 = vmatprep.subr.bf16.mxu0 0
      %554 = vmatpush1.bf16.msra.mxu0 %v478
      %555 = vmatprep.subr.bf16.mxu0 0
      %556 = vmatpush1.bf16.msra.mxu0 %v479
      %557 = vmatprep.subr.bf16.mxu0 0
      %558 = vmatpush1.bf16.msra.mxu0 %v480
      %559 = vmatprep.subr.bf16.mxu0 0
      %560 = vmatpush1.bf16.msra.mxu0 %v481
      %561 = vmatprep.subr.bf16.mxu0 0
      %562 = vmatpush1.bf16.msra.mxu0 0
      %563 = vmatprep.subr.bf16.mxu0 0
      %564 = vmatpush1.bf16.msra.mxu0 0
      %565 = vmatprep.subr.bf16.mxu0 0
      %566 = vmatpush1.bf16.msra.mxu0 0
      %567 = vmatprep.subr.bf16.mxu0 0
      %568 = vmatpush1.bf16.msra.mxu0 0
      %569 = vmatprep.subr.bf16.mxu0 0
      %570 = vmatpush1.bf16.msra.mxu0 0
      %571 = vmatprep.subr.bf16.mxu0 0
      %572 = vmatpush1.bf16.msra.mxu0 0
      %573 = vmatprep.mubr.bf16.mxu0 %v494
      %574 = vmatmul.mubr.bf16.gmra.mrb[0].mxu0 %v384
      %v575 = vpop.f32.mrb[0].mxu0
      %v576 = vadd.f32 %v286, %v575
      %v577 = vpop.f32.mrb[0].mxu0
      %v578 = vpop.f32.mrb[0].mxu0
      %v579 = vadd.f32 %v286, %v578
      %v580 = vpop.f32.mrb[0].mxu0
      %581 = vmatprep.mubr.bf16.mxu0 %v497
      %582 = vmatmul.mubr.bf16.gmra.mrb[0].mxu0 %v386
      %v583 = vpop.f32.mrb[0].mxu0
      %v584 = vadd.f32 %v286, %v583
      %v585 = vpop.f32.mrb[0].mxu0
      %v586 = vpop.f32.mrb[0].mxu0
      %v587 = vadd.f32 %v286, %v586
      %v588 = vpop.f32.mrb[0].mxu0
      %589 = vmatprep.mubr.bf16.mxu0 %v500
      %590 = vmatmul.mubr.bf16.gmra.mrb[0].mxu0 %v388
      %v591 = vpop.f32.mrb[0].mxu0
      %v592 = vadd.f32 %v286, %v591
      %v593 = vpop.f32.mrb[0].mxu0
      %v594 = vpop.f32.mrb[0].mxu0
      %v595 = vadd.f32 %v286, %v594
      %v596 = vpop.f32.mrb[0].mxu0
      %597 = vmatprep.mubr.bf16.mxu0 %v503
      %598 = vmatmul.mubr.bf16.gmra.mrb[0].mxu0 %v390
      %v599 = vpop.f32.mrb[0].mxu0
      %v600 = vadd.f32 %v286, %v599
      %v601 = vpop.f32.mrb[0].mxu0
      %v602 = vpop.f32.mrb[0].mxu0
      %v603 = vadd.f32 %v286, %v602
      %v604 = vpop.f32.mrb[0].mxu0
      %605 = vmatprep.mubr.bf16.mxu0 %v506
      %606 = vmatmul.mubr.bf16.gmra.mrb[0].mxu0 %v392
      %v607 = vpop.f32.mrb[0].mxu0
      %v608 = vadd.f32 %v286, %v607
      %v609 = vpop.f32.mrb[0].mxu0
      %v610 = vpop.f32.mrb[0].mxu0
      %v611 = vadd.f32 %v286, %v610
      %v612 = vpop.f32.mrb[0].mxu0
      %613 = vmatprep.mubr.bf16.mxu0 %v509
      %614 = vmatmul.mubr.bf16.gmra.mrb[0].mxu0 %v394
      %v615 = vpop.f32.mrb[0].mxu0
      %v616 = vadd.f32 %v286, %v615
      %v617 = vpop.f32.mrb[0].mxu0
      %v618 = vpop.f32.mrb[0].mxu0
      %v619 = vadd.f32 %v286, %v618
      %v620 = vpop.f32.mrb[0].mxu0
      %621 = vmatprep.mubr.bf16.mxu0 %v512
      %622 = vmatmul.mubr.bf16.gmra.mrb[0].mxu0 %v396
      %v623 = vpop.f32.mrb[0].mxu0
      %v624 = vadd.f32 %v286, %v623
      %v625 = vpop.f32.mrb[0].mxu0
      %v626 = vpop.f32.mrb[0].mxu0
      %v627 = vadd.f32 %v286, %v626
      %v628 = vpop.f32.mrb[0].mxu0
      %629 = vmatprep.mubr.bf16.mxu0 %v515
      %630 = vmatmul.mubr.bf16.gmra.mrb[0].mxu0 %v398
      %v631 = vpop.f32.mrb[0].mxu0
      %v632 = vadd.f32 %v286, %v631
      %v633 = vpop.f32.mrb[0].mxu0
      %v634 = vpop.f32.mrb[0].mxu0
      %v635 = vadd.f32 %v286, %v634
      %v636 = vpop.f32.mrb[0].mxu0
      %637 = vmatprep.mubr.bf16.mxu0 %v518
      %638 = vmatmul.mubr.bf16.gmra.mrb[0].mxu0 %v400
      %v639 = vpop.f32.mrb[0].mxu0
      %v640 = vadd.f32 %v286, %v639
      %v641 = vpop.f32.mrb[0].mxu0
      %v642 = vpop.f32.mrb[0].mxu0
      %v643 = vadd.f32 %v286, %v642
      %v644 = vpop.f32.mrb[0].mxu0
      %645 = vmatprep.mubr.bf16.mxu0 %v521
      %646 = vmatmul.mubr.bf16.gmra.mrb[0].mxu0 %v402
      %v647 = vpop.f32.mrb[0].mxu0
      %v648 = vadd.f32 %v286, %v647
      %v649 = vpop.f32.mrb[0].mxu0
      %v650 = vpop.f32.mrb[0].mxu0
      %v651 = vadd.f32 %v286, %v650
      %v652 = vpop.f32.mrb[0].mxu0
      %653 = vmatprep.mubr.bf16.mxu0 %v524
      %654 = vmatmul.mubr.bf16.gmra.mrb[0].mxu0 %v404
      %v655 = vpop.f32.mrb[0].mxu0
      %v656 = vadd.f32 %v286, %v655
      %v657 = vpop.f32.mrb[0].mxu0
      %v658 = vpop.f32.mrb[0].mxu0
      %v659 = vadd.f32 %v286, %v658
      %v660 = vpop.f32.mrb[0].mxu0
      %661 = vmatprep.mubr.bf16.mxu0 %v527
      %662 = vmatmul.mubr.bf16.gmra.mrb[0].mxu0 %v406
      %v663 = vpop.f32.mrb[0].mxu0
      %v664 = vadd.f32 %v286, %v663
      %v665 = vpop.f32.mrb[0].mxu0
      %v666 = vpop.f32.mrb[0].mxu0
      %v667 = vadd.f32 %v286, %v666
      %v668 = vpop.f32.mrb[0].mxu0
      %669 = vmatprep.mubr.bf16.mxu0 %v530
      %670 = vmatmul.mubr.bf16.gmra.mrb[0].mxu0 %v408
      %v671 = vpop.f32.mrb[0].mxu0
      %v672 = vadd.f32 %v286, %v671
      %v673 = vpop.f32.mrb[0].mxu0
      %v674 = vpop.f32.mrb[0].mxu0
      %v675 = vadd.f32 %v286, %v674
      %v676 = vpop.f32.mrb[0].mxu0
      %677 = vmatprep.mubr.bf16.mxu0 %v533
      %678 = vmatmul.mubr.bf16.gmra.mrb[0].mxu0 %v410
      %v679 = vpop.f32.mrb[0].mxu0
      %v680 = vadd.f32 %v286, %v679
      %v681 = vpop.f32.mrb[0].mxu0
      %v682 = vpop.f32.mrb[0].mxu0
      %v683 = vadd.f32 %v286, %v682
      %v684 = vpop.f32.mrb[0].mxu0
      %685 = vmatprep.mubr.bf16.mxu0 %v536
      %686 = vmatmul.mubr.bf16.gmra.mrb[0].mxu0 %v412
      %v687 = vpop.f32.mrb[0].mxu0
      %v688 = vadd.f32 %v286, %v687
      %v689 = vpop.f32.mrb[0].mxu0
      %v690 = vpop.f32.mrb[0].mxu0
      %v691 = vadd.f32 %v286, %v690
      %v692 = vpop.f32.mrb[0].mxu0
      %693 = vmatprep.mubr.bf16.mxu0 %v539
      %694 = vmatmul.mubr.bf16.gmra.mrb[0].mxu0 %v414
      %v695 = vpop.f32.mrb[0].mxu0
      %v696 = vadd.f32 %v286, %v695
      %v697 = vpop.f32.mrb[0].mxu0
      %v698 = vpop.f32.mrb[0].mxu0
      %v699 = vadd.f32 %v286, %v698
      %v700 = vpop.f32.mrb[0].mxu0
      %701 = vdwg.mxu0
      %v702 = vmax.f32 %v576, 0.0
      %v703 = vmax.f32 %v579, 0.0
      %v704 = vmax.f32 %v584, 0.0
      %v705 = vmax.f32 %v587, 0.0
      %v706 = vmax.f32 %v592, 0.0
      %v707 = vmax.f32 %v595, 0.0
      %v708 = vmax.f32 %v600, 0.0
      %v709 = vmax.f32 %v603, 0.0
      %v710 = vmax.f32 %v608, 0.0
      %v711 = vmax.f32 %v611, 0.0
      %v712 = vmax.f32 %v616, 0.0
      %v713 = vmax.f32 %v619, 0.0
      %v714 = vmax.f32 %v624, 0.0
      %v715 = vmax.f32 %v627, 0.0
      %v716 = vmax.f32 %v632, 0.0
      %v717 = vmax.f32 %v635, 0.0
      %v718 = vmax.f32 %v640, 0.0
      %v719 = vmax.f32 %v643, 0.0
      %v720 = vmax.f32 %v648, 0.0
      %v721 = vmax.f32 %v651, 0.0
      %v722 = vmax.f32 %v656, 0.0
      %v723 = vmax.f32 %v659, 0.0
      %v724 = vmax.f32 %v664, 0.0
      %v725 = vmax.f32 %v667, 0.0
      %v726 = vmax.f32 %v672, 0.0
      %v727 = vmax.f32 %v675, 0.0
      %v728 = vmax.f32 %v680, 0.0
      %v729 = vmax.f32 %v683, 0.0
      %v730 = vmax.f32 %v688, 0.0
      %v731 = vmax.f32 %v691, 0.0
      %v732 = vmax.f32 %v696, 0.0
      %v733 = vmax.f32 %v699, 0.0
      %734 = vst [vmem:[%s226] sm:$0xff] %v702
      %735 = vst [vmem:[%s226 + $0x8] sm:$0xff] %v703
      %736 = vst [vmem:[%s226 + $0x10] sm:$0xff] %v704
      %737 = vst [vmem:[%s226 + $0x18] sm:$0xff] %v705
      %738 = vst [vmem:[%s226 + $0x20] sm:$0xff] %v706
      %739 = vst [vmem:[%s226 + $0x28] sm:$0xff] %v707
      %740 = vst [vmem:[%s226 + $0x30] sm:$0xff] %v708
      %741 = vst [vmem:[%s226 + $0x38] sm:$0xff] %v709
      %742 = vst [vmem:[%s226 + $0x40] sm:$0xff] %v710
      %743 = vst [vmem:[%s226 + $0x48] sm:$0xff] %v711
      %744 = vst [vmem:[%s226 + $0x50] sm:$0xff] %v712
      %745 = vst [vmem:[%s226 + $0x58] sm:$0xff] %v713
      %746 = vst [vmem:[%s226 + $0x60] sm:$0xff] %v714
      %747 = vst [vmem:[%s226 + $0x68] sm:$0xff] %v715
      %748 = vst [vmem:[%s226 + $0x70] sm:$0xff] %v716
      %749 = vst [vmem:[%s226 + $0x78] sm:$0xff] %v717
      %750 = vst [vmem:[%s226 + $0x80] sm:$0xff] %v718
      %751 = vst [vmem:[%s226 + $0x88] sm:$0xff] %v719
      %752 = vst [vmem:[%s226 + $0x90] sm:$0xff] %v720
      %753 = vst [vmem:[%s226 + $0x98] sm:$0xff] %v721
      %754 = vst [vmem:[%s226 + $0xa0] sm:$0xff] %v722
      %755 = vst [vmem:[%s226 + $0xa8] sm:$0xff] %v723
      %756 = vst [vmem:[%s226 + $0xb0] sm:$0xff] %v724
      %757 = vst [vmem:[%s226 + $0xb8] sm:$0xff] %v725
      %758 = vst [vmem:[%s226 + $0xc0] sm:$0xff] %v726
      %759 = vst [vmem:[%s226 + $0xc8] sm:$0xff] %v727
      %760 = vst [vmem:[%s226 + $0xd0] sm:$0xff] %v728
      %761 = vst [vmem:[%s226 + $0xd8] sm:$0xff] %v729
      %762 = vst [vmem:[%s226 + $0xe0] sm:$0xff] %v730
      %763 = vst [vmem:[%s226 + $0xe8] sm:$0xff] %v731
      %764 = vst [vmem:[%s226 + $0xf0] sm:$0xff] %v732
      %765 = vst [vmem:[%s226 + $0xf8] sm:$0xff] %v733
      %s766 = smul.u32 32, %s18
      %p767 = scmp.lt.s32.totalorder %s766, 127
      %s768 = scalar_select %p767, %s766, 127
      %p769 = scmp.lt.s32.totalorder %s19, 0
      %s770 = scalar_select %p769, %s19, 0
      %s771 = sadd.s32 %s770, %s768
      %s772 = smul.addr %s771, 8
      %s773 = scalar_lea.vmem %s3, %s772
      // Predicated region
      $region33: #{my_resnet_forward.14} parent=31 // pred_check
        %p774 = pneg %p124
      $region34: #{my_resnet_forward.14} parent=31 // pred_check_branch
        %776 = sbr.rel (%p774) target = $region36
      $region35: #{my_resnet_forward.14} parent=31 // pred_region
        %s777 = smul.u32 32, %s18
      $region36: #{my_resnet_forward.14} parent=31 // pred_fallthru
        _
    $region32: #{my_resnet_forward.14} parent=5 // pred_fallthru
      _
    %p778 = scmp.le.s32.totalorder 2, %s9
    // Predicated region
    $region37: #{my_resnet_forward.14} parent=5 // pred_check
      %p779 = pneg %p778
    $region38: #{my_resnet_forward.14} parent=5 // pred_check_branch
      %781 = sbr.rel (%p779) target = $region40
    $region39: #{my_resnet_forward.14} parent=5 // pred_region
      %s782 = ssub.s32 %s9, 2
      // Predicated region
      $region41: #{my_resnet_forward.14} parent=39 // pred_check
        %p783 = pneg %p130
      $region42: #{my_resnet_forward.14} parent=39 // pred_check_branch
        %785 = sbr.rel (%p783) target = $region44
      $region43: #{my_resnet_forward.14} parent=39 // pred_region
        %s786 = smul.u32 32, %s20
        %p787 = scmp.lt.s32.totalorder %s786, 127
        %s788 = scalar_select %p787, %s786, 127
        %p789 = scmp.lt.s32.totalorder %s21, 0
        %s790 = scalar_select %p789, %s21, 0
        %s791 = sadd.s32 %s790, %s788
        %s792 = smul.addr %s791, 8
        %s793 = scalar_lea.vmem %s3, %s792
      $region44: #{my_resnet_forward.14} parent=39 // pred_fallthru
        _
    $region40: #{my_resnet_forward.14} parent=5 // pred_fallthru
      _
  $region6: #{my_resnet_forward.14} parent=0 // loop_footer
    %s13 = sadd.s32 1, %s9
  $region7: #{my_resnet_forward.14} parent=0 // loop_footer_branch
    %8 = sbr.rel target = $region3
  $region8: #{my_resnet_forward.14} parent=0 // loop_exit
    _

// kernel: my_resnet_forward.15
$region0: #{my_resnet_forward.15}
  #allocation0 [shape = 'u32[]', space=smem, size = 0x4, offset = 0x4, fixed_abs, tag = 'smem constant byte address 0x4 - core index']
  #allocation1 [shape = 'u32[144,128]{1,0:T(1,128)}', space=vmem, size = 0x12000, scoped, tag = 'internal scratch']
  %s0 = inlined_call_operand.vmem [shape: f32[17,17,128], index: 0, kind: input, shape index: {}]
  %s1 = inlined_call_operand.vmem [shape: f32[17,17,128], index: 1, kind: input, shape index: {}]
  %s2 = inlined_call_operand.vmem [shape: f32[17,17,128], index: 2, kind: input, shape index: {}]
  %s3 = inlined_call_operand.vmem [shape: f32[17,17,128], index: 3, kind: input, shape index: {}]
  %s4 = inlined_call_operand.vmem [shape: f32[16,16,128], index: 4, kind: output, shape index: {}]
  %s5 = sld [smem:[#allocation0]]
  $region26: #{my_resnet_forward.15} parent=0
    _
  %s7 = ssub.s32 1, %s5
  %s8 = scalar_select 0, %s7, %s5
  // Predicated region
  $region2: #{my_resnet_forward.15} parent=0 // pred_check
    _
  $region3: #{my_resnet_forward.15} parent=0 // pred_check_branch
    %10 = sbr.rel (0) target = $region5
  $region4: #{my_resnet_forward.15} parent=0 // pred_region
    _
  $region5: #{my_resnet_forward.15} parent=0 // pred_fallthru
    _
  // Predicated region
  $region6: #{my_resnet_forward.15} parent=0 // pred_check
    _
  $region7: #{my_resnet_forward.15} parent=0 // pred_check_branch
    %12 = sbr.rel (0) target = $region9
  $region8: #{my_resnet_forward.15} parent=0 // pred_region
    _
  $region9: #{my_resnet_forward.15} parent=0 // pred_fallthru
    _
  // Predicated region
  $region10: #{my_resnet_forward.15} parent=0 // pred_check
    _
  $region11: #{my_resnet_forward.15} parent=0 // pred_check_branch
    %14 = sbr.rel (0) target = $region13
  $region12: #{my_resnet_forward.15} parent=0 // pred_region
    _
  $region13: #{my_resnet_forward.15} parent=0 // pred_fallthru
    _
  // Predicated region
  $region14: #{my_resnet_forward.15} parent=0 // pred_check
    _
  $region15: #{my_resnet_forward.15} parent=0 // pred_check_branch
    %16 = sbr.rel (0) target = $region17
  $region16: #{my_resnet_forward.15} parent=0 // pred_region
    _
  $region17: #{my_resnet_forward.15} parent=0 // pred_fallthru
    _
  %v17 = vld [vmem:[%s0] sm:$0xff]
  %v18 = vld [vmem:[%s0 + $0x8] sm:$0xff]
  %v19 = vld [vmem:[%s0 + $0x10] sm:$0x1]
  %v20 = vld [vmem:[%s0 + $0x18] sm:$0xff]
  %v21 = vld [vmem:[%s0 + $0x20] sm:$0xff]
  %v22 = vld [vmem:[%s0 + $0x28] sm:$0x1]
  %v23 = vld [vmem:[%s0 + $0x30] sm:$0xff]
  %v24 = vld [vmem:[%s0 + $0x38] sm:$0xff]
  %v25 = vld [vmem:[%s0 + $0x40] sm:$0x1]
  %v26 = vld [vmem:[%s0 + $0x48] sm:$0xff]
  %v27 = vld [vmem:[%s0 + $0x50] sm:$0xff]
  %v28 = vld [vmem:[%s0 + $0x58] sm:$0x1]
  %v29 = vld [vmem:[%s0 + $0x60] sm:$0xff]
  %v30 = vld [vmem:[%s0 + $0x68] sm:$0xff]
  %v31 = vld [vmem:[%s0 + $0x70] sm:$0x1]
  %v32 = vld [vmem:[%s0 + $0x78] sm:$0xff]
  %v33 = vld [vmem:[%s0 + $0x80] sm:$0xff]
  %v34 = vld [vmem:[%s0 + $0x88] sm:$0x1]
  %v35 = vld [vmem:[%s0 + $0x90] sm:$0xff]
  %v36 = vld [vmem:[%s0 + $0x98] sm:$0xff]
  %v37 = vld [vmem:[%s0 + $0xa0] sm:$0x1]
  %v38 = vld [vmem:[%s0 + $0xa8] sm:$0xff]
  %v39 = vld [vmem:[%s0 + $0xb0] sm:$0xff]
  %v40 = vld [vmem:[%s0 + $0xb8] sm:$0x1]
  %v41 = vld [vmem:[%s0 + $0xc0] sm:$0xff]
  %v42 = vld [vmem:[%s0 + $0xc8] sm:$0xff]
  %v43 = vld [vmem:[%s0 + $0xd0] sm:$0x1]
  %v44 = vld [vmem:[%s0 + $0xd8] sm:$0xff]
  %v45 = vld [vmem:[%s0 + $0xe0] sm:$0xff]
  %v46 = vld [vmem:[%s0 + $0xe8] sm:$0x1]
  %v47 = vld [vmem:[%s0 + $0xf0] sm:$0xff]
  %v48 = vld [vmem:[%s0 + $0xf8] sm:$0xff]
  %v49 = vld [vmem:[%s0 + $0x100] sm:$0x1]
  %v50 = vld [vmem:[%s0 + $0x108] sm:$0xff]
  %v51 = vld [vmem:[%s0 + $0x110] sm:$0xff]
  %v52 = vld [vmem:[%s0 + $0x118] sm:$0x1]
  %v53 = vld [vmem:[%s0 + $0x120] sm:$0xff]
  %v54 = vld [vmem:[%s0 + $0x128] sm:$0xff]
  %v55 = vld [vmem:[%s0 + $0x130] sm:$0x1]
  %v56 = vld [vmem:[%s0 + $0x138] sm:$0xff]
  %v57 = vld [vmem:[%s0 + $0x140] sm:$0xff]
  %v58 = vld [vmem:[%s0 + $0x148] sm:$0x1]
  %v59 = vld [vmem:[%s0 + $0x150] sm:$0xff]
  %v60 = vld [vmem:[%s0 + $0x158] sm:$0xff]
  %v61 = vld [vmem:[%s0 + $0x160] sm:$0x1]
  %v62 = vld [vmem:[%s0 + $0x168] sm:$0xff]
  %v63 = vld [vmem:[%s0 + $0x170] sm:$0xff]
  %v64 = vld [vmem:[%s0 + $0x178] sm:$0x1]
  %v65 = vld [vmem:[%s0 + $0x180] sm:$0xff]
  %v66 = vld [vmem:[%s0 + $0x188] sm:$0xff]
  %v67 = vld [vmem:[%s0 + $0x190] sm:$0x1]
  %v68 = vld [vmem:[%s1] sm:$0xff]
  %v69 = vld [vmem:[%s1 + $0x8] sm:$0xff]
  %v70 = vld [vmem:[%s1 + $0x18] sm:$0xff]
  %v71 = vld [vmem:[%s1 + $0x20] sm:$0xff]
  %v72 = vld [vmem:[%s1 + $0x30] sm:$0xff]
  %v73 = vld [vmem:[%s1 + $0x38] sm:$0xff]
  %v74 = vld [vmem:[%s1 + $0x48] sm:$0xff]
  %v75 = vld [vmem:[%s1 + $0x50] sm:$0xff]
  %v76 = vld [vmem:[%s1 + $0x60] sm:$0xff]
  %v77 = vld [vmem:[%s1 + $0x68] sm:$0xff]
  %v78 = vld [vmem:[%s1 + $0x78] sm:$0xff]
  %v79 = vld [vmem:[%s1 + $0x80] sm:$0xff]
  %v80 = vld [vmem:[%s1 + $0x90] sm:$0xff]
  %v81 = vld [vmem:[%s1 + $0x98] sm:$0xff]
  %v82 = vld [vmem:[%s1 + $0xa8] sm:$0xff]
  %v83 = vld [vmem:[%s1 + $0xb0] sm:$0xff]
  %v84 = vld [vmem:[%s1 + $0xc0] sm:$0xff]
  %v85 = vld [vmem:[%s1 + $0xc8] sm:$0xff]
  %v86 = vld [vmem:[%s1 + $0xd8] sm:$0xff]
  %v87 = vld [vmem:[%s1 + $0xe0] sm:$0xff]
  %v88 = vld [vmem:[%s1 + $0xf0] sm:$0xff]
  %v89 = vld [vmem:[%s1 + $0xf8] sm:$0xff]
  %v90 = vld [vmem:[%s1 + $0x108] sm:$0xff]
  %v91 = vld [vmem:[%s1 + $0x110] sm:$0xff]
  %v92 = vld [vmem:[%s1 + $0x120] sm:$0xff]
  %v93 = vld [vmem:[%s1 + $0x128] sm:$0xff]
  %v94 = vld [vmem:[%s1 + $0x138] sm:$0xff]
  %v95 = vld [vmem:[%s1 + $0x140] sm:$0xff]
  %v96 = vld [vmem:[%s1 + $0x150] sm:$0xff]
  %v97 = vld [vmem:[%s1 + $0x158] sm:$0xff]
  %v98 = vld [vmem:[%s1 + $0x168] sm:$0xff]
  %v99 = vld [vmem:[%s1 + $0x170] sm:$0xff]
  %v100 = vld [vmem:[%s1 + $0x180] sm:$0xff]
  %v101 = vld [vmem:[%s1 + $0x188] sm:$0xff]
  %v102 = vld [vmem:[%s2] sm:$0xff]
  %v103 = vld [vmem:[%s2 + $0x8] sm:$0xff]
  %v104 = vld [vmem:[%s2 + $0x10] sm:$0x1]
  %v105 = vld [vmem:[%s2 + $0x18] sm:$0xff]
  %v106 = vld [vmem:[%s2 + $0x20] sm:$0xff]
  %v107 = vld [vmem:[%s2 + $0x28] sm:$0x1]
  %v108 = vld [vmem:[%s2 + $0x30] sm:$0xff]
  %v109 = vld [vmem:[%s2 + $0x38] sm:$0xff]
  %v110 = vld [vmem:[%s2 + $0x40] sm:$0x1]
  %v111 = vld [vmem:[%s2 + $0x48] sm:$0xff]
  %v112 = vld [vmem:[%s2 + $0x50] sm:$0xff]
  %v113 = vld [vmem:[%s2 + $0x58] sm:$0x1]
  %v114 = vld [vmem:[%s2 + $0x60] sm:$0xff]
  %v115 = vld [vmem:[%s2 + $0x68] sm:$0xff]
  %v116 = vld [vmem:[%s2 + $0x70] sm:$0x1]
  %v117 = vld [vmem:[%s2 + $0x78] sm:$0xff]
  %v118 = vld [vmem:[%s2 + $0x80] sm:$0xff]
  %v119 = vld [vmem:[%s2 + $0x88] sm:$0x1]
  %v120 = vld [vmem:[%s2 + $0x90] sm:$0xff]
  %v121 = vld [vmem:[%s2 + $0x98] sm:$0xff]
  %v122 = vld [vmem:[%s2 + $0xa0] sm:$0x1]
  %v123 = vld [vmem:[%s2 + $0xa8] sm:$0xff]
  %v124 = vld [vmem:[%s2 + $0xb0] sm:$0xff]
  %v125 = vld [vmem:[%s2 + $0xb8] sm:$0x1]
  %v126 = vld [vmem:[%s2 + $0xc0] sm:$0xff]
  %v127 = vld [vmem:[%s2 + $0xc8] sm:$0xff]
  %v128 = vld [vmem:[%s2 + $0xd0] sm:$0x1]
  %v129 = vld [vmem:[%s2 + $0xd8] sm:$0xff]
  %v130 = vld [vmem:[%s2 + $0xe0] sm:$0xff]
  %v131 = vld [vmem:[%s2 + $0xe8] sm:$0x1]
  %v132 = vld [vmem:[%s2 + $0xf0] sm:$0xff]
  %v133 = vld [vmem:[%s2 + $0xf8] sm:$0xff]
  %v134 = vld [vmem:[%s2 + $0x100] sm:$0x1]
  %v135 = vld [vmem:[%s2 + $0x108] sm:$0xff]
  %v136 = vld [vmem:[%s2 + $0x110] sm:$0xff]
  %v137 = vld [vmem:[%s2 + $0x118] sm:$0x1]
  %v138 = vld [vmem:[%s2 + $0x120] sm:$0xff]
  %v139 = vld [vmem:[%s2 + $0x128] sm:$0xff]
  %v140 = vld [vmem:[%s2 + $0x130] sm:$0x1]
  %v141 = vld [vmem:[%s2 + $0x138] sm:$0xff]
  %v142 = vld [vmem:[%s2 + $0x140] sm:$0xff]
  %v143 = vld [vmem:[%s2 + $0x148] sm:$0x1]
  %v144 = vld [vmem:[%s2 + $0x150] sm:$0xff]
  %v145 = vld [vmem:[%s2 + $0x158] sm:$0xff]
  %v146 = vld [vmem:[%s2 + $0x160] sm:$0x1]
  %v147 = vld [vmem:[%s2 + $0x168] sm:$0xff]
  %v148 = vld [vmem:[%s2 + $0x170] sm:$0xff]
  %v149 = vld [vmem:[%s2 + $0x178] sm:$0x1]
  %v150 = vld [vmem:[%s3] sm:$0xff]
  %v151 = vld [vmem:[%s3 + $0x8] sm:$0xff]
  %v152 = vld [vmem:[%s3 + $0x18] sm:$0xff]
  %v153 = vld [vmem:[%s3 + $0x20] sm:$0xff]
  %v154 = vld [vmem:[%s3 + $0x30] sm:$0xff]
  %v155 = vld [vmem:[%s3 + $0x38] sm:$0xff]
  %v156 = vld [vmem:[%s3 + $0x48] sm:$0xff]
  %v157 = vld [vmem:[%s3 + $0x50] sm:$0xff]
  %v158 = vld [vmem:[%s3 + $0x60] sm:$0xff]
  %v159 = vld [vmem:[%s3 + $0x68] sm:$0xff]
  %v160 = vld [vmem:[%s3 + $0x78] sm:$0xff]
  %v161 = vld [vmem:[%s3 + $0x80] sm:$0xff]
  %v162 = vld [vmem:[%s3 + $0x90] sm:$0xff]
  %v163 = vld [vmem:[%s3 + $0x98] sm:$0xff]
  %v164 = vld [vmem:[%s3 + $0xa8] sm:$0xff]
  %v165 = vld [vmem:[%s3 + $0xb0] sm:$0xff]
  %v166 = vld [vmem:[%s3 + $0xc0] sm:$0xff]
  %v167 = vld [vmem:[%s3 + $0xc8] sm:$0xff]
  %v168 = vld [vmem:[%s3 + $0xd8] sm:$0xff]
  %v169 = vld [vmem:[%s3 + $0xe0] sm:$0xff]
  %v170 = vld [vmem:[%s3 + $0xf0] sm:$0xff]
  %v171 = vld [vmem:[%s3 + $0xf8] sm:$0xff]
  %v172 = vld [vmem:[%s3 + $0x108] sm:$0xff]
  %v173 = vld [vmem:[%s3 + $0x110] sm:$0xff]
  %v174 = vld [vmem:[%s3 + $0x120] sm:$0xff]
  %v175 = vld [vmem:[%s3 + $0x128] sm:$0xff]
  %v176 = vld [vmem:[%s3 + $0x138] sm:$0xff]
  %v177 = vld [vmem:[%s3 + $0x140] sm:$0xff]
  %v178 = vld [vmem:[%s3 + $0x150] sm:$0xff]
  %v179 = vld [vmem:[%s3 + $0x158] sm:$0xff]
  %v180 = vld [vmem:[%s3 + $0x168] sm:$0xff]
  %v181 = vld [vmem:[%s3 + $0x170] sm:$0xff]
  %vm230 = vcmask 1046528
  %v231 = vrot.slane %v17, 1
  %v232 = vrot.slane %v18, 1
  %v233 = vsel %vm230, %v231, %v232
  %v234 = vrot.slane %v19, 1
  %v235 = vsel %vm230, %v232, %v234
  %v236 = vrot.slane %v20, 1
  %v237 = vrot.slane %v21, 1
  %v238 = vsel %vm230, %v236, %v237
  %v239 = vrot.slane %v22, 1
  %v240 = vsel %vm230, %v237, %v239
  %v241 = vrot.slane %v23, 1
  %v242 = vrot.slane %v24, 1
  %v243 = vsel %vm230, %v241, %v242
  %v244 = vrot.slane %v25, 1
  %v245 = vsel %vm230, %v242, %v244
  %v246 = vrot.slane %v26, 1
  %v247 = vrot.slane %v27, 1
  %v248 = vsel %vm230, %v246, %v247
  %v249 = vrot.slane %v28, 1
  %v250 = vsel %vm230, %v247, %v249
  %v251 = vrot.slane %v29, 1
  %v252 = vrot.slane %v30, 1
  %v253 = vsel %vm230, %v251, %v252
  %v254 = vrot.slane %v31, 1
  %v255 = vsel %vm230, %v252, %v254
  %v256 = vrot.slane %v32, 1
  %v257 = vrot.slane %v33, 1
  %v258 = vsel %vm230, %v256, %v257
  %v259 = vrot.slane %v34, 1
  %v260 = vsel %vm230, %v257, %v259
  %v261 = vrot.slane %v35, 1
  %v262 = vrot.slane %v36, 1
  %v263 = vsel %vm230, %v261, %v262
  %v264 = vrot.slane %v37, 1
  %v265 = vsel %vm230, %v262, %v264
  %v266 = vrot.slane %v38, 1
  %v267 = vrot.slane %v39, 1
  %v268 = vsel %vm230, %v266, %v267
  %v269 = vrot.slane %v40, 1
  %v270 = vsel %vm230, %v267, %v269
  %v271 = vrot.slane %v41, 1
  %v272 = vrot.slane %v42, 1
  %v273 = vsel %vm230, %v271, %v272
  %v274 = vrot.slane %v43, 1
  %v275 = vsel %vm230, %v272, %v274
  %v276 = vrot.slane %v44, 1
  %v277 = vrot.slane %v45, 1
  %v278 = vsel %vm230, %v276, %v277
  %v279 = vrot.slane %v46, 1
  %v280 = vsel %vm230, %v277, %v279
  %v281 = vrot.slane %v47, 1
  %v282 = vrot.slane %v48, 1
  %v283 = vsel %vm230, %v281, %v282
  %v284 = vrot.slane %v49, 1
  %v285 = vsel %vm230, %v282, %v284
  %v286 = vrot.slane %v50, 1
  %v287 = vrot.slane %v51, 1
  %v288 = vsel %vm230, %v286, %v287
  %v289 = vrot.slane %v52, 1
  %v290 = vsel %vm230, %v287, %v289
  %v291 = vrot.slane %v53, 1
  %v292 = vrot.slane %v54, 1
  %v293 = vsel %vm230, %v291, %v292
  %v294 = vrot.slane %v55, 1
  %v295 = vsel %vm230, %v292, %v294
  %v296 = vrot.slane %v56, 1
  %v297 = vrot.slane %v57, 1
  %v298 = vsel %vm230, %v296, %v297
  %v299 = vrot.slane %v58, 1
  %v300 = vsel %vm230, %v297, %v299
  %v301 = vrot.slane %v59, 1
  %v302 = vrot.slane %v60, 1
  %v303 = vsel %vm230, %v301, %v302
  %v304 = vrot.slane %v61, 1
  %v305 = vsel %vm230, %v302, %v304
  %v306 = vrot.slane %v62, 1
  %v307 = vrot.slane %v63, 1
  %v308 = vsel %vm230, %v306, %v307
  %v309 = vrot.slane %v64, 1
  %v310 = vsel %vm230, %v307, %v309
  %v343 = vmax.f32 %v17, %v233
  %v344 = vmax.f32 %v18, %v235
  %v345 = vmax.f32 %v20, %v238
  %v346 = vmax.f32 %v21, %v240
  %v347 = vmax.f32 %v23, %v243
  %v348 = vmax.f32 %v24, %v245
  %v349 = vmax.f32 %v26, %v248
  %v350 = vmax.f32 %v27, %v250
  %v351 = vmax.f32 %v29, %v253
  %v352 = vmax.f32 %v30, %v255
  %v353 = vmax.f32 %v32, %v258
  %v354 = vmax.f32 %v33, %v260
  %v355 = vmax.f32 %v35, %v263
  %v356 = vmax.f32 %v36, %v265
  %v357 = vmax.f32 %v38, %v268
  %v358 = vmax.f32 %v39, %v270
  %v359 = vmax.f32 %v41, %v273
  %v360 = vmax.f32 %v42, %v275
  %v361 = vmax.f32 %v44, %v278
  %v362 = vmax.f32 %v45, %v280
  %v363 = vmax.f32 %v47, %v283
  %v364 = vmax.f32 %v48, %v285
  %v365 = vmax.f32 %v50, %v288
  %v366 = vmax.f32 %v51, %v290
  %v367 = vmax.f32 %v53, %v293
  %v368 = vmax.f32 %v54, %v295
  %v369 = vmax.f32 %v56, %v298
  %v370 = vmax.f32 %v57, %v300
  %v371 = vmax.f32 %v59, %v303
  %v372 = vmax.f32 %v60, %v305
  %v373 = vmax.f32 %v62, %v308
  %v374 = vmax.f32 %v63, %v310
  %v375 = vmax.f32 %v343, %v20
  %v376 = vmax.f32 %v344, %v21
  %v377 = vmax.f32 %v345, %v23
  %v378 = vmax.f32 %v346, %v24
  %v379 = vmax.f32 %v347, %v26
  %v380 = vmax.f32 %v348, %v27
  %v381 = vmax.f32 %v349, %v29
  %v382 = vmax.f32 %v350, %v30
  %v383 = vmax.f32 %v351, %v32
  %v384 = vmax.f32 %v352, %v33
  %v385 = vmax.f32 %v353, %v35
  %v386 = vmax.f32 %v354, %v36
  %v387 = vmax.f32 %v355, %v38
  %v388 = vmax.f32 %v356, %v39
  %v389 = vmax.f32 %v357, %v41
  %v390 = vmax.f32 %v358, %v42
  %v391 = vmax.f32 %v359, %v44
  %v392 = vmax.f32 %v360, %v45
  %v393 = vmax.f32 %v361, %v47
  %v394 = vmax.f32 %v362, %v48
  %v395 = vmax.f32 %v363, %v50
  %v396 = vmax.f32 %v364, %v51
  %v397 = vmax.f32 %v365, %v53
  %v398 = vmax.f32 %v366, %v54
  %v399 = vmax.f32 %v367, %v56
  %v400 = vmax.f32 %v368, %v57
  %v401 = vmax.f32 %v369, %v59
  %v402 = vmax.f32 %v370, %v60
  %v403 = vmax.f32 %v371, %v62
  %v404 = vmax.f32 %v372, %v63
  %v405 = vmax.f32 %v373, %v65
  %v406 = vmax.f32 %v374, %v66
  %v410 = vrot.slane %v65, 1
  %v411 = vrot.slane %v66, 1
  %v412 = vsel %vm230, %v410, %v411
  %v413 = vrot.slane %v67, 1
  %v414 = vsel %vm230, %v411, %v413
  %v417 = vmax.f32 %v375, %v238
  %v418 = vmax.f32 %v376, %v240
  %v419 = vmax.f32 %v377, %v243
  %v420 = vmax.f32 %v378, %v245
  %v421 = vmax.f32 %v379, %v248
  %v422 = vmax.f32 %v380, %v250
  %v423 = vmax.f32 %v381, %v253
  %v424 = vmax.f32 %v382, %v255
  %v425 = vmax.f32 %v383, %v258
  %v426 = vmax.f32 %v384, %v260
  %v427 = vmax.f32 %v385, %v263
  %v428 = vmax.f32 %v386, %v265
  %v429 = vmax.f32 %v387, %v268
  %v430 = vmax.f32 %v388, %v270
  %v431 = vmax.f32 %v389, %v273
  %v432 = vmax.f32 %v390, %v275
  %v433 = vmax.f32 %v391, %v278
  %v434 = vmax.f32 %v392, %v280
  %v435 = vmax.f32 %v393, %v283
  %v436 = vmax.f32 %v394, %v285
  %v437 = vmax.f32 %v395, %v288
  %v438 = vmax.f32 %v396, %v290
  %v439 = vmax.f32 %v397, %v293
  %v440 = vmax.f32 %v398, %v295
  %v441 = vmax.f32 %v399, %v298
  %v442 = vmax.f32 %v400, %v300
  %v443 = vmax.f32 %v401, %v303
  %v444 = vmax.f32 %v402, %v305
  %v445 = vmax.f32 %v403, %v308
  %v446 = vmax.f32 %v404, %v310
  %v447 = vmax.f32 %v405, %v412
  %v448 = vmax.f32 %v406, %v414
  %v449 = vmax.f32 %v417, %v68
  %v450 = vmax.f32 %v418, %v69
  %v451 = vmax.f32 %v419, %v70
  %v452 = vmax.f32 %v420, %v71
  %v453 = vmax.f32 %v421, %v72
  %v454 = vmax.f32 %v422, %v73
  %v455 = vmax.f32 %v423, %v74
  %v456 = vmax.f32 %v424, %v75
  %v457 = vmax.f32 %v425, %v76
  %v458 = vmax.f32 %v426, %v77
  %v459 = vmax.f32 %v427, %v78
  %v460 = vmax.f32 %v428, %v79
  %v461 = vmax.f32 %v429, %v80
  %v462 = vmax.f32 %v430, %v81
  %v463 = vmax.f32 %v431, %v82
  %v464 = vmax.f32 %v432, %v83
  %v465 = vmax.f32 %v433, %v84
  %v466 = vmax.f32 %v434, %v85
  %v467 = vmax.f32 %v435, %v86
  %v468 = vmax.f32 %v436, %v87
  %v469 = vmax.f32 %v437, %v88
  %v470 = vmax.f32 %v438, %v89
  %v471 = vmax.f32 %v439, %v90
  %v472 = vmax.f32 %v440, %v91
  %v473 = vmax.f32 %v441, %v92
  %v474 = vmax.f32 %v442, %v93
  %v475 = vmax.f32 %v443, %v94
  %v476 = vmax.f32 %v444, %v95
  %v477 = vmax.f32 %v445, %v96
  %v478 = vmax.f32 %v446, %v97
  %v479 = vmax.f32 %v447, %v98
  %v480 = vmax.f32 %v448, %v99
  %v481 = vmax.f32 %v449, %v70
  %v482 = vmax.f32 %v450, %v71
  %v483 = vmax.f32 %v451, %v72
  %v484 = vmax.f32 %v452, %v73
  %v485 = vmax.f32 %v453, %v74
  %v486 = vmax.f32 %v454, %v75
  %v487 = vmax.f32 %v455, %v76
  %v488 = vmax.f32 %v456, %v77
  %v489 = vmax.f32 %v457, %v78
  %v490 = vmax.f32 %v458, %v79
  %v491 = vmax.f32 %v459, %v80
  %v492 = vmax.f32 %v460, %v81
  %v493 = vmax.f32 %v461, %v82
  %v494 = vmax.f32 %v462, %v83
  %v495 = vmax.f32 %v463, %v84
  %v496 = vmax.f32 %v464, %v85
  %v497 = vmax.f32 %v465, %v86
  %v498 = vmax.f32 %v466, %v87
  %v499 = vmax.f32 %v467, %v88
  %v500 = vmax.f32 %v468, %v89
  %v501 = vmax.f32 %v469, %v90
  %v502 = vmax.f32 %v470, %v91
  %v503 = vmax.f32 %v471, %v92
  %v504 = vmax.f32 %v472, %v93
  %v505 = vmax.f32 %v473, %v94
  %v506 = vmax.f32 %v474, %v95
  %v507 = vmax.f32 %v475, %v96
  %v508 = vmax.f32 %v476, %v97
  %v509 = vmax.f32 %v477, %v98
  %v510 = vmax.f32 %v478, %v99
  %v511 = vmax.f32 %v479, %v100
  %v512 = vmax.f32 %v480, %v101
  %v513 = vmax.f32 %v481, %v102
  %v514 = vmax.f32 %v482, %v103
  %v515 = vmax.f32 %v483, %v105
  %v516 = vmax.f32 %v484, %v106
  %v517 = vmax.f32 %v485, %v108
  %v518 = vmax.f32 %v486, %v109
  %v519 = vmax.f32 %v487, %v111
  %v520 = vmax.f32 %v488, %v112
  %v521 = vmax.f32 %v489, %v114
  %v522 = vmax.f32 %v490, %v115
  %v523 = vmax.f32 %v491, %v117
  %v524 = vmax.f32 %v492, %v118
  %v525 = vmax.f32 %v493, %v120
  %v526 = vmax.f32 %v494, %v121
  %v527 = vmax.f32 %v495, %v123
  %v528 = vmax.f32 %v496, %v124
  %v529 = vmax.f32 %v497, %v126
  %v530 = vmax.f32 %v498, %v127
  %v531 = vmax.f32 %v499, %v129
  %v532 = vmax.f32 %v500, %v130
  %v533 = vmax.f32 %v501, %v132
  %v534 = vmax.f32 %v502, %v133
  %v535 = vmax.f32 %v503, %v135
  %v536 = vmax.f32 %v504, %v136
  %v537 = vmax.f32 %v505, %v138
  %v538 = vmax.f32 %v506, %v139
  %v539 = vmax.f32 %v507, %v141
  %v540 = vmax.f32 %v508, %v142
  %v541 = vmax.f32 %v509, %v144
  %v542 = vmax.f32 %v510, %v145
  %v543 = vmax.f32 %v511, %v147
  %v544 = vmax.f32 %v512, %v148
  %v593 = vrot.slane %v102, 1
  %v594 = vrot.slane %v103, 1
  %v595 = vsel %vm230, %v593, %v594
  %v596 = vrot.slane %v104, 1
  %v597 = vsel %vm230, %v594, %v596
  %v598 = vrot.slane %v105, 1
  %v599 = vrot.slane %v106, 1
  %v600 = vsel %vm230, %v598, %v599
  %v601 = vrot.slane %v107, 1
  %v602 = vsel %vm230, %v599, %v601
  %v603 = vrot.slane %v108, 1
  %v604 = vrot.slane %v109, 1
  %v605 = vsel %vm230, %v603, %v604
  %v606 = vrot.slane %v110, 1
  %v607 = vsel %vm230, %v604, %v606
  %v608 = vrot.slane %v111, 1
  %v609 = vrot.slane %v112, 1
  %v610 = vsel %vm230, %v608, %v609
  %v611 = vrot.slane %v113, 1
  %v612 = vsel %vm230, %v609, %v611
  %v613 = vrot.slane %v114, 1
  %v614 = vrot.slane %v115, 1
  %v615 = vsel %vm230, %v613, %v614
  %v616 = vrot.slane %v116, 1
  %v617 = vsel %vm230, %v614, %v616
  %v618 = vrot.slane %v117, 1
  %v619 = vrot.slane %v118, 1
  %v620 = vsel %vm230, %v618, %v619
  %v621 = vrot.slane %v119, 1
  %v622 = vsel %vm230, %v619, %v621
  %v623 = vrot.slane %v120, 1
  %v624 = vrot.slane %v121, 1
  %v625 = vsel %vm230, %v623, %v624
  %v626 = vrot.slane %v122, 1
  %v627 = vsel %vm230, %v624, %v626
  %v628 = vrot.slane %v123, 1
  %v629 = vrot.slane %v124, 1
  %v630 = vsel %vm230, %v628, %v629
  %v631 = vrot.slane %v125, 1
  %v632 = vsel %vm230, %v629, %v631
  %v633 = vrot.slane %v126, 1
  %v634 = vrot.slane %v127, 1
  %v635 = vsel %vm230, %v633, %v634
  %v636 = vrot.slane %v128, 1
  %v637 = vsel %vm230, %v634, %v636
  %v638 = vrot.slane %v129, 1
  %v639 = vrot.slane %v130, 1
  %v640 = vsel %vm230, %v638, %v639
  %v641 = vrot.slane %v131, 1
  %v642 = vsel %vm230, %v639, %v641
  %v643 = vrot.slane %v132, 1
  %v644 = vrot.slane %v133, 1
  %v645 = vsel %vm230, %v643, %v644
  %v646 = vrot.slane %v134, 1
  %v647 = vsel %vm230, %v644, %v646
  %v648 = vrot.slane %v135, 1
  %v649 = vrot.slane %v136, 1
  %v650 = vsel %vm230, %v648, %v649
  %v651 = vrot.slane %v137, 1
  %v652 = vsel %vm230, %v649, %v651
  %v653 = vrot.slane %v138, 1
  %v654 = vrot.slane %v139, 1
  %v655 = vsel %vm230, %v653, %v654
  %v656 = vrot.slane %v140, 1
  %v657 = vsel %vm230, %v654, %v656
  %v658 = vrot.slane %v141, 1
  %v659 = vrot.slane %v142, 1
  %v660 = vsel %vm230, %v658, %v659
  %v661 = vrot.slane %v143, 1
  %v662 = vsel %vm230, %v659, %v661
  %v663 = vrot.slane %v144, 1
  %v664 = vrot.slane %v145, 1
  %v665 = vsel %vm230, %v663, %v664
  %v666 = vrot.slane %v146, 1
  %v667 = vsel %vm230, %v664, %v666
  %v668 = vrot.slane %v147, 1
  %v669 = vrot.slane %v148, 1
  %v670 = vsel %vm230, %v668, %v669
  %v671 = vrot.slane %v149, 1
  %v672 = vsel %vm230, %v669, %v671
  %v705 = vmax.f32 %v513, %v595
  %v706 = vmax.f32 %v514, %v597
  %v707 = vmax.f32 %v515, %v600
  %v708 = vmax.f32 %v516, %v602
  %v709 = vmax.f32 %v517, %v605
  %v710 = vmax.f32 %v518, %v607
  %v711 = vmax.f32 %v519, %v610
  %v712 = vmax.f32 %v520, %v612
  %v713 = vmax.f32 %v521, %v615
  %v714 = vmax.f32 %v522, %v617
  %v715 = vmax.f32 %v523, %v620
  %v716 = vmax.f32 %v524, %v622
  %v717 = vmax.f32 %v525, %v625
  %v718 = vmax.f32 %v526, %v627
  %v719 = vmax.f32 %v527, %v630
  %v720 = vmax.f32 %v528, %v632
  %v721 = vmax.f32 %v529, %v635
  %v722 = vmax.f32 %v530, %v637
  %v723 = vmax.f32 %v531, %v640
  %v724 = vmax.f32 %v532, %v642
  %v725 = vmax.f32 %v533, %v645
  %v726 = vmax.f32 %v534, %v647
  %v727 = vmax.f32 %v535, %v650
  %v728 = vmax.f32 %v536, %v652
  %v729 = vmax.f32 %v537, %v655
  %v730 = vmax.f32 %v538, %v657
  %v731 = vmax.f32 %v539, %v660
  %v732 = vmax.f32 %v540, %v662
  %v733 = vmax.f32 %v541, %v665
  %v734 = vmax.f32 %v542, %v667
  %v735 = vmax.f32 %v543, %v670
  %v736 = vmax.f32 %v544, %v672
  %v737 = vmax.f32 %v705, %v150
  %v738 = vmax.f32 %v706, %v151
  %v739 = vmax.f32 %v707, %v152
  %v740 = vmax.f32 %v708, %v153
  %v741 = vmax.f32 %v709, %v154
  %v742 = vmax.f32 %v710, %v155
  %v743 = vmax.f32 %v711, %v156
  %v744 = vmax.f32 %v712, %v157
  %v745 = vmax.f32 %v713, %v158
  %v746 = vmax.f32 %v714, %v159
  %v747 = vmax.f32 %v715, %v160
  %v748 = vmax.f32 %v716, %v161
  %v749 = vmax.f32 %v717, %v162
  %v750 = vmax.f32 %v718, %v163
  %v751 = vmax.f32 %v719, %v164
  %v752 = vmax.f32 %v720, %v165
  %v753 = vmax.f32 %v721, %v166
  %v754 = vmax.f32 %v722, %v167
  %v755 = vmax.f32 %v723, %v168
  %v756 = vmax.f32 %v724, %v169
  %v757 = vmax.f32 %v725, %v170
  %v758 = vmax.f32 %v726, %v171
  %v759 = vmax.f32 %v727, %v172
  %v760 = vmax.f32 %v728, %v173
  %v761 = vmax.f32 %v729, %v174
  %v762 = vmax.f32 %v730, %v175
  %v763 = vmax.f32 %v731, %v176
  %v764 = vmax.f32 %v732, %v177
  %v765 = vmax.f32 %v733, %v178
  %v766 = vmax.f32 %v734, %v179
  %v767 = vmax.f32 %v735, %v180
  %v768 = vmax.f32 %v736, %v181
  %769 = vst [vmem:[%s4] sm:$0xff] %v737
  %770 = vst [vmem:[%s4 + $0x8] sm:$0xff] %v738
  %771 = vst [vmem:[%s4 + $0x10] sm:$0xff] %v739
  %772 = vst [vmem:[%s4 + $0x18] sm:$0xff] %v740
  %773 = vst [vmem:[%s4 + $0x20] sm:$0xff] %v741
  %774 = vst [vmem:[%s4 + $0x28] sm:$0xff] %v742
  %775 = vst [vmem:[%s4 + $0x30] sm:$0xff] %v743
  %776 = vst [vmem:[%s4 + $0x38] sm:$0xff] %v744
  %777 = vst [vmem:[%s4 + $0x40] sm:$0xff] %v745
  %778 = vst [vmem:[%s4 + $0x48] sm:$0xff] %v746
  %779 = vst [vmem:[%s4 + $0x50] sm:$0xff] %v747
  %780 = vst [vmem:[%s4 + $0x58] sm:$0xff] %v748
  %781 = vst [vmem:[%s4 + $0x60] sm:$0xff] %v749
  %782 = vst [vmem:[%s4 + $0x68] sm:$0xff] %v750
  %783 = vst [vmem:[%s4 + $0x70] sm:$0xff] %v751
  %784 = vst [vmem:[%s4 + $0x78] sm:$0xff] %v752
  %785 = vst [vmem:[%s4 + $0x80] sm:$0xff] %v753
  %786 = vst [vmem:[%s4 + $0x88] sm:$0xff] %v754
  %787 = vst [vmem:[%s4 + $0x90] sm:$0xff] %v755
  %788 = vst [vmem:[%s4 + $0x98] sm:$0xff] %v756
  %789 = vst [vmem:[%s4 + $0xa0] sm:$0xff] %v757
  %790 = vst [vmem:[%s4 + $0xa8] sm:$0xff] %v758
  %791 = vst [vmem:[%s4 + $0xb0] sm:$0xff] %v759
  %792 = vst [vmem:[%s4 + $0xb8] sm:$0xff] %v760
  %793 = vst [vmem:[%s4 + $0xc0] sm:$0xff] %v761
  %794 = vst [vmem:[%s4 + $0xc8] sm:$0xff] %v762
  %795 = vst [vmem:[%s4 + $0xd0] sm:$0xff] %v763
  %796 = vst [vmem:[%s4 + $0xd8] sm:$0xff] %v764
  %797 = vst [vmem:[%s4 + $0xe0] sm:$0xff] %v765
  %798 = vst [vmem:[%s4 + $0xe8] sm:$0xff] %v766
  %799 = vst [vmem:[%s4 + $0xf0] sm:$0xff] %v767
  %800 = vst [vmem:[%s4 + $0xf8] sm:$0xff] %v768
  // Predicated region
  $region18: #{my_resnet_forward.15} parent=0 // pred_check
    _
  $region19: #{my_resnet_forward.15} parent=0 // pred_check_branch
    %802 = sbr.rel (0) target = $region21
  $region20: #{my_resnet_forward.15} parent=0 // pred_region
    _
  $region21: #{my_resnet_forward.15} parent=0 // pred_fallthru
    _
  // Predicated region
  $region22: #{my_resnet_forward.15} parent=0 // pred_check
    _
  $region23: #{my_resnet_forward.15} parent=0 // pred_check_branch
    %804 = sbr.rel (0) target = $region25
  $region24: #{my_resnet_forward.15} parent=0 // pred_region
    _
  $region25: #{my_resnet_forward.15} parent=0 // pred_fallthru
    _

// kernel: my_resnet_forward.16
$region0: #{my_resnet_forward.16}
  #allocation0 [shape = 'u32[]', space=smem, size = 0x4, offset = 0x4, fixed_abs, tag = 'smem constant byte address 0x4 - core index']
  #allocation1 [shape = 'u32[144,128]{1,0:T(1,128)}', space=vmem, size = 0x12000, scoped, tag = 'internal scratch']
  %s0 = inlined_call_operand.vmem [shape: bf16[256,80], index: 0, kind: input, shape index: {}]
  %s1 = inlined_call_operand.vmem [shape: bf16[80,128], index: 1, kind: input, shape index: {}]
  %s2 = inlined_call_operand.vmem [shape: f32[1,128], index: 2, kind: input, shape index: {}]
  %s3 = inlined_call_operand.vmem [shape: f32[256,128], index: 3, kind: output, shape index: {}]
  %s4 = sld [smem:[#allocation0]]
  $region22: #{my_resnet_forward.16} parent=0
    _
  %s6 = ssub.s32 1, %s4
  %s7 = scalar_select 0, %s6, %s4
  // Predicated region
  $region2: #{my_resnet_forward.16} parent=0 // pred_check
    _
  $region3: #{my_resnet_forward.16} parent=0 // pred_check_branch
    %9 = sbr.rel (0) target = $region5
  $region4: #{my_resnet_forward.16} parent=0 // pred_region
    _
  $region5: #{my_resnet_forward.16} parent=0 // pred_fallthru
    _
  // Predicated region
  $region6: #{my_resnet_forward.16} parent=0 // pred_check
    _
  $region7: #{my_resnet_forward.16} parent=0 // pred_check_branch
    %11 = sbr.rel (0) target = $region9
  $region8: #{my_resnet_forward.16} parent=0 // pred_region
    _
  $region9: #{my_resnet_forward.16} parent=0 // pred_fallthru
    _
  // Predicated region
  $region10: #{my_resnet_forward.16} parent=0 // pred_check
    _
  $region11: #{my_resnet_forward.16} parent=0 // pred_check_branch
    %13 = sbr.rel (0) target = $region13
  $region12: #{my_resnet_forward.16} parent=0 // pred_region
    _
  $region13: #{my_resnet_forward.16} parent=0 // pred_fallthru
    _
  %v15 = vld [vmem:[%s0] sm:$0xf]
  %v16 = vld [vmem:[%s0 + $0x4] sm:$0xf]
  %v17 = vld [vmem:[%s0 + $0x8] sm:$0xf]
  %v18 = vld [vmem:[%s0 + $0xc] sm:$0xf]
  %v19 = vld [vmem:[%s0 + $0x10] sm:$0xf]
  %v20 = vld [vmem:[%s0 + $0x14] sm:$0xf]
  %v21 = vld [vmem:[%s0 + $0x18] sm:$0xf]
  %v22 = vld [vmem:[%s0 + $0x1c] sm:$0xf]
  %v23 = vld [vmem:[%s0 + $0x20] sm:$0xf]
  %v24 = vld [vmem:[%s0 + $0x24] sm:$0xf]
  %v25 = vld [vmem:[%s0 + $0x28] sm:$0xf]
  %v26 = vld [vmem:[%s0 + $0x2c] sm:$0xf]
  %v27 = vld [vmem:[%s0 + $0x30] sm:$0xf]
  %v28 = vld [vmem:[%s0 + $0x34] sm:$0xf]
  %v29 = vld [vmem:[%s0 + $0x38] sm:$0xf]
  %v30 = vld [vmem:[%s0 + $0x3c] sm:$0xf]
  %v31 = vld [vmem:[%s0 + $0x40] sm:$0xf]
  %v32 = vld [vmem:[%s0 + $0x44] sm:$0xf]
  %v33 = vld [vmem:[%s0 + $0x48] sm:$0xf]
  %v34 = vld [vmem:[%s0 + $0x4c] sm:$0xf]
  %v35 = vld [vmem:[%s0 + $0x50] sm:$0xf]
  %v36 = vld [vmem:[%s0 + $0x54] sm:$0xf]
  %v37 = vld [vmem:[%s0 + $0x58] sm:$0xf]
  %v38 = vld [vmem:[%s0 + $0x5c] sm:$0xf]
  %v39 = vld [vmem:[%s0 + $0x60] sm:$0xf]
  %v40 = vld [vmem:[%s0 + $0x64] sm:$0xf]
  %v41 = vld [vmem:[%s0 + $0x68] sm:$0xf]
  %v42 = vld [vmem:[%s0 + $0x6c] sm:$0xf]
  %v43 = vld [vmem:[%s0 + $0x70] sm:$0xf]
  %v44 = vld [vmem:[%s0 + $0x74] sm:$0xf]
  %v45 = vld [vmem:[%s0 + $0x78] sm:$0xf]
  %v46 = vld [vmem:[%s0 + $0x7c] sm:$0xf]
  %v47 = vld [vmem:[%s1] sm:$0xf]
  %v48 = vld [vmem:[%s1 + $0x4] sm:$0xf]
  %v49 = vld [vmem:[%s1 + $0x8] sm:$0xf]
  %v50 = vld [vmem:[%s1 + $0xc] sm:$0xf]
  %v51 = vld [vmem:[%s1 + $0x10] sm:$0xf]
  %v52 = vld [vmem:[%s1 + $0x14] sm:$0xf]
  %v53 = vld [vmem:[%s1 + $0x18] sm:$0xf]
  %v54 = vld [vmem:[%s1 + $0x1c] sm:$0xf]
  %v55 = vld [vmem:[%s1 + $0x20] sm:$0xf]
  %v56 = vld [vmem:[%s1 + $0x24] sm:$0xf]
  %v57 = vld [vmem:[%s2] sm:$0x1]
  %v59 = vlaneseq
  %v60 = vshrl.u32 %v59, 7
  %v61 = vsub.s32 0, %v60
  %v62 = vrot.slane %v57, %v61
  %v96 = vunpack.c.l.b16 %v15
  %v97 = vunpack.c.l.b16 %v16
  %v98 = vunpack.c.l.b16 %v17
  %v99 = vunpack.c.l.b16 %v18
  %v100 = vunpack.c.l.b16 %v19
  %v101 = vunpack.c.l.b16 %v20
  %v102 = vunpack.c.l.b16 %v21
  %v103 = vunpack.c.l.b16 %v22
  %v104 = vunpack.c.l.b16 %v23
  %v105 = vunpack.c.l.b16 %v24
  %v106 = vunpack.c.l.b16 %v25
  %v107 = vunpack.c.l.b16 %v26
  %v108 = vunpack.c.l.b16 %v27
  %v109 = vunpack.c.l.b16 %v28
  %v110 = vunpack.c.l.b16 %v29
  %v111 = vunpack.c.l.b16 %v30
  %v112 = vunpack.c.l.b16 %v31
  %v113 = vunpack.c.l.b16 %v32
  %v114 = vunpack.c.l.b16 %v33
  %v115 = vunpack.c.l.b16 %v34
  %v116 = vunpack.c.l.b16 %v35
  %v117 = vunpack.c.l.b16 %v36
  %v118 = vunpack.c.l.b16 %v37
  %v119 = vunpack.c.l.b16 %v38
  %v120 = vunpack.c.l.b16 %v39
  %v121 = vunpack.c.l.b16 %v40
  %v122 = vunpack.c.l.b16 %v41
  %v123 = vunpack.c.l.b16 %v42
  %v124 = vunpack.c.l.b16 %v43
  %v125 = vunpack.c.l.b16 %v44
  %v126 = vunpack.c.l.b16 %v45
  %v127 = vunpack.c.l.b16 %v46
  %v128 = vpack.c.b16 %v97, %v96
  %v129 = vpack.c.b16 %v99, %v98
  %v130 = vpack.c.b16 %v101, %v100
  %v131 = vpack.c.b16 %v103, %v102
  %v132 = vpack.c.b16 %v105, %v104
  %v133 = vpack.c.b16 %v107, %v106
  %v134 = vpack.c.b16 %v109, %v108
  %v135 = vpack.c.b16 %v111, %v110
  %v136 = vpack.c.b16 %v113, %v112
  %v137 = vpack.c.b16 %v115, %v114
  %v138 = vpack.c.b16 %v117, %v116
  %v139 = vpack.c.b16 %v119, %v118
  %v140 = vpack.c.b16 %v121, %v120
  %v141 = vpack.c.b16 %v123, %v122
  %v142 = vpack.c.b16 %v125, %v124
  %v143 = vpack.c.b16 %v127, %v126
  %v154 = vunpack.c.l.b16 %v47
  %v155 = vunpack.c.l.b16 %v48
  %v156 = vunpack.c.l.b16 %v49
  %v157 = vunpack.c.l.b16 %v50
  %v158 = vunpack.c.l.b16 %v51
  %v159 = vunpack.c.l.b16 %v52
  %v160 = vunpack.c.l.b16 %v53
  %v161 = vunpack.c.l.b16 %v54
  %v162 = vunpack.c.l.b16 %v55
  %v163 = vunpack.c.l.b16 %v56
  %v164 = vpack.c.b16 %v155, %v154
  %v165 = vpack.c.b16 %v157, %v156
  %v166 = vpack.c.b16 %v159, %v158
  %v167 = vpack.c.b16 %v161, %v160
  %v168 = vpack.c.b16 %v163, %v162
  %vm174 = vcmask 654336
  %v176 = vsel %vm174, %v128, 0
  %v179 = vsel %vm174, %v129, 0
  %v182 = vsel %vm174, %v130, 0
  %v185 = vsel %vm174, %v131, 0
  %v188 = vsel %vm174, %v132, 0
  %v191 = vsel %vm174, %v133, 0
  %v194 = vsel %vm174, %v134, 0
  %v197 = vsel %vm174, %v135, 0
  %v200 = vsel %vm174, %v136, 0
  %v203 = vsel %vm174, %v137, 0
  %v206 = vsel %vm174, %v138, 0
  %v209 = vsel %vm174, %v139, 0
  %v212 = vsel %vm174, %v140, 0
  %v215 = vsel %vm174, %v141, 0
  %v218 = vsel %vm174, %v142, 0
  %v221 = vsel %vm174, %v143, 0
  %223 = vmatprep.subr.bf16.mxu0 0
  %224 = vmatpush1.bf16.msra.mxu0 %v164
  %225 = vmatprep.subr.bf16.mxu0 0
  %226 = vmatpush1.bf16.msra.mxu0 %v165
  %227 = vmatprep.subr.bf16.mxu0 0
  %228 = vmatpush1.bf16.msra.mxu0 %v166
  %229 = vmatprep.subr.bf16.mxu0 0
  %230 = vmatpush1.bf16.msra.mxu0 %v167
  %231 = vmatprep.subr.bf16.mxu0 0
  %232 = vmatpush1.bf16.msra.mxu0 %v168
  %233 = vmatprep.subr.bf16.mxu0 0
  %234 = vmatpush1.bf16.msra.mxu0 0
  %235 = vmatprep.subr.bf16.mxu0 0
  %236 = vmatpush1.bf16.msra.mxu0 0
  %237 = vmatprep.subr.bf16.mxu0 0
  %238 = vmatpush1.bf16.msra.mxu0 0
  %239 = vmatprep.subr.bf16.mxu0 0
  %240 = vmatpush1.bf16.msra.mxu0 0
  %241 = vmatprep.subr.bf16.mxu0 0
  %242 = vmatpush1.bf16.msra.mxu0 0
  %243 = vmatprep.subr.bf16.mxu0 0
  %244 = vmatpush1.bf16.msra.mxu0 0
  %245 = vmatprep.subr.bf16.mxu0 0
  %246 = vmatpush1.bf16.msra.mxu0 0
  %247 = vmatprep.subr.bf16.mxu0 0
  %248 = vmatpush1.bf16.msra.mxu0 0
  %249 = vmatprep.subr.bf16.mxu0 0
  %250 = vmatpush1.bf16.msra.mxu0 0
  %251 = vmatprep.subr.bf16.mxu0 0
  %252 = vmatpush1.bf16.msra.mxu0 0
  %253 = vmatprep.subr.bf16.mxu0 0
  %254 = vmatpush1.bf16.msra.mxu0 0
  %255 = vmatprep.mubr.bf16.mxu0 0
  %256 = vmatmul.mubr.bf16.gmra.mrb[0].mxu0 %v176
  %v257 = vpop.f32.mrb[0].mxu0
  %v258 = vadd.f32 %v62, %v257
  %v259 = vpop.f32.mrb[0].mxu0
  %v260 = vpop.f32.mrb[0].mxu0
  %v261 = vadd.f32 %v62, %v260
  %v262 = vpop.f32.mrb[0].mxu0
  %263 = vmatprep.mubr.bf16.mxu0 0
  %264 = vmatmul.mubr.bf16.gmra.mrb[0].mxu0 %v179
  %v265 = vpop.f32.mrb[0].mxu0
  %v266 = vadd.f32 %v62, %v265
  %v267 = vpop.f32.mrb[0].mxu0
  %v268 = vpop.f32.mrb[0].mxu0
  %v269 = vadd.f32 %v62, %v268
  %v270 = vpop.f32.mrb[0].mxu0
  %271 = vmatprep.mubr.bf16.mxu0 0
  %272 = vmatmul.mubr.bf16.gmra.mrb[0].mxu0 %v182
  %v273 = vpop.f32.mrb[0].mxu0
  %v274 = vadd.f32 %v62, %v273
  %v275 = vpop.f32.mrb[0].mxu0
  %v276 = vpop.f32.mrb[0].mxu0
  %v277 = vadd.f32 %v62, %v276
  %v278 = vpop.f32.mrb[0].mxu0
  %279 = vmatprep.mubr.bf16.mxu0 0
  %280 = vmatmul.mubr.bf16.gmra.mrb[0].mxu0 %v185
  %v281 = vpop.f32.mrb[0].mxu0
  %v282 = vadd.f32 %v62, %v281
  %v283 = vpop.f32.mrb[0].mxu0
  %v284 = vpop.f32.mrb[0].mxu0
  %v285 = vadd.f32 %v62, %v284
  %v286 = vpop.f32.mrb[0].mxu0
  %287 = vmatprep.mubr.bf16.mxu0 0
  %288 = vmatmul.mubr.bf16.gmra.mrb[0].mxu0 %v188
  %v289 = vpop.f32.mrb[0].mxu0
  %v290 = vadd.f32 %v62, %v289
  %v291 = vpop.f32.mrb[0].mxu0
  %v292 = vpop.f32.mrb[0].mxu0
  %v293 = vadd.f32 %v62, %v292
  %v294 = vpop.f32.mrb[0].mxu0
  %295 = vmatprep.mubr.bf16.mxu0 0
  %296 = vmatmul.mubr.bf16.gmra.mrb[0].mxu0 %v191
  %v297 = vpop.f32.mrb[0].mxu0
  %v298 = vadd.f32 %v62, %v297
  %v299 = vpop.f32.mrb[0].mxu0
  %v300 = vpop.f32.mrb[0].mxu0
  %v301 = vadd.f32 %v62, %v300
  %v302 = vpop.f32.mrb[0].mxu0
  %303 = vmatprep.mubr.bf16.mxu0 0
  %304 = vmatmul.mubr.bf16.gmra.mrb[0].mxu0 %v194
  %v305 = vpop.f32.mrb[0].mxu0
  %v306 = vadd.f32 %v62, %v305
  %v307 = vpop.f32.mrb[0].mxu0
  %v308 = vpop.f32.mrb[0].mxu0
  %v309 = vadd.f32 %v62, %v308
  %v310 = vpop.f32.mrb[0].mxu0
  %311 = vmatprep.mubr.bf16.mxu0 0
  %312 = vmatmul.mubr.bf16.gmra.mrb[0].mxu0 %v197
  %v313 = vpop.f32.mrb[0].mxu0
  %v314 = vadd.f32 %v62, %v313
  %v315 = vpop.f32.mrb[0].mxu0
  %v316 = vpop.f32.mrb[0].mxu0
  %v317 = vadd.f32 %v62, %v316
  %v318 = vpop.f32.mrb[0].mxu0
  %319 = vmatprep.mubr.bf16.mxu0 0
  %320 = vmatmul.mubr.bf16.gmra.mrb[0].mxu0 %v200
  %v321 = vpop.f32.mrb[0].mxu0
  %v322 = vadd.f32 %v62, %v321
  %v323 = vpop.f32.mrb[0].mxu0
  %v324 = vpop.f32.mrb[0].mxu0
  %v325 = vadd.f32 %v62, %v324
  %v326 = vpop.f32.mrb[0].mxu0
  %327 = vmatprep.mubr.bf16.mxu0 0
  %328 = vmatmul.mubr.bf16.gmra.mrb[0].mxu0 %v203
  %v329 = vpop.f32.mrb[0].mxu0
  %v330 = vadd.f32 %v62, %v329
  %v331 = vpop.f32.mrb[0].mxu0
  %v332 = vpop.f32.mrb[0].mxu0
  %v333 = vadd.f32 %v62, %v332
  %v334 = vpop.f32.mrb[0].mxu0
  %335 = vmatprep.mubr.bf16.mxu0 0
  %336 = vmatmul.mubr.bf16.gmra.mrb[0].mxu0 %v206
  %v337 = vpop.f32.mrb[0].mxu0
  %v338 = vadd.f32 %v62, %v337
  %v339 = vpop.f32.mrb[0].mxu0
  %v340 = vpop.f32.mrb[0].mxu0
  %v341 = vadd.f32 %v62, %v340
  %v342 = vpop.f32.mrb[0].mxu0
  %343 = vmatprep.mubr.bf16.mxu0 0
  %344 = vmatmul.mubr.bf16.gmra.mrb[0].mxu0 %v209
  %v345 = vpop.f32.mrb[0].mxu0
  %v346 = vadd.f32 %v62, %v345
  %v347 = vpop.f32.mrb[0].mxu0
  %v348 = vpop.f32.mrb[0].mxu0
  %v349 = vadd.f32 %v62, %v348
  %v350 = vpop.f32.mrb[0].mxu0
  %351 = vmatprep.mubr.bf16.mxu0 0
  %352 = vmatmul.mubr.bf16.gmra.mrb[0].mxu0 %v212
  %v353 = vpop.f32.mrb[0].mxu0
  %v354 = vadd.f32 %v62, %v353
  %v355 = vpop.f32.mrb[0].mxu0
  %v356 = vpop.f32.mrb[0].mxu0
  %v357 = vadd.f32 %v62, %v356
  %v358 = vpop.f32.mrb[0].mxu0
  %359 = vmatprep.mubr.bf16.mxu0 0
  %360 = vmatmul.mubr.bf16.gmra.mrb[0].mxu0 %v215
  %v361 = vpop.f32.mrb[0].mxu0
  %v362 = vadd.f32 %v62, %v361
  %v363 = vpop.f32.mrb[0].mxu0
  %v364 = vpop.f32.mrb[0].mxu0
  %v365 = vadd.f32 %v62, %v364
  %v366 = vpop.f32.mrb[0].mxu0
  %367 = vmatprep.mubr.bf16.mxu0 0
  %368 = vmatmul.mubr.bf16.gmra.mrb[0].mxu0 %v218
  %v369 = vpop.f32.mrb[0].mxu0
  %v370 = vadd.f32 %v62, %v369
  %v371 = vpop.f32.mrb[0].mxu0
  %v372 = vpop.f32.mrb[0].mxu0
  %v373 = vadd.f32 %v62, %v372
  %v374 = vpop.f32.mrb[0].mxu0
  %375 = vmatprep.mubr.bf16.mxu0 0
  %376 = vmatmul.mubr.bf16.gmra.mrb[0].mxu0 %v221
  %v377 = vpop.f32.mrb[0].mxu0
  %v378 = vadd.f32 %v62, %v377
  %v379 = vpop.f32.mrb[0].mxu0
  %v380 = vpop.f32.mrb[0].mxu0
  %v381 = vadd.f32 %v62, %v380
  %v382 = vpop.f32.mrb[0].mxu0
  %383 = vdwg.mxu0
  %v384 = vmax.f32 %v258, 0.0
  %v385 = vmax.f32 %v261, 0.0
  %v386 = vmax.f32 %v266, 0.0
  %v387 = vmax.f32 %v269, 0.0
  %v388 = vmax.f32 %v274, 0.0
  %v389 = vmax.f32 %v277, 0.0
  %v390 = vmax.f32 %v282, 0.0
  %v391 = vmax.f32 %v285, 0.0
  %v392 = vmax.f32 %v290, 0.0
  %v393 = vmax.f32 %v293, 0.0
  %v394 = vmax.f32 %v298, 0.0
  %v395 = vmax.f32 %v301, 0.0
  %v396 = vmax.f32 %v306, 0.0
  %v397 = vmax.f32 %v309, 0.0
  %v398 = vmax.f32 %v314, 0.0
  %v399 = vmax.f32 %v317, 0.0
  %v400 = vmax.f32 %v322, 0.0
  %v401 = vmax.f32 %v325, 0.0
  %v402 = vmax.f32 %v330, 0.0
  %v403 = vmax.f32 %v333, 0.0
  %v404 = vmax.f32 %v338, 0.0
  %v405 = vmax.f32 %v341, 0.0
  %v406 = vmax.f32 %v346, 0.0
  %v407 = vmax.f32 %v349, 0.0
  %v408 = vmax.f32 %v354, 0.0
  %v409 = vmax.f32 %v357, 0.0
  %v410 = vmax.f32 %v362, 0.0
  %v411 = vmax.f32 %v365, 0.0
  %v412 = vmax.f32 %v370, 0.0
  %v413 = vmax.f32 %v373, 0.0
  %v414 = vmax.f32 %v378, 0.0
  %v415 = vmax.f32 %v381, 0.0
  %416 = vst [vmem:[%s3] sm:$0xff] %v384
  %417 = vst [vmem:[%s3 + $0x8] sm:$0xff] %v385
  %418 = vst [vmem:[%s3 + $0x10] sm:$0xff] %v386
  %419 = vst [vmem:[%s3 + $0x18] sm:$0xff] %v387
  %420 = vst [vmem:[%s3 + $0x20] sm:$0xff] %v388
  %421 = vst [vmem:[%s3 + $0x28] sm:$0xff] %v389
  %422 = vst [vmem:[%s3 + $0x30] sm:$0xff] %v390
  %423 = vst [vmem:[%s3 + $0x38] sm:$0xff] %v391
  %424 = vst [vmem:[%s3 + $0x40] sm:$0xff] %v392
  %425 = vst [vmem:[%s3 + $0x48] sm:$0xff] %v393
  %426 = vst [vmem:[%s3 + $0x50] sm:$0xff] %v394
  %427 = vst [vmem:[%s3 + $0x58] sm:$0xff] %v395
  %428 = vst [vmem:[%s3 + $0x60] sm:$0xff] %v396
  %429 = vst [vmem:[%s3 + $0x68] sm:$0xff] %v397
  %430 = vst [vmem:[%s3 + $0x70] sm:$0xff] %v398
  %431 = vst [vmem:[%s3 + $0x78] sm:$0xff] %v399
  %432 = vst [vmem:[%s3 + $0x80] sm:$0xff] %v400
  %433 = vst [vmem:[%s3 + $0x88] sm:$0xff] %v401
  %434 = vst [vmem:[%s3 + $0x90] sm:$0xff] %v402
  %435 = vst [vmem:[%s3 + $0x98] sm:$0xff] %v403
  %436 = vst [vmem:[%s3 + $0xa0] sm:$0xff] %v404
  %437 = vst [vmem:[%s3 + $0xa8] sm:$0xff] %v405
  %438 = vst [vmem:[%s3 + $0xb0] sm:$0xff] %v406
  %439 = vst [vmem:[%s3 + $0xb8] sm:$0xff] %v407
  %440 = vst [vmem:[%s3 + $0xc0] sm:$0xff] %v408
  %441 = vst [vmem:[%s3 + $0xc8] sm:$0xff] %v409
  %442 = vst [vmem:[%s3 + $0xd0] sm:$0xff] %v410
  %443 = vst [vmem:[%s3 + $0xd8] sm:$0xff] %v411
  %444 = vst [vmem:[%s3 + $0xe0] sm:$0xff] %v412
  %445 = vst [vmem:[%s3 + $0xe8] sm:$0xff] %v413
  %446 = vst [vmem:[%s3 + $0xf0] sm:$0xff] %v414
  %447 = vst [vmem:[%s3 + $0xf8] sm:$0xff] %v415
  // Predicated region
  $region14: #{my_resnet_forward.16} parent=0 // pred_check
    _
  $region15: #{my_resnet_forward.16} parent=0 // pred_check_branch
    %449 = sbr.rel (0) target = $region17
  $region16: #{my_resnet_forward.16} parent=0 // pred_region
    _
  $region17: #{my_resnet_forward.16} parent=0 // pred_fallthru
    _
  // Predicated region
  $region18: #{my_resnet_forward.16} parent=0 // pred_check
    _
  $region19: #{my_resnet_forward.16} parent=0 // pred_check_branch
    %451 = sbr.rel (0) target = $region21
  $region20: #{my_resnet_forward.16} parent=0 // pred_region
    _
  $region21: #{my_resnet_forward.16} parent=0 // pred_fallthru
    _

// kernel: my_resnet_forward.17
$region0: #{my_resnet_forward.17}
  #allocation0 [shape = 'u32[]', space=smem, size = 0x4, offset = 0x4, fixed_abs, tag = 'smem constant byte address 0x4 - core index']
  #allocation1 [shape = 'u32[144,128]{1,0:T(1,128)}', space=vmem, size = 0x12000, scoped, tag = 'internal scratch']
  %s0 = inlined_call_operand.vmem [shape: bf16[256,80], index: 0, kind: input, shape index: {}]
  %s1 = inlined_call_operand.vmem [shape: bf16[80,128], index: 1, kind: input, shape index: {}]
  %s2 = inlined_call_operand.vmem [shape: f32[1,128], index: 2, kind: input, shape index: {}]
  %s3 = inlined_call_operand.vmem [shape: f32[256,128], index: 3, kind: input, shape index: {}]
  %s4 = inlined_call_operand.vmem [shape: f32[256,128], index: 4, kind: output, shape index: {}]
  %s5 = sld [smem:[#allocation0]]
  $region26: #{my_resnet_forward.17} parent=0
    _
  %s7 = ssub.s32 1, %s5
  %s8 = scalar_select 0, %s7, %s5
  // Predicated region
  $region2: #{my_resnet_forward.17} parent=0 // pred_check
    _
  $region3: #{my_resnet_forward.17} parent=0 // pred_check_branch
    %10 = sbr.rel (0) target = $region5
  $region4: #{my_resnet_forward.17} parent=0 // pred_region
    _
  $region5: #{my_resnet_forward.17} parent=0 // pred_fallthru
    _
  // Predicated region
  $region6: #{my_resnet_forward.17} parent=0 // pred_check
    _
  $region7: #{my_resnet_forward.17} parent=0 // pred_check_branch
    %12 = sbr.rel (0) target = $region9
  $region8: #{my_resnet_forward.17} parent=0 // pred_region
    _
  $region9: #{my_resnet_forward.17} parent=0 // pred_fallthru
    _
  // Predicated region
  $region10: #{my_resnet_forward.17} parent=0 // pred_check
    _
  $region11: #{my_resnet_forward.17} parent=0 // pred_check_branch
    %14 = sbr.rel (0) target = $region13
  $region12: #{my_resnet_forward.17} parent=0 // pred_region
    _
  $region13: #{my_resnet_forward.17} parent=0 // pred_fallthru
    _
  // Predicated region
  $region14: #{my_resnet_forward.17} parent=0 // pred_check
    _
  $region15: #{my_resnet_forward.17} parent=0 // pred_check_branch
    %16 = sbr.rel (0) target = $region17
  $region16: #{my_resnet_forward.17} parent=0 // pred_region
    _
  $region17: #{my_resnet_forward.17} parent=0 // pred_fallthru
    _
  %v18 = vld [vmem:[%s0] sm:$0xf]
  %v19 = vld [vmem:[%s0 + $0x4] sm:$0xf]
  %v20 = vld [vmem:[%s0 + $0x8] sm:$0xf]
  %v21 = vld [vmem:[%s0 + $0xc] sm:$0xf]
  %v22 = vld [vmem:[%s0 + $0x10] sm:$0xf]
  %v23 = vld [vmem:[%s0 + $0x14] sm:$0xf]
  %v24 = vld [vmem:[%s0 + $0x18] sm:$0xf]
  %v25 = vld [vmem:[%s0 + $0x1c] sm:$0xf]
  %v26 = vld [vmem:[%s0 + $0x20] sm:$0xf]
  %v27 = vld [vmem:[%s0 + $0x24] sm:$0xf]
  %v28 = vld [vmem:[%s0 + $0x28] sm:$0xf]
  %v29 = vld [vmem:[%s0 + $0x2c] sm:$0xf]
  %v30 = vld [vmem:[%s0 + $0x30] sm:$0xf]
  %v31 = vld [vmem:[%s0 + $0x34] sm:$0xf]
  %v32 = vld [vmem:[%s0 + $0x38] sm:$0xf]
  %v33 = vld [vmem:[%s0 + $0x3c] sm:$0xf]
  %v34 = vld [vmem:[%s0 + $0x40] sm:$0xf]
  %v35 = vld [vmem:[%s0 + $0x44] sm:$0xf]
  %v36 = vld [vmem:[%s0 + $0x48] sm:$0xf]
  %v37 = vld [vmem:[%s0 + $0x4c] sm:$0xf]
  %v38 = vld [vmem:[%s0 + $0x50] sm:$0xf]
  %v39 = vld [vmem:[%s0 + $0x54] sm:$0xf]
  %v40 = vld [vmem:[%s0 + $0x58] sm:$0xf]
  %v41 = vld [vmem:[%s0 + $0x5c] sm:$0xf]
  %v42 = vld [vmem:[%s0 + $0x60] sm:$0xf]
  %v43 = vld [vmem:[%s0 + $0x64] sm:$0xf]
  %v44 = vld [vmem:[%s0 + $0x68] sm:$0xf]
  %v45 = vld [vmem:[%s0 + $0x6c] sm:$0xf]
  %v46 = vld [vmem:[%s0 + $0x70] sm:$0xf]
  %v47 = vld [vmem:[%s0 + $0x74] sm:$0xf]
  %v48 = vld [vmem:[%s0 + $0x78] sm:$0xf]
  %v49 = vld [vmem:[%s0 + $0x7c] sm:$0xf]
  %v50 = vld [vmem:[%s1] sm:$0xf]
  %v51 = vld [vmem:[%s1 + $0x4] sm:$0xf]
  %v52 = vld [vmem:[%s1 + $0x8] sm:$0xf]
  %v53 = vld [vmem:[%s1 + $0xc] sm:$0xf]
  %v54 = vld [vmem:[%s1 + $0x10] sm:$0xf]
  %v55 = vld [vmem:[%s1 + $0x14] sm:$0xf]
  %v56 = vld [vmem:[%s1 + $0x18] sm:$0xf]
  %v57 = vld [vmem:[%s1 + $0x1c] sm:$0xf]
  %v58 = vld [vmem:[%s1 + $0x20] sm:$0xf]
  %v59 = vld [vmem:[%s1 + $0x24] sm:$0xf]
  %v60 = vld [vmem:[%s2] sm:$0x1]
  %v62 = vlaneseq
  %v63 = vshrl.u32 %v62, 7
  %v64 = vsub.s32 0, %v63
  %v65 = vrot.slane %v60, %v64
  %v99 = vunpack.c.l.b16 %v18
  %v100 = vunpack.c.l.b16 %v19
  %v101 = vunpack.c.l.b16 %v20
  %v102 = vunpack.c.l.b16 %v21
  %v103 = vunpack.c.l.b16 %v22
  %v104 = vunpack.c.l.b16 %v23
  %v105 = vunpack.c.l.b16 %v24
  %v106 = vunpack.c.l.b16 %v25
  %v107 = vunpack.c.l.b16 %v26
  %v108 = vunpack.c.l.b16 %v27
  %v109 = vunpack.c.l.b16 %v28
  %v110 = vunpack.c.l.b16 %v29
  %v111 = vunpack.c.l.b16 %v30
  %v112 = vunpack.c.l.b16 %v31
  %v113 = vunpack.c.l.b16 %v32
  %v114 = vunpack.c.l.b16 %v33
  %v115 = vunpack.c.l.b16 %v34
  %v116 = vunpack.c.l.b16 %v35
  %v117 = vunpack.c.l.b16 %v36
  %v118 = vunpack.c.l.b16 %v37
  %v119 = vunpack.c.l.b16 %v38
  %v120 = vunpack.c.l.b16 %v39
  %v121 = vunpack.c.l.b16 %v40
  %v122 = vunpack.c.l.b16 %v41
  %v123 = vunpack.c.l.b16 %v42
  %v124 = vunpack.c.l.b16 %v43
  %v125 = vunpack.c.l.b16 %v44
  %v126 = vunpack.c.l.b16 %v45
  %v127 = vunpack.c.l.b16 %v46
  %v128 = vunpack.c.l.b16 %v47
  %v129 = vunpack.c.l.b16 %v48
  %v130 = vunpack.c.l.b16 %v49
  %v131 = vpack.c.b16 %v100, %v99
  %v132 = vpack.c.b16 %v102, %v101
  %v133 = vpack.c.b16 %v104, %v103
  %v134 = vpack.c.b16 %v106, %v105
  %v135 = vpack.c.b16 %v108, %v107
  %v136 = vpack.c.b16 %v110, %v109
  %v137 = vpack.c.b16 %v112, %v111
  %v138 = vpack.c.b16 %v114, %v113
  %v139 = vpack.c.b16 %v116, %v115
  %v140 = vpack.c.b16 %v118, %v117
  %v141 = vpack.c.b16 %v120, %v119
  %v142 = vpack.c.b16 %v122, %v121
  %v143 = vpack.c.b16 %v124, %v123
  %v144 = vpack.c.b16 %v126, %v125
  %v145 = vpack.c.b16 %v128, %v127
  %v146 = vpack.c.b16 %v130, %v129
  %v157 = vunpack.c.l.b16 %v50
  %v158 = vunpack.c.l.b16 %v51
  %v159 = vunpack.c.l.b16 %v52
  %v160 = vunpack.c.l.b16 %v53
  %v161 = vunpack.c.l.b16 %v54
  %v162 = vunpack.c.l.b16 %v55
  %v163 = vunpack.c.l.b16 %v56
  %v164 = vunpack.c.l.b16 %v57
  %v165 = vunpack.c.l.b16 %v58
  %v166 = vunpack.c.l.b16 %v59
  %v167 = vpack.c.b16 %v158, %v157
  %v168 = vpack.c.b16 %v160, %v159
  %v169 = vpack.c.b16 %v162, %v161
  %v170 = vpack.c.b16 %v164, %v163
  %v171 = vpack.c.b16 %v166, %v165
  %vm177 = vcmask 654336
  %v179 = vsel %vm177, %v131, 0
  %v182 = vsel %vm177, %v132, 0
  %v185 = vsel %vm177, %v133, 0
  %v188 = vsel %vm177, %v134, 0
  %v191 = vsel %vm177, %v135, 0
  %v194 = vsel %vm177, %v136, 0
  %v197 = vsel %vm177, %v137, 0
  %v200 = vsel %vm177, %v138, 0
  %v203 = vsel %vm177, %v139, 0
  %v206 = vsel %vm177, %v140, 0
  %v209 = vsel %vm177, %v141, 0
  %v212 = vsel %vm177, %v142, 0
  %v215 = vsel %vm177, %v143, 0
  %v218 = vsel %vm177, %v144, 0
  %v221 = vsel %vm177, %v145, 0
  %v224 = vsel %vm177, %v146, 0
  %226 = vmatprep.subr.bf16.mxu0 0
  %227 = vmatpush1.bf16.msra.mxu0 %v167
  %228 = vmatprep.subr.bf16.mxu0 0
  %229 = vmatpush1.bf16.msra.mxu0 %v168
  %230 = vmatprep.subr.bf16.mxu0 0
  %231 = vmatpush1.bf16.msra.mxu0 %v169
  %232 = vmatprep.subr.bf16.mxu0 0
  %233 = vmatpush1.bf16.msra.mxu0 %v170
  %234 = vmatprep.subr.bf16.mxu0 0
  %235 = vmatpush1.bf16.msra.mxu0 %v171
  %236 = vmatprep.subr.bf16.mxu0 0
  %237 = vmatpush1.bf16.msra.mxu0 0
  %238 = vmatprep.subr.bf16.mxu0 0
  %239 = vmatpush1.bf16.msra.mxu0 0
  %240 = vmatprep.subr.bf16.mxu0 0
  %241 = vmatpush1.bf16.msra.mxu0 0
  %242 = vmatprep.subr.bf16.mxu0 0
  %243 = vmatpush1.bf16.msra.mxu0 0
  %244 = vmatprep.subr.bf16.mxu0 0
  %245 = vmatpush1.bf16.msra.mxu0 0
  %246 = vmatprep.subr.bf16.mxu0 0
  %247 = vmatpush1.bf16.msra.mxu0 0
  %248 = vmatprep.subr.bf16.mxu0 0
  %249 = vmatpush1.bf16.msra.mxu0 0
  %250 = vmatprep.subr.bf16.mxu0 0
  %251 = vmatpush1.bf16.msra.mxu0 0
  %252 = vmatprep.subr.bf16.mxu0 0
  %253 = vmatpush1.bf16.msra.mxu0 0
  %254 = vmatprep.subr.bf16.mxu0 0
  %255 = vmatpush1.bf16.msra.mxu0 0
  %256 = vmatprep.subr.bf16.mxu0 0
  %257 = vmatpush1.bf16.msra.mxu0 0
  %258 = vmatprep.mubr.bf16.mxu0 0
  %259 = vmatmul.mubr.bf16.gmra.mrb[0].mxu0 %v179
  %v260 = vpop.f32.mrb[0].mxu0
  %v261 = vadd.f32 %v65, %v260
  %v262 = vpop.f32.mrb[0].mxu0
  %v263 = vpop.f32.mrb[0].mxu0
  %v264 = vadd.f32 %v65, %v263
  %v265 = vpop.f32.mrb[0].mxu0
  %266 = vmatprep.mubr.bf16.mxu0 0
  %267 = vmatmul.mubr.bf16.gmra.mrb[0].mxu0 %v182
  %v268 = vpop.f32.mrb[0].mxu0
  %v269 = vadd.f32 %v65, %v268
  %v270 = vpop.f32.mrb[0].mxu0
  %v271 = vpop.f32.mrb[0].mxu0
  %v272 = vadd.f32 %v65, %v271
  %v273 = vpop.f32.mrb[0].mxu0
  %274 = vmatprep.mubr.bf16.mxu0 0
  %275 = vmatmul.mubr.bf16.gmra.mrb[0].mxu0 %v185
  %v276 = vpop.f32.mrb[0].mxu0
  %v277 = vadd.f32 %v65, %v276
  %v278 = vpop.f32.mrb[0].mxu0
  %v279 = vpop.f32.mrb[0].mxu0
  %v280 = vadd.f32 %v65, %v279
  %v281 = vpop.f32.mrb[0].mxu0
  %282 = vmatprep.mubr.bf16.mxu0 0
  %283 = vmatmul.mubr.bf16.gmra.mrb[0].mxu0 %v188
  %v284 = vpop.f32.mrb[0].mxu0
  %v285 = vadd.f32 %v65, %v284
  %v286 = vpop.f32.mrb[0].mxu0
  %v287 = vpop.f32.mrb[0].mxu0
  %v288 = vadd.f32 %v65, %v287
  %v289 = vpop.f32.mrb[0].mxu0
  %290 = vmatprep.mubr.bf16.mxu0 0
  %291 = vmatmul.mubr.bf16.gmra.mrb[0].mxu0 %v191
  %v292 = vpop.f32.mrb[0].mxu0
  %v293 = vadd.f32 %v65, %v292
  %v294 = vpop.f32.mrb[0].mxu0
  %v295 = vpop.f32.mrb[0].mxu0
  %v296 = vadd.f32 %v65, %v295
  %v297 = vpop.f32.mrb[0].mxu0
  %298 = vmatprep.mubr.bf16.mxu0 0
  %299 = vmatmul.mubr.bf16.gmra.mrb[0].mxu0 %v194
  %v300 = vpop.f32.mrb[0].mxu0
  %v301 = vadd.f32 %v65, %v300
  %v302 = vpop.f32.mrb[0].mxu0
  %v303 = vpop.f32.mrb[0].mxu0
  %v304 = vadd.f32 %v65, %v303
  %v305 = vpop.f32.mrb[0].mxu0
  %306 = vmatprep.mubr.bf16.mxu0 0
  %307 = vmatmul.mubr.bf16.gmra.mrb[0].mxu0 %v197
  %v308 = vpop.f32.mrb[0].mxu0
  %v309 = vadd.f32 %v65, %v308
  %v310 = vpop.f32.mrb[0].mxu0
  %v311 = vpop.f32.mrb[0].mxu0
  %v312 = vadd.f32 %v65, %v311
  %v313 = vpop.f32.mrb[0].mxu0
  %314 = vmatprep.mubr.bf16.mxu0 0
  %315 = vmatmul.mubr.bf16.gmra.mrb[0].mxu0 %v200
  %v316 = vpop.f32.mrb[0].mxu0
  %v317 = vadd.f32 %v65, %v316
  %v318 = vpop.f32.mrb[0].mxu0
  %v319 = vpop.f32.mrb[0].mxu0
  %v320 = vadd.f32 %v65, %v319
  %v321 = vpop.f32.mrb[0].mxu0
  %322 = vmatprep.mubr.bf16.mxu0 0
  %323 = vmatmul.mubr.bf16.gmra.mrb[0].mxu0 %v203
  %v324 = vpop.f32.mrb[0].mxu0
  %v325 = vadd.f32 %v65, %v324
  %v326 = vpop.f32.mrb[0].mxu0
  %v327 = vpop.f32.mrb[0].mxu0
  %v328 = vadd.f32 %v65, %v327
  %v329 = vpop.f32.mrb[0].mxu0
  %330 = vmatprep.mubr.bf16.mxu0 0
  %331 = vmatmul.mubr.bf16.gmra.mrb[0].mxu0 %v206
  %v332 = vpop.f32.mrb[0].mxu0
  %v333 = vadd.f32 %v65, %v332
  %v334 = vpop.f32.mrb[0].mxu0
  %v335 = vpop.f32.mrb[0].mxu0
  %v336 = vadd.f32 %v65, %v335
  %v337 = vpop.f32.mrb[0].mxu0
  %338 = vmatprep.mubr.bf16.mxu0 0
  %339 = vmatmul.mubr.bf16.gmra.mrb[0].mxu0 %v209
  %v340 = vpop.f32.mrb[0].mxu0
  %v341 = vadd.f32 %v65, %v340
  %v342 = vpop.f32.mrb[0].mxu0
  %v343 = vpop.f32.mrb[0].mxu0
  %v344 = vadd.f32 %v65, %v343
  %v345 = vpop.f32.mrb[0].mxu0
  %346 = vmatprep.mubr.bf16.mxu0 0
  %347 = vmatmul.mubr.bf16.gmra.mrb[0].mxu0 %v212
  %v348 = vpop.f32.mrb[0].mxu0
  %v349 = vadd.f32 %v65, %v348
  %v350 = vpop.f32.mrb[0].mxu0
  %v351 = vpop.f32.mrb[0].mxu0
  %v352 = vadd.f32 %v65, %v351
  %v353 = vpop.f32.mrb[0].mxu0
  %354 = vmatprep.mubr.bf16.mxu0 0
  %355 = vmatmul.mubr.bf16.gmra.mrb[0].mxu0 %v215
  %v356 = vpop.f32.mrb[0].mxu0
  %v357 = vadd.f32 %v65, %v356
  %v358 = vpop.f32.mrb[0].mxu0
  %v359 = vpop.f32.mrb[0].mxu0
  %v360 = vadd.f32 %v65, %v359
  %v361 = vpop.f32.mrb[0].mxu0
  %362 = vmatprep.mubr.bf16.mxu0 0
  %363 = vmatmul.mubr.bf16.gmra.mrb[0].mxu0 %v218
  %v364 = vpop.f32.mrb[0].mxu0
  %v365 = vadd.f32 %v65, %v364
  %v366 = vpop.f32.mrb[0].mxu0
  %v367 = vpop.f32.mrb[0].mxu0
  %v368 = vadd.f32 %v65, %v367
  %v369 = vpop.f32.mrb[0].mxu0
  %370 = vmatprep.mubr.bf16.mxu0 0
  %371 = vmatmul.mubr.bf16.gmra.mrb[0].mxu0 %v221
  %v372 = vpop.f32.mrb[0].mxu0
  %v373 = vadd.f32 %v65, %v372
  %v374 = vpop.f32.mrb[0].mxu0
  %v375 = vpop.f32.mrb[0].mxu0
  %v376 = vadd.f32 %v65, %v375
  %v377 = vpop.f32.mrb[0].mxu0
  %378 = vmatprep.mubr.bf16.mxu0 0
  %379 = vmatmul.mubr.bf16.gmra.mrb[0].mxu0 %v224
  %v380 = vpop.f32.mrb[0].mxu0
  %v381 = vadd.f32 %v65, %v380
  %v382 = vpop.f32.mrb[0].mxu0
  %v383 = vpop.f32.mrb[0].mxu0
  %v384 = vadd.f32 %v65, %v383
  %v385 = vpop.f32.mrb[0].mxu0
  %386 = vdwg.mxu0
  %v387 = vld [vmem:[%s3] sm:$0xff]
  %v388 = vld [vmem:[%s3 + $0x8] sm:$0xff]
  %v389 = vld [vmem:[%s3 + $0x10] sm:$0xff]
  %v390 = vld [vmem:[%s3 + $0x18] sm:$0xff]
  %v391 = vld [vmem:[%s3 + $0x20] sm:$0xff]
  %v392 = vld [vmem:[%s3 + $0x28] sm:$0xff]
  %v393 = vld [vmem:[%s3 + $0x30] sm:$0xff]
  %v394 = vld [vmem:[%s3 + $0x38] sm:$0xff]
  %v395 = vld [vmem:[%s3 + $0x40] sm:$0xff]
  %v396 = vld [vmem:[%s3 + $0x48] sm:$0xff]
  %v397 = vld [vmem:[%s3 + $0x50] sm:$0xff]
  %v398 = vld [vmem:[%s3 + $0x58] sm:$0xff]
  %v399 = vld [vmem:[%s3 + $0x60] sm:$0xff]
  %v400 = vld [vmem:[%s3 + $0x68] sm:$0xff]
  %v401 = vld [vmem:[%s3 + $0x70] sm:$0xff]
  %v402 = vld [vmem:[%s3 + $0x78] sm:$0xff]
  %v403 = vld [vmem:[%s3 + $0x80] sm:$0xff]
  %v404 = vld [vmem:[%s3 + $0x88] sm:$0xff]
  %v405 = vld [vmem:[%s3 + $0x90] sm:$0xff]
  %v406 = vld [vmem:[%s3 + $0x98] sm:$0xff]
  %v407 = vld [vmem:[%s3 + $0xa0] sm:$0xff]
  %v408 = vld [vmem:[%s3 + $0xa8] sm:$0xff]
  %v409 = vld [vmem:[%s3 + $0xb0] sm:$0xff]
  %v410 = vld [vmem:[%s3 + $0xb8] sm:$0xff]
  %v411 = vld [vmem:[%s3 + $0xc0] sm:$0xff]
  %v412 = vld [vmem:[%s3 + $0xc8] sm:$0xff]
  %v413 = vld [vmem:[%s3 + $0xd0] sm:$0xff]
  %v414 = vld [vmem:[%s3 + $0xd8] sm:$0xff]
  %v415 = vld [vmem:[%s3 + $0xe0] sm:$0xff]
  %v416 = vld [vmem:[%s3 + $0xe8] sm:$0xff]
  %v417 = vld [vmem:[%s3 + $0xf0] sm:$0xff]
  %v418 = vld [vmem:[%s3 + $0xf8] sm:$0xff]
  %v419 = vadd.f32 %v261, %v387
  %v420 = vadd.f32 %v264, %v388
  %v421 = vadd.f32 %v269, %v389
  %v422 = vadd.f32 %v272, %v390
  %v423 = vadd.f32 %v277, %v391
  %v424 = vadd.f32 %v280, %v392
  %v425 = vadd.f32 %v285, %v393
  %v426 = vadd.f32 %v288, %v394
  %v427 = vadd.f32 %v293, %v395
  %v428 = vadd.f32 %v296, %v396
  %v429 = vadd.f32 %v301, %v397
  %v430 = vadd.f32 %v304, %v398
  %v431 = vadd.f32 %v309, %v399
  %v432 = vadd.f32 %v312, %v400
  %v433 = vadd.f32 %v317, %v401
  %v434 = vadd.f32 %v320, %v402
  %v435 = vadd.f32 %v325, %v403
  %v436 = vadd.f32 %v328, %v404
  %v437 = vadd.f32 %v333, %v405
  %v438 = vadd.f32 %v336, %v406
  %v439 = vadd.f32 %v341, %v407
  %v440 = vadd.f32 %v344, %v408
  %v441 = vadd.f32 %v349, %v409
  %v442 = vadd.f32 %v352, %v410
  %v443 = vadd.f32 %v357, %v411
  %v444 = vadd.f32 %v360, %v412
  %v445 = vadd.f32 %v365, %v413
  %v446 = vadd.f32 %v368, %v414
  %v447 = vadd.f32 %v373, %v415
  %v448 = vadd.f32 %v376, %v416
  %v449 = vadd.f32 %v381, %v417
  %v450 = vadd.f32 %v384, %v418
  %v451 = vmax.f32 %v419, 0.0
  %v452 = vmax.f32 %v420, 0.0
  %v453 = vmax.f32 %v421, 0.0
  %v454 = vmax.f32 %v422, 0.0
  %v455 = vmax.f32 %v423, 0.0
  %v456 = vmax.f32 %v424, 0.0
  %v457 = vmax.f32 %v425, 0.0
  %v458 = vmax.f32 %v426, 0.0
  %v459 = vmax.f32 %v427, 0.0
  %v460 = vmax.f32 %v428, 0.0
  %v461 = vmax.f32 %v429, 0.0
  %v462 = vmax.f32 %v430, 0.0
  %v463 = vmax.f32 %v431, 0.0
  %v464 = vmax.f32 %v432, 0.0
  %v465 = vmax.f32 %v433, 0.0
  %v466 = vmax.f32 %v434, 0.0
  %v467 = vmax.f32 %v435, 0.0
  %v468 = vmax.f32 %v436, 0.0
  %v469 = vmax.f32 %v437, 0.0
  %v470 = vmax.f32 %v438, 0.0
  %v471 = vmax.f32 %v439, 0.0
  %v472 = vmax.f32 %v440, 0.0
  %v473 = vmax.f32 %v441, 0.0
  %v474 = vmax.f32 %v442, 0.0
  %v475 = vmax.f32 %v443, 0.0
  %v476 = vmax.f32 %v444, 0.0
  %v477 = vmax.f32 %v445, 0.0
  %v478 = vmax.f32 %v446, 0.0
  %v479 = vmax.f32 %v447, 0.0
  %v480 = vmax.f32 %v448, 0.0
  %v481 = vmax.f32 %v449, 0.0
  %v482 = vmax.f32 %v450, 0.0
  %483 = vst [vmem:[%s4] sm:$0xff] %v451
  %484 = vst [vmem:[%s4 + $0x8] sm:$0xff] %v452
  %485 = vst [vmem:[%s4 + $0x10] sm:$0xff] %v453
  %486 = vst [vmem:[%s4 + $0x18] sm:$0xff] %v454
  %487 = vst [vmem:[%s4 + $0x20] sm:$0xff] %v455
  %488 = vst [vmem:[%s4 + $0x28] sm:$0xff] %v456
  %489 = vst [vmem:[%s4 + $0x30] sm:$0xff] %v457
  %490 = vst [vmem:[%s4 + $0x38] sm:$0xff] %v458
  %491 = vst [vmem:[%s4 + $0x40] sm:$0xff] %v459
  %492 = vst [vmem:[%s4 + $0x48] sm:$0xff] %v460
  %493 = vst [vmem:[%s4 + $0x50] sm:$0xff] %v461
  %494 = vst [vmem:[%s4 + $0x58] sm:$0xff] %v462
  %495 = vst [vmem:[%s4 + $0x60] sm:$0xff] %v463
  %496 = vst [vmem:[%s4 + $0x68] sm:$0xff] %v464
  %497 = vst [vmem:[%s4 + $0x70] sm:$0xff] %v465
  %498 = vst [vmem:[%s4 + $0x78] sm:$0xff] %v466
  %499 = vst [vmem:[%s4 + $0x80] sm:$0xff] %v467
  %500 = vst [vmem:[%s4 + $0x88] sm:$0xff] %v468
  %501 = vst [vmem:[%s4 + $0x90] sm:$0xff] %v469
  %502 = vst [vmem:[%s4 + $0x98] sm:$0xff] %v470
  %503 = vst [vmem:[%s4 + $0xa0] sm:$0xff] %v471
  %504 = vst [vmem:[%s4 + $0xa8] sm:$0xff] %v472
  %505 = vst [vmem:[%s4 + $0xb0] sm:$0xff] %v473
  %506 = vst [vmem:[%s4 + $0xb8] sm:$0xff] %v474
  %507 = vst [vmem:[%s4 + $0xc0] sm:$0xff] %v475
  %508 = vst [vmem:[%s4 + $0xc8] sm:$0xff] %v476
  %509 = vst [vmem:[%s4 + $0xd0] sm:$0xff] %v477
  %510 = vst [vmem:[%s4 + $0xd8] sm:$0xff] %v478
  %511 = vst [vmem:[%s4 + $0xe0] sm:$0xff] %v479
  %512 = vst [vmem:[%s4 + $0xe8] sm:$0xff] %v480
  %513 = vst [vmem:[%s4 + $0xf0] sm:$0xff] %v481
  %514 = vst [vmem:[%s4 + $0xf8] sm:$0xff] %v482
  // Predicated region
  $region18: #{my_resnet_forward.17} parent=0 // pred_check
    _
  $region19: #{my_resnet_forward.17} parent=0 // pred_check_branch
    %516 = sbr.rel (0) target = $region21
  $region20: #{my_resnet_forward.17} parent=0 // pred_region
    _
  $region21: #{my_resnet_forward.17} parent=0 // pred_fallthru
    _
  // Predicated region
  $region22: #{my_resnet_forward.17} parent=0 // pred_check
    _
  $region23: #{my_resnet_forward.17} parent=0 // pred_check_branch
    %518 = sbr.rel (0) target = $region25
  $region24: #{my_resnet_forward.17} parent=0 // pred_region
    _
  $region25: #{my_resnet_forward.17} parent=0 // pred_fallthru
    _

// kernel: my_resnet_forward.18
$region0: #{my_resnet_forward.18}
  #allocation0 [shape = 'u32[]', space=smem, size = 0x4, offset = 0x4, fixed_abs, tag = 'smem constant byte address 0x4 - core index']
  #allocation1 [shape = 'u32[144,128]{1,0:T(1,128)}', space=vmem, size = 0x12000, scoped, tag = 'internal scratch']
  %s0 = inlined_call_operand.vmem [shape: bf16[64,80], index: 0, kind: input, shape index: {}]
  %s1 = inlined_call_operand.vmem [shape: bf16[80,128], index: 1, kind: input, shape index: {}]
  %s2 = inlined_call_operand.vmem [shape: f32[1,128], index: 2, kind: input, shape index: {}]
  %s3 = inlined_call_operand.vmem [shape: f32[64,128], index: 3, kind: output, shape index: {}]
  %s4 = sld [smem:[#allocation0]]
  $region22: #{my_resnet_forward.18} parent=0
    _
  %s6 = ssub.s32 1, %s4
  %s7 = scalar_select 0, %s6, %s4
  // Predicated region
  $region2: #{my_resnet_forward.18} parent=0 // pred_check
    _
  $region3: #{my_resnet_forward.18} parent=0 // pred_check_branch
    %9 = sbr.rel (0) target = $region5
  $region4: #{my_resnet_forward.18} parent=0 // pred_region
    _
  $region5: #{my_resnet_forward.18} parent=0 // pred_fallthru
    _
  // Predicated region
  $region6: #{my_resnet_forward.18} parent=0 // pred_check
    _
  $region7: #{my_resnet_forward.18} parent=0 // pred_check_branch
    %11 = sbr.rel (0) target = $region9
  $region8: #{my_resnet_forward.18} parent=0 // pred_region
    _
  $region9: #{my_resnet_forward.18} parent=0 // pred_fallthru
    _
  // Predicated region
  $region10: #{my_resnet_forward.18} parent=0 // pred_check
    _
  $region11: #{my_resnet_forward.18} parent=0 // pred_check_branch
    %13 = sbr.rel (0) target = $region13
  $region12: #{my_resnet_forward.18} parent=0 // pred_region
    _
  $region13: #{my_resnet_forward.18} parent=0 // pred_fallthru
    _
  %v15 = vld [vmem:[%s0] sm:$0xf]
  %v16 = vld [vmem:[%s0 + $0x4] sm:$0xf]
  %v17 = vld [vmem:[%s0 + $0x8] sm:$0xf]
  %v18 = vld [vmem:[%s0 + $0xc] sm:$0xf]
  %v19 = vld [vmem:[%s0 + $0x10] sm:$0xf]
  %v20 = vld [vmem:[%s0 + $0x14] sm:$0xf]
  %v21 = vld [vmem:[%s0 + $0x18] sm:$0xf]
  %v22 = vld [vmem:[%s0 + $0x1c] sm:$0xf]
  %v23 = vld [vmem:[%s1] sm:$0xf]
  %v24 = vld [vmem:[%s1 + $0x4] sm:$0xf]
  %v25 = vld [vmem:[%s1 + $0x8] sm:$0xf]
  %v26 = vld [vmem:[%s1 + $0xc] sm:$0xf]
  %v27 = vld [vmem:[%s1 + $0x10] sm:$0xf]
  %v28 = vld [vmem:[%s1 + $0x14] sm:$0xf]
  %v29 = vld [vmem:[%s1 + $0x18] sm:$0xf]
  %v30 = vld [vmem:[%s1 + $0x1c] sm:$0xf]
  %v31 = vld [vmem:[%s1 + $0x20] sm:$0xf]
  %v32 = vld [vmem:[%s1 + $0x24] sm:$0xf]
  %v33 = vld [vmem:[%s2] sm:$0x1]
  %v35 = vlaneseq
  %v36 = vshrl.u32 %v35, 7
  %v37 = vsub.s32 0, %v36
  %v38 = vrot.slane %v33, %v37
  %v48 = vunpack.c.l.b16 %v15
  %v49 = vunpack.c.l.b16 %v16
  %v50 = vunpack.c.l.b16 %v17
  %v51 = vunpack.c.l.b16 %v18
  %v52 = vunpack.c.l.b16 %v19
  %v53 = vunpack.c.l.b16 %v20
  %v54 = vunpack.c.l.b16 %v21
  %v55 = vunpack.c.l.b16 %v22
  %v56 = vpack.c.b16 %v49, %v48
  %v57 = vpack.c.b16 %v51, %v50
  %v58 = vpack.c.b16 %v53, %v52
  %v59 = vpack.c.b16 %v55, %v54
  %v70 = vunpack.c.l.b16 %v23
  %v71 = vunpack.c.l.b16 %v24
  %v72 = vunpack.c.l.b16 %v25
  %v73 = vunpack.c.l.b16 %v26
  %v74 = vunpack.c.l.b16 %v27
  %v75 = vunpack.c.l.b16 %v28
  %v76 = vunpack.c.l.b16 %v29
  %v77 = vunpack.c.l.b16 %v30
  %v78 = vunpack.c.l.b16 %v31
  %v79 = vunpack.c.l.b16 %v32
  %v80 = vpack.c.b16 %v71, %v70
  %v81 = vpack.c.b16 %v73, %v72
  %v82 = vpack.c.b16 %v75, %v74
  %v83 = vpack.c.b16 %v77, %v76
  %v84 = vpack.c.b16 %v79, %v78
  %vm90 = vcmask 654336
  %v92 = vsel %vm90, %v56, 0
  %v95 = vsel %vm90, %v57, 0
  %v98 = vsel %vm90, %v58, 0
  %v101 = vsel %vm90, %v59, 0
  %103 = vmatprep.subr.bf16.mxu0 0
  %104 = vmatpush1.bf16.msra.mxu0 %v80
  %105 = vmatprep.subr.bf16.mxu0 0
  %106 = vmatpush1.bf16.msra.mxu0 %v81
  %107 = vmatprep.subr.bf16.mxu0 0
  %108 = vmatpush1.bf16.msra.mxu0 %v82
  %109 = vmatprep.subr.bf16.mxu0 0
  %110 = vmatpush1.bf16.msra.mxu0 %v83
  %111 = vmatprep.subr.bf16.mxu0 0
  %112 = vmatpush1.bf16.msra.mxu0 %v84
  %113 = vmatprep.subr.bf16.mxu0 0
  %114 = vmatpush1.bf16.msra.mxu0 0
  %115 = vmatprep.subr.bf16.mxu0 0
  %116 = vmatpush1.bf16.msra.mxu0 0
  %117 = vmatprep.subr.bf16.mxu0 0
  %118 = vmatpush1.bf16.msra.mxu0 0
  %119 = vmatprep.subr.bf16.mxu0 0
  %120 = vmatpush1.bf16.msra.mxu0 0
  %121 = vmatprep.subr.bf16.mxu0 0
  %122 = vmatpush1.bf16.msra.mxu0 0
  %123 = vmatprep.subr.bf16.mxu0 0
  %124 = vmatpush1.bf16.msra.mxu0 0
  %125 = vmatprep.subr.bf16.mxu0 0
  %126 = vmatpush1.bf16.msra.mxu0 0
  %127 = vmatprep.subr.bf16.mxu0 0
  %128 = vmatpush1.bf16.msra.mxu0 0
  %129 = vmatprep.subr.bf16.mxu0 0
  %130 = vmatpush1.bf16.msra.mxu0 0
  %131 = vmatprep.subr.bf16.mxu0 0
  %132 = vmatpush1.bf16.msra.mxu0 0
  %133 = vmatprep.subr.bf16.mxu0 0
  %134 = vmatpush1.bf16.msra.mxu0 0
  %135 = vmatprep.mubr.bf16.mxu0 0
  %136 = vmatmul.mubr.bf16.gmra.mrb[0].mxu0 %v92
  %v137 = vpop.f32.mrb[0].mxu0
  %v138 = vadd.f32 %v38, %v137
  %v139 = vpop.f32.mrb[0].mxu0
  %v140 = vpop.f32.mrb[0].mxu0
  %v141 = vadd.f32 %v38, %v140
  %v142 = vpop.f32.mrb[0].mxu0
  %143 = vmatprep.mubr.bf16.mxu0 0
  %144 = vmatmul.mubr.bf16.gmra.mrb[0].mxu0 %v95
  %v145 = vpop.f32.mrb[0].mxu0
  %v146 = vadd.f32 %v38, %v145
  %v147 = vpop.f32.mrb[0].mxu0
  %v148 = vpop.f32.mrb[0].mxu0
  %v149 = vadd.f32 %v38, %v148
  %v150 = vpop.f32.mrb[0].mxu0
  %151 = vmatprep.mubr.bf16.mxu0 0
  %152 = vmatmul.mubr.bf16.gmra.mrb[0].mxu0 %v98
  %v153 = vpop.f32.mrb[0].mxu0
  %v154 = vadd.f32 %v38, %v153
  %v155 = vpop.f32.mrb[0].mxu0
  %v156 = vpop.f32.mrb[0].mxu0
  %v157 = vadd.f32 %v38, %v156
  %v158 = vpop.f32.mrb[0].mxu0
  %159 = vmatprep.mubr.bf16.mxu0 0
  %160 = vmatmul.mubr.bf16.gmra.mrb[0].mxu0 %v101
  %v161 = vpop.f32.mrb[0].mxu0
  %v162 = vadd.f32 %v38, %v161
  %v163 = vpop.f32.mrb[0].mxu0
  %v164 = vpop.f32.mrb[0].mxu0
  %v165 = vadd.f32 %v38, %v164
  %v166 = vpop.f32.mrb[0].mxu0
  %167 = vdwg.mxu0
  %v168 = vmax.f32 %v138, 0.0
  %v169 = vmax.f32 %v141, 0.0
  %v170 = vmax.f32 %v146, 0.0
  %v171 = vmax.f32 %v149, 0.0
  %v172 = vmax.f32 %v154, 0.0
  %v173 = vmax.f32 %v157, 0.0
  %v174 = vmax.f32 %v162, 0.0
  %v175 = vmax.f32 %v165, 0.0
  %176 = vst [vmem:[%s3] sm:$0xff] %v168
  %177 = vst [vmem:[%s3 + $0x8] sm:$0xff] %v169
  %178 = vst [vmem:[%s3 + $0x10] sm:$0xff] %v170
  %179 = vst [vmem:[%s3 + $0x18] sm:$0xff] %v171
  %180 = vst [vmem:[%s3 + $0x20] sm:$0xff] %v172
  %181 = vst [vmem:[%s3 + $0x28] sm:$0xff] %v173
  %182 = vst [vmem:[%s3 + $0x30] sm:$0xff] %v174
  %183 = vst [vmem:[%s3 + $0x38] sm:$0xff] %v175
  // Predicated region
  $region14: #{my_resnet_forward.18} parent=0 // pred_check
    _
  $region15: #{my_resnet_forward.18} parent=0 // pred_check_branch
    %185 = sbr.rel (0) target = $region17
  $region16: #{my_resnet_forward.18} parent=0 // pred_region
    _
  $region17: #{my_resnet_forward.18} parent=0 // pred_fallthru
    _
  // Predicated region
  $region18: #{my_resnet_forward.18} parent=0 // pred_check
    _
  $region19: #{my_resnet_forward.18} parent=0 // pred_check_branch
    %187 = sbr.rel (0) target = $region21
  $region20: #{my_resnet_forward.18} parent=0 // pred_region
    _
  $region21: #{my_resnet_forward.18} parent=0 // pred_fallthru
    _

// kernel: my_resnet_forward.19
$region0: #{my_resnet_forward.19}
  #allocation0 [shape = 'u32[]', space=smem, size = 0x4, offset = 0x4, fixed_abs, tag = 'smem constant byte address 0x4 - core index']
  #allocation1 [shape = 'u32[144,128]{1,0:T(1,128)}', space=vmem, size = 0x12000, scoped, tag = 'internal scratch']
  %s0 = inlined_call_operand.vmem [shape: bf16[64,16], index: 0, kind: input, shape index: {}]
  %s1 = inlined_call_operand.vmem [shape: bf16[16,128], index: 1, kind: input, shape index: {}]
  %s2 = inlined_call_operand.vmem [shape: f32[1,128], index: 2, kind: input, shape index: {}]
  %s3 = inlined_call_operand.vmem [shape: f32[64,128], index: 3, kind: output, shape index: {}]
  %s4 = sld [smem:[#allocation0]]
  $region22: #{my_resnet_forward.19} parent=0
    _
  %s6 = ssub.s32 1, %s4
  %s7 = scalar_select 0, %s6, %s4
  // Predicated region
  $region2: #{my_resnet_forward.19} parent=0 // pred_check
    _
  $region3: #{my_resnet_forward.19} parent=0 // pred_check_branch
    %9 = sbr.rel (0) target = $region5
  $region4: #{my_resnet_forward.19} parent=0 // pred_region
    _
  $region5: #{my_resnet_forward.19} parent=0 // pred_fallthru
    _
  // Predicated region
  $region6: #{my_resnet_forward.19} parent=0 // pred_check
    _
  $region7: #{my_resnet_forward.19} parent=0 // pred_check_branch
    %11 = sbr.rel (0) target = $region9
  $region8: #{my_resnet_forward.19} parent=0 // pred_region
    _
  $region9: #{my_resnet_forward.19} parent=0 // pred_fallthru
    _
  // Predicated region
  $region10: #{my_resnet_forward.19} parent=0 // pred_check
    _
  $region11: #{my_resnet_forward.19} parent=0 // pred_check_branch
    %13 = sbr.rel (0) target = $region13
  $region12: #{my_resnet_forward.19} parent=0 // pred_region
    _
  $region13: #{my_resnet_forward.19} parent=0 // pred_fallthru
    _
  %v15 = vld [vmem:[%s0] sm:$0xf]
  %v16 = vld [vmem:[%s0 + $0x4] sm:$0xf]
  %v17 = vld [vmem:[%s0 + $0x8] sm:$0xf]
  %v18 = vld [vmem:[%s0 + $0xc] sm:$0xf]
  %v19 = vld [vmem:[%s0 + $0x10] sm:$0xf]
  %v20 = vld [vmem:[%s0 + $0x14] sm:$0xf]
  %v21 = vld [vmem:[%s0 + $0x18] sm:$0xf]
  %v22 = vld [vmem:[%s0 + $0x1c] sm:$0xf]
  %v23 = vld [vmem:[%s1] sm:$0xf]
  %v24 = vld [vmem:[%s1 + $0x4] sm:$0xf]
  %v25 = vld [vmem:[%s2] sm:$0x1]
  %v27 = vlaneseq
  %v28 = vshrl.u32 %v27, 7
  %v29 = vsub.s32 0, %v28
  %v30 = vrot.slane %v25, %v29
  %v40 = vunpack.c.l.b16 %v15
  %v41 = vunpack.c.l.b16 %v16
  %v42 = vunpack.c.l.b16 %v17
  %v43 = vunpack.c.l.b16 %v18
  %v44 = vunpack.c.l.b16 %v19
  %v45 = vunpack.c.l.b16 %v20
  %v46 = vunpack.c.l.b16 %v21
  %v47 = vunpack.c.l.b16 %v22
  %v48 = vpack.c.b16 %v41, %v40
  %v49 = vpack.c.b16 %v43, %v42
  %v50 = vpack.c.b16 %v45, %v44
  %v51 = vpack.c.b16 %v47, %v46
  %v54 = vunpack.c.l.b16 %v23
  %v55 = vunpack.c.l.b16 %v24
  %v56 = vpack.c.b16 %v55, %v54
  %vm58 = vcmask 130048
  %v60 = vsel %vm58, %v48, 0
  %v63 = vsel %vm58, %v49, 0
  %v66 = vsel %vm58, %v50, 0
  %v69 = vsel %vm58, %v51, 0
  %71 = vmatprep.subr.bf16.mxu0 0
  %72 = vmatpush1.bf16.msra.mxu0 %v56
  %73 = vmatprep.subr.bf16.mxu0 0
  %74 = vmatpush1.bf16.msra.mxu0 0
  %75 = vmatprep.subr.bf16.mxu0 0
  %76 = vmatpush1.bf16.msra.mxu0 0
  %77 = vmatprep.subr.bf16.mxu0 0
  %78 = vmatpush1.bf16.msra.mxu0 0
  %79 = vmatprep.subr.bf16.mxu0 0
  %80 = vmatpush1.bf16.msra.mxu0 0
  %81 = vmatprep.subr.bf16.mxu0 0
  %82 = vmatpush1.bf16.msra.mxu0 0
  %83 = vmatprep.subr.bf16.mxu0 0
  %84 = vmatpush1.bf16.msra.mxu0 0
  %85 = vmatprep.subr.bf16.mxu0 0
  %86 = vmatpush1.bf16.msra.mxu0 0
  %87 = vmatprep.subr.bf16.mxu0 0
  %88 = vmatpush1.bf16.msra.mxu0 0
  %89 = vmatprep.subr.bf16.mxu0 0
  %90 = vmatpush1.bf16.msra.mxu0 0
  %91 = vmatprep.subr.bf16.mxu0 0
  %92 = vmatpush1.bf16.msra.mxu0 0
  %93 = vmatprep.subr.bf16.mxu0 0
  %94 = vmatpush1.bf16.msra.mxu0 0
  %95 = vmatprep.subr.bf16.mxu0 0
  %96 = vmatpush1.bf16.msra.mxu0 0
  %97 = vmatprep.subr.bf16.mxu0 0
  %98 = vmatpush1.bf16.msra.mxu0 0
  %99 = vmatprep.subr.bf16.mxu0 0
  %100 = vmatpush1.bf16.msra.mxu0 0
  %101 = vmatprep.subr.bf16.mxu0 0
  %102 = vmatpush1.bf16.msra.mxu0 0
  %103 = vmatprep.mubr.bf16.mxu0 0
  %104 = vmatmul.mubr.bf16.gmra.mrb[0].mxu0 %v60
  %v105 = vpop.f32.mrb[0].mxu0
  %v106 = vadd.f32 %v30, %v105
  %v107 = vpop.f32.mrb[0].mxu0
  %v108 = vpop.f32.mrb[0].mxu0
  %v109 = vadd.f32 %v30, %v108
  %v110 = vpop.f32.mrb[0].mxu0
  %111 = vmatprep.mubr.bf16.mxu0 0
  %112 = vmatmul.mubr.bf16.gmra.mrb[0].mxu0 %v63
  %v113 = vpop.f32.mrb[0].mxu0
  %v114 = vadd.f32 %v30, %v113
  %v115 = vpop.f32.mrb[0].mxu0
  %v116 = vpop.f32.mrb[0].mxu0
  %v117 = vadd.f32 %v30, %v116
  %v118 = vpop.f32.mrb[0].mxu0
  %119 = vmatprep.mubr.bf16.mxu0 0
  %120 = vmatmul.mubr.bf16.gmra.mrb[0].mxu0 %v66
  %v121 = vpop.f32.mrb[0].mxu0
  %v122 = vadd.f32 %v30, %v121
  %v123 = vpop.f32.mrb[0].mxu0
  %v124 = vpop.f32.mrb[0].mxu0
  %v125 = vadd.f32 %v30, %v124
  %v126 = vpop.f32.mrb[0].mxu0
  %127 = vmatprep.mubr.bf16.mxu0 0
  %128 = vmatmul.mubr.bf16.gmra.mrb[0].mxu0 %v69
  %v129 = vpop.f32.mrb[0].mxu0
  %v130 = vadd.f32 %v30, %v129
  %v131 = vpop.f32.mrb[0].mxu0
  %v132 = vpop.f32.mrb[0].mxu0
  %v133 = vadd.f32 %v30, %v132
  %v134 = vpop.f32.mrb[0].mxu0
  %135 = vdwg.mxu0
  %136 = vst [vmem:[%s3] sm:$0xff] %v106
  %137 = vst [vmem:[%s3 + $0x8] sm:$0xff] %v109
  %138 = vst [vmem:[%s3 + $0x10] sm:$0xff] %v114
  %139 = vst [vmem:[%s3 + $0x18] sm:$0xff] %v117
  %140 = vst [vmem:[%s3 + $0x20] sm:$0xff] %v122
  %141 = vst [vmem:[%s3 + $0x28] sm:$0xff] %v125
  %142 = vst [vmem:[%s3 + $0x30] sm:$0xff] %v130
  %143 = vst [vmem:[%s3 + $0x38] sm:$0xff] %v133
  // Predicated region
  $region14: #{my_resnet_forward.19} parent=0 // pred_check
    _
  $region15: #{my_resnet_forward.19} parent=0 // pred_check_branch
    %145 = sbr.rel (0) target = $region17
  $region16: #{my_resnet_forward.19} parent=0 // pred_region
    _
  $region17: #{my_resnet_forward.19} parent=0 // pred_fallthru
    _
  // Predicated region
  $region18: #{my_resnet_forward.19} parent=0 // pred_check
    _
  $region19: #{my_resnet_forward.19} parent=0 // pred_check_branch
    %147 = sbr.rel (0) target = $region21
  $region20: #{my_resnet_forward.19} parent=0 // pred_region
    _
  $region21: #{my_resnet_forward.19} parent=0 // pred_fallthru
    _

// kernel: my_resnet_forward.20
$region0: #{my_resnet_forward.20}
  #allocation0 [shape = 'u32[]', space=smem, size = 0x4, offset = 0x4, fixed_abs, tag = 'smem constant byte address 0x4 - core index']
  #allocation1 [shape = 'u32[144,128]{1,0:T(1,128)}', space=vmem, size = 0x12000, scoped, tag = 'internal scratch']
  %s0 = inlined_call_operand.vmem [shape: bf16[64,144], index: 0, kind: input, shape index: {}]
  %s1 = inlined_call_operand.vmem [shape: bf16[144,128], index: 1, kind: input, shape index: {}]
  %s2 = inlined_call_operand.vmem [shape: f32[1,128], index: 2, kind: input, shape index: {}]
  %s3 = inlined_call_operand.vmem [shape: f32[64,128], index: 3, kind: input, shape index: {}]
  %s4 = inlined_call_operand.vmem [shape: f32[64,128], index: 4, kind: output, shape index: {}]
  %s5 = sld [smem:[#allocation0]]
  $region26: #{my_resnet_forward.20} parent=0
    _
  %s7 = ssub.s32 1, %s5
  %s8 = scalar_select 0, %s7, %s5
  // Predicated region
  $region2: #{my_resnet_forward.20} parent=0 // pred_check
    _
  $region3: #{my_resnet_forward.20} parent=0 // pred_check_branch
    %10 = sbr.rel (0) target = $region5
  $region4: #{my_resnet_forward.20} parent=0 // pred_region
    _
  $region5: #{my_resnet_forward.20} parent=0 // pred_fallthru
    _
  // Predicated region
  $region6: #{my_resnet_forward.20} parent=0 // pred_check
    _
  $region7: #{my_resnet_forward.20} parent=0 // pred_check_branch
    %12 = sbr.rel (0) target = $region9
  $region8: #{my_resnet_forward.20} parent=0 // pred_region
    _
  $region9: #{my_resnet_forward.20} parent=0 // pred_fallthru
    _
  // Predicated region
  $region10: #{my_resnet_forward.20} parent=0 // pred_check
    _
  $region11: #{my_resnet_forward.20} parent=0 // pred_check_branch
    %14 = sbr.rel (0) target = $region13
  $region12: #{my_resnet_forward.20} parent=0 // pred_region
    _
  $region13: #{my_resnet_forward.20} parent=0 // pred_fallthru
    _
  // Predicated region
  $region14: #{my_resnet_forward.20} parent=0 // pred_check
    _
  $region15: #{my_resnet_forward.20} parent=0 // pred_check_branch
    %16 = sbr.rel (0) target = $region17
  $region16: #{my_resnet_forward.20} parent=0 // pred_region
    _
  $region17: #{my_resnet_forward.20} parent=0 // pred_fallthru
    _
  %v18 = vld [vmem:[%s0] sm:$0xff]
  %v19 = vld [vmem:[%s0 + $0x8] sm:$0xff]
  %v20 = vld [vmem:[%s0 + $0x10] sm:$0xff]
  %v21 = vld [vmem:[%s0 + $0x18] sm:$0xff]
  %v22 = vld [vmem:[%s0 + $0x20] sm:$0xff]
  %v23 = vld [vmem:[%s0 + $0x28] sm:$0xff]
  %v24 = vld [vmem:[%s0 + $0x30] sm:$0xff]
  %v25 = vld [vmem:[%s0 + $0x38] sm:$0xff]
  %v26 = vld [vmem:[%s1] sm:$0xf]
  %v27 = vld [vmem:[%s1 + $0x4] sm:$0xf]
  %v28 = vld [vmem:[%s1 + $0x8] sm:$0xf]
  %v29 = vld [vmem:[%s1 + $0xc] sm:$0xf]
  %v30 = vld [vmem:[%s1 + $0x10] sm:$0xf]
  %v31 = vld [vmem:[%s1 + $0x14] sm:$0xf]
  %v32 = vld [vmem:[%s1 + $0x18] sm:$0xf]
  %v33 = vld [vmem:[%s1 + $0x1c] sm:$0xf]
  %v34 = vld [vmem:[%s1 + $0x20] sm:$0xf]
  %v35 = vld [vmem:[%s1 + $0x24] sm:$0xf]
  %v36 = vld [vmem:[%s1 + $0x28] sm:$0xf]
  %v37 = vld [vmem:[%s1 + $0x2c] sm:$0xf]
  %v38 = vld [vmem:[%s1 + $0x30] sm:$0xf]
  %v39 = vld [vmem:[%s1 + $0x34] sm:$0xf]
  %v40 = vld [vmem:[%s1 + $0x38] sm:$0xf]
  %v41 = vld [vmem:[%s1 + $0x3c] sm:$0xf]
  %v42 = vld [vmem:[%s1 + $0x40] sm:$0xf]
  %v43 = vld [vmem:[%s1 + $0x44] sm:$0xf]
  %v44 = vld [vmem:[%s2] sm:$0x1]
  %v46 = vlaneseq
  %v47 = vshrl.u32 %v46, 7
  %v48 = vsub.s32 0, %v47
  %v49 = vrot.slane %v44, %v48
  %v59 = vunpack.c.l.b16 %v18
  %v60 = vunpack.c.h.b16 %v18
  %v61 = vunpack.c.l.b16 %v19
  %v62 = vunpack.c.h.b16 %v19
  %v63 = vunpack.c.l.b16 %v20
  %v64 = vunpack.c.h.b16 %v20
  %v65 = vunpack.c.l.b16 %v21
  %v66 = vunpack.c.h.b16 %v21
  %v67 = vunpack.c.l.b16 %v22
  %v68 = vunpack.c.h.b16 %v22
  %v69 = vunpack.c.l.b16 %v23
  %v70 = vunpack.c.h.b16 %v23
  %v71 = vunpack.c.l.b16 %v24
  %v72 = vunpack.c.h.b16 %v24
  %v73 = vunpack.c.l.b16 %v25
  %v74 = vunpack.c.h.b16 %v25
  %v75 = vpack.c.b16 %v61, %v59
  %v76 = vpack.c.b16 %v62, %v60
  %v77 = vpack.c.b16 %v65, %v63
  %v78 = vpack.c.b16 %v66, %v64
  %v79 = vpack.c.b16 %v69, %v67
  %v80 = vpack.c.b16 %v70, %v68
  %v81 = vpack.c.b16 %v73, %v71
  %v82 = vpack.c.b16 %v74, %v72
  %v105 = vunpack.c.l.b16 %v26
  %v106 = vunpack.c.l.b16 %v27
  %v107 = vunpack.c.l.b16 %v28
  %v108 = vunpack.c.l.b16 %v29
  %v109 = vunpack.c.l.b16 %v30
  %v110 = vunpack.c.l.b16 %v31
  %v111 = vunpack.c.l.b16 %v32
  %v112 = vunpack.c.l.b16 %v33
  %v113 = vunpack.c.l.b16 %v34
  %v114 = vunpack.c.l.b16 %v35
  %v115 = vunpack.c.l.b16 %v36
  %v116 = vunpack.c.l.b16 %v37
  %v117 = vunpack.c.l.b16 %v38
  %v118 = vunpack.c.l.b16 %v39
  %v119 = vunpack.c.l.b16 %v40
  %v120 = vunpack.c.l.b16 %v41
  %v121 = vunpack.c.l.b16 %v42
  %v122 = vunpack.c.l.b16 %v43
  %v123 = vpack.c.b16 %v106, %v105
  %v124 = vpack.c.b16 %v108, %v107
  %v125 = vpack.c.b16 %v110, %v109
  %v126 = vpack.c.b16 %v112, %v111
  %v127 = vpack.c.b16 %v114, %v113
  %v128 = vpack.c.b16 %v116, %v115
  %v129 = vpack.c.b16 %v118, %v117
  %v130 = vpack.c.b16 %v120, %v119
  %v131 = vpack.c.b16 %v122, %v121
  %vm141 = vcmask 130048
  %v143 = vsel %vm141, %v76, 0
  %v146 = vsel %vm141, %v78, 0
  %v149 = vsel %vm141, %v80, 0
  %v152 = vsel %vm141, %v82, 0
  %154 = vmatprep.subr.bf16.mxu0 0
  %155 = vmatpush1.bf16.msra.mxu0 %v123
  %156 = vmatprep.subr.bf16.mxu0 0
  %157 = vmatpush1.bf16.msra.mxu0 %v124
  %158 = vmatprep.subr.bf16.mxu0 0
  %159 = vmatpush1.bf16.msra.mxu0 %v125
  %160 = vmatprep.subr.bf16.mxu0 0
  %161 = vmatpush1.bf16.msra.mxu0 %v126
  %162 = vmatprep.subr.bf16.mxu0 0
  %163 = vmatpush1.bf16.msra.mxu0 %v127
  %164 = vmatprep.subr.bf16.mxu0 0
  %165 = vmatpush1.bf16.msra.mxu0 %v128
  %166 = vmatprep.subr.bf16.mxu0 0
  %167 = vmatpush1.bf16.msra.mxu0 %v129
  %168 = vmatprep.subr.bf16.mxu0 0
  %169 = vmatpush1.bf16.msra.mxu0 %v130
  %170 = vmatprep.subr.bf16.mxu0 0
  %171 = vmatpush1.bf16.msra.mxu0 %v131
  %172 = vmatprep.subr.bf16.mxu0 0
  %173 = vmatpush1.bf16.msra.mxu0 0
  %174 = vmatprep.subr.bf16.mxu0 0
  %175 = vmatpush1.bf16.msra.mxu0 0
  %176 = vmatprep.subr.bf16.mxu0 0
  %177 = vmatpush1.bf16.msra.mxu0 0
  %178 = vmatprep.subr.bf16.mxu0 0
  %179 = vmatpush1.bf16.msra.mxu0 0
  %180 = vmatprep.subr.bf16.mxu0 0
  %181 = vmatpush1.bf16.msra.mxu0 0
  %182 = vmatprep.subr.bf16.mxu0 0
  %183 = vmatpush1.bf16.msra.mxu0 0
  %184 = vmatprep.subr.bf16.mxu0 0
  %185 = vmatpush1.bf16.msra.mxu0 0
  %186 = vmatprep.mubr.bf16.mxu0 %v143
  %187 = vmatmul.mubr.bf16.gmra.mrb[0].mxu0 %v75
  %v188 = vpop.f32.mrb[0].mxu0
  %v189 = vadd.f32 %v49, %v188
  %v190 = vpop.f32.mrb[0].mxu0
  %v191 = vpop.f32.mrb[0].mxu0
  %v192 = vadd.f32 %v49, %v191
  %v193 = vpop.f32.mrb[0].mxu0
  %194 = vmatprep.mubr.bf16.mxu0 %v146
  %195 = vmatmul.mubr.bf16.gmra.mrb[0].mxu0 %v77
  %v196 = vpop.f32.mrb[0].mxu0
  %v197 = vadd.f32 %v49, %v196
  %v198 = vpop.f32.mrb[0].mxu0
  %v199 = vpop.f32.mrb[0].mxu0
  %v200 = vadd.f32 %v49, %v199
  %v201 = vpop.f32.mrb[0].mxu0
  %202 = vmatprep.mubr.bf16.mxu0 %v149
  %203 = vmatmul.mubr.bf16.gmra.mrb[0].mxu0 %v79
  %v204 = vpop.f32.mrb[0].mxu0
  %v205 = vadd.f32 %v49, %v204
  %v206 = vpop.f32.mrb[0].mxu0
  %v207 = vpop.f32.mrb[0].mxu0
  %v208 = vadd.f32 %v49, %v207
  %v209 = vpop.f32.mrb[0].mxu0
  %210 = vmatprep.mubr.bf16.mxu0 %v152
  %211 = vmatmul.mubr.bf16.gmra.mrb[0].mxu0 %v81
  %v212 = vpop.f32.mrb[0].mxu0
  %v213 = vadd.f32 %v49, %v212
  %v214 = vpop.f32.mrb[0].mxu0
  %v215 = vpop.f32.mrb[0].mxu0
  %v216 = vadd.f32 %v49, %v215
  %v217 = vpop.f32.mrb[0].mxu0
  %218 = vdwg.mxu0
  %v219 = vld [vmem:[%s3] sm:$0xff]
  %v220 = vld [vmem:[%s3 + $0x8] sm:$0xff]
  %v221 = vld [vmem:[%s3 + $0x10] sm:$0xff]
  %v222 = vld [vmem:[%s3 + $0x18] sm:$0xff]
  %v223 = vld [vmem:[%s3 + $0x20] sm:$0xff]
  %v224 = vld [vmem:[%s3 + $0x28] sm:$0xff]
  %v225 = vld [vmem:[%s3 + $0x30] sm:$0xff]
  %v226 = vld [vmem:[%s3 + $0x38] sm:$0xff]
  %v227 = vadd.f32 %v189, %v219
  %v228 = vadd.f32 %v192, %v220
  %v229 = vadd.f32 %v197, %v221
  %v230 = vadd.f32 %v200, %v222
  %v231 = vadd.f32 %v205, %v223
  %v232 = vadd.f32 %v208, %v224
  %v233 = vadd.f32 %v213, %v225
  %v234 = vadd.f32 %v216, %v226
  %v235 = vmax.f32 %v227, 0.0
  %v236 = vmax.f32 %v228, 0.0
  %v237 = vmax.f32 %v229, 0.0
  %v238 = vmax.f32 %v230, 0.0
  %v239 = vmax.f32 %v231, 0.0
  %v240 = vmax.f32 %v232, 0.0
  %v241 = vmax.f32 %v233, 0.0
  %v242 = vmax.f32 %v234, 0.0
  %243 = vst [vmem:[%s4] sm:$0xff] %v235
  %244 = vst [vmem:[%s4 + $0x8] sm:$0xff] %v236
  %245 = vst [vmem:[%s4 + $0x10] sm:$0xff] %v237
  %246 = vst [vmem:[%s4 + $0x18] sm:$0xff] %v238
  %247 = vst [vmem:[%s4 + $0x20] sm:$0xff] %v239
  %248 = vst [vmem:[%s4 + $0x28] sm:$0xff] %v240
  %249 = vst [vmem:[%s4 + $0x30] sm:$0xff] %v241
  %250 = vst [vmem:[%s4 + $0x38] sm:$0xff] %v242
  // Predicated region
  $region18: #{my_resnet_forward.20} parent=0 // pred_check
    _
  $region19: #{my_resnet_forward.20} parent=0 // pred_check_branch
    %252 = sbr.rel (0) target = $region21
  $region20: #{my_resnet_forward.20} parent=0 // pred_region
    _
  $region21: #{my_resnet_forward.20} parent=0 // pred_fallthru
    _
  // Predicated region
  $region22: #{my_resnet_forward.20} parent=0 // pred_check
    _
  $region23: #{my_resnet_forward.20} parent=0 // pred_check_branch
    %254 = sbr.rel (0) target = $region25
  $region24: #{my_resnet_forward.20} parent=0 // pred_region
    _
  $region25: #{my_resnet_forward.20} parent=0 // pred_fallthru
    _

// kernel: my_resnet_forward.21
$region0: #{my_resnet_forward.21}
  #allocation0 [shape = 'u32[]', space=smem, size = 0x4, offset = 0x4, fixed_abs, tag = 'smem constant byte address 0x4 - core index']
  #allocation1 [shape = 'u32[144,128]{1,0:T(1,128)}', space=vmem, size = 0x12000, scoped, tag = 'internal scratch']
  %s0 = inlined_call_operand.vmem [shape: bf16[16,144], index: 0, kind: input, shape index: {}]
  %s1 = inlined_call_operand.vmem [shape: bf16[144,128], index: 1, kind: input, shape index: {}]
  %s2 = inlined_call_operand.vmem [shape: f32[1,128], index: 2, kind: input, shape index: {}]
  %s3 = inlined_call_operand.vmem [shape: f32[16,128], index: 3, kind: output, shape index: {}]
  %s4 = sld [smem:[#allocation0]]
  $region22: #{my_resnet_forward.21} parent=0
    _
  %s6 = ssub.s32 1, %s4
  %s7 = scalar_select 0, %s6, %s4
  // Predicated region
  $region2: #{my_resnet_forward.21} parent=0 // pred_check
    _
  $region3: #{my_resnet_forward.21} parent=0 // pred_check_branch
    %9 = sbr.rel (0) target = $region5
  $region4: #{my_resnet_forward.21} parent=0 // pred_region
    _
  $region5: #{my_resnet_forward.21} parent=0 // pred_fallthru
    _
  // Predicated region
  $region6: #{my_resnet_forward.21} parent=0 // pred_check
    _
  $region7: #{my_resnet_forward.21} parent=0 // pred_check_branch
    %11 = sbr.rel (0) target = $region9
  $region8: #{my_resnet_forward.21} parent=0 // pred_region
    _
  $region9: #{my_resnet_forward.21} parent=0 // pred_fallthru
    _
  // Predicated region
  $region10: #{my_resnet_forward.21} parent=0 // pred_check
    _
  $region11: #{my_resnet_forward.21} parent=0 // pred_check_branch
    %13 = sbr.rel (0) target = $region13
  $region12: #{my_resnet_forward.21} parent=0 // pred_region
    _
  $region13: #{my_resnet_forward.21} parent=0 // pred_fallthru
    _
  %v15 = vld [vmem:[%s0] sm:$0xff]
  %v16 = vld [vmem:[%s0 + $0x8] sm:$0xff]
  %v17 = vld [vmem:[%s1] sm:$0xf]
  %v18 = vld [vmem:[%s1 + $0x4] sm:$0xf]
  %v19 = vld [vmem:[%s1 + $0x8] sm:$0xf]
  %v20 = vld [vmem:[%s1 + $0xc] sm:$0xf]
  %v21 = vld [vmem:[%s1 + $0x10] sm:$0xf]
  %v22 = vld [vmem:[%s1 + $0x14] sm:$0xf]
  %v23 = vld [vmem:[%s1 + $0x18] sm:$0xf]
  %v24 = vld [vmem:[%s1 + $0x1c] sm:$0xf]
  %v25 = vld [vmem:[%s1 + $0x20] sm:$0xf]
  %v26 = vld [vmem:[%s1 + $0x24] sm:$0xf]
  %v27 = vld [vmem:[%s1 + $0x28] sm:$0xf]
  %v28 = vld [vmem:[%s1 + $0x2c] sm:$0xf]
  %v29 = vld [vmem:[%s1 + $0x30] sm:$0xf]
  %v30 = vld [vmem:[%s1 + $0x34] sm:$0xf]
  %v31 = vld [vmem:[%s1 + $0x38] sm:$0xf]
  %v32 = vld [vmem:[%s1 + $0x3c] sm:$0xf]
  %v33 = vld [vmem:[%s1 + $0x40] sm:$0xf]
  %v34 = vld [vmem:[%s1 + $0x44] sm:$0xf]
  %v35 = vld [vmem:[%s2] sm:$0x1]
  %v37 = vlaneseq
  %v38 = vshrl.u32 %v37, 7
  %v39 = vsub.s32 0, %v38
  %v40 = vrot.slane %v35, %v39
  %v44 = vunpack.c.l.b16 %v15
  %v45 = vunpack.c.h.b16 %v15
  %v46 = vunpack.c.l.b16 %v16
  %v47 = vunpack.c.h.b16 %v16
  %v48 = vpack.c.b16 %v46, %v44
  %v49 = vpack.c.b16 %v47, %v45
  %v69 = vunpack.c.l.b16 %v17
  %v70 = vunpack.c.l.b16 %v18
  %v71 = vunpack.c.l.b16 %v19
  %v72 = vunpack.c.l.b16 %v20
  %v73 = vunpack.c.l.b16 %v21
  %v74 = vunpack.c.l.b16 %v22
  %v75 = vunpack.c.l.b16 %v23
  %v76 = vunpack.c.l.b16 %v24
  %v77 = vunpack.c.l.b16 %v25
  %v78 = vunpack.c.l.b16 %v26
  %v79 = vunpack.c.l.b16 %v27
  %v80 = vunpack.c.l.b16 %v28
  %v81 = vunpack.c.l.b16 %v29
  %v82 = vunpack.c.l.b16 %v30
  %v83 = vunpack.c.l.b16 %v31
  %v84 = vunpack.c.l.b16 %v32
  %v85 = vunpack.c.l.b16 %v33
  %v86 = vunpack.c.l.b16 %v34
  %v87 = vpack.c.b16 %v70, %v69
  %v88 = vpack.c.b16 %v72, %v71
  %v89 = vpack.c.b16 %v74, %v73
  %v90 = vpack.c.b16 %v76, %v75
  %v91 = vpack.c.b16 %v78, %v77
  %v92 = vpack.c.b16 %v80, %v79
  %v93 = vpack.c.b16 %v82, %v81
  %v94 = vpack.c.b16 %v84, %v83
  %v95 = vpack.c.b16 %v86, %v85
  %vm105 = vcmask 130048
  %v107 = vsel %vm105, %v49, 0
  %109 = vmatprep.subr.bf16.mxu0 0
  %110 = vmatpush1.bf16.msra.mxu0 %v87
  %111 = vmatprep.subr.bf16.mxu0 0
  %112 = vmatpush1.bf16.msra.mxu0 %v88
  %113 = vmatprep.subr.bf16.mxu0 0
  %114 = vmatpush1.bf16.msra.mxu0 %v89
  %115 = vmatprep.subr.bf16.mxu0 0
  %116 = vmatpush1.bf16.msra.mxu0 %v90
  %117 = vmatprep.subr.bf16.mxu0 0
  %118 = vmatpush1.bf16.msra.mxu0 %v91
  %119 = vmatprep.subr.bf16.mxu0 0
  %120 = vmatpush1.bf16.msra.mxu0 %v92
  %121 = vmatprep.subr.bf16.mxu0 0
  %122 = vmatpush1.bf16.msra.mxu0 %v93
  %123 = vmatprep.subr.bf16.mxu0 0
  %124 = vmatpush1.bf16.msra.mxu0 %v94
  %125 = vmatprep.subr.bf16.mxu0 0
  %126 = vmatpush1.bf16.msra.mxu0 %v95
  %127 = vmatprep.subr.bf16.mxu0 0
  %128 = vmatpush1.bf16.msra.mxu0 0
  %129 = vmatprep.subr.bf16.mxu0 0
  %130 = vmatpush1.bf16.msra.mxu0 0
  %131 = vmatprep.subr.bf16.mxu0 0
  %132 = vmatpush1.bf16.msra.mxu0 0
  %133 = vmatprep.subr.bf16.mxu0 0
  %134 = vmatpush1.bf16.msra.mxu0 0
  %135 = vmatprep.subr.bf16.mxu0 0
  %136 = vmatpush1.bf16.msra.mxu0 0
  %137 = vmatprep.subr.bf16.mxu0 0
  %138 = vmatpush1.bf16.msra.mxu0 0
  %139 = vmatprep.subr.bf16.mxu0 0
  %140 = vmatpush1.bf16.msra.mxu0 0
  %141 = vmatprep.mubr.bf16.mxu0 %v107
  %142 = vmatmul.mubr.bf16.gmra.mrb[0].mxu0 %v48
  %v143 = vpop.f32.mrb[0].mxu0
  %v144 = vadd.f32 %v40, %v143
  %v145 = vpop.f32.mrb[0].mxu0
  %v146 = vpop.f32.mrb[0].mxu0
  %v147 = vadd.f32 %v40, %v146
  %v148 = vpop.f32.mrb[0].mxu0
  %149 = vdwg.mxu0
  %v150 = vmax.f32 %v144, 0.0
  %v151 = vmax.f32 %v147, 0.0
  %152 = vst [vmem:[%s3] sm:$0xff] %v150
  %153 = vst [vmem:[%s3 + $0x8] sm:$0xff] %v151
  // Predicated region
  $region14: #{my_resnet_forward.21} parent=0 // pred_check
    _
  $region15: #{my_resnet_forward.21} parent=0 // pred_check_branch
    %155 = sbr.rel (0) target = $region17
  $region16: #{my_resnet_forward.21} parent=0 // pred_region
    _
  $region17: #{my_resnet_forward.21} parent=0 // pred_fallthru
    _
  // Predicated region
  $region18: #{my_resnet_forward.21} parent=0 // pred_check
    _
  $region19: #{my_resnet_forward.21} parent=0 // pred_check_branch
    %157 = sbr.rel (0) target = $region21
  $region20: #{my_resnet_forward.21} parent=0 // pred_region
    _
  $region21: #{my_resnet_forward.21} parent=0 // pred_fallthru
    _

// kernel: my_resnet_forward.22
$region0: #{my_resnet_forward.22}
  #allocation0 [shape = 'u32[]', space=smem, size = 0x4, offset = 0x4, fixed_abs, tag = 'smem constant byte address 0x4 - core index']
  #allocation1 [shape = 'u32[144,128]{1,0:T(1,128)}', space=vmem, size = 0x12000, scoped, tag = 'internal scratch']
  %s0 = inlined_call_operand.vmem [shape: bf16[16,16], index: 0, kind: input, shape index: {}]
  %s1 = inlined_call_operand.vmem [shape: bf16[16,128], index: 1, kind: input, shape index: {}]
  %s2 = inlined_call_operand.vmem [shape: f32[1,128], index: 2, kind: input, shape index: {}]
  %s3 = inlined_call_operand.vmem [shape: f32[16,128], index: 3, kind: output, shape index: {}]
  %s4 = sld [smem:[#allocation0]]
  $region22: #{my_resnet_forward.22} parent=0
    _
  %s6 = ssub.s32 1, %s4
  %s7 = scalar_select 0, %s6, %s4
  // Predicated region
  $region2: #{my_resnet_forward.22} parent=0 // pred_check
    _
  $region3: #{my_resnet_forward.22} parent=0 // pred_check_branch
    %9 = sbr.rel (0) target = $region5
  $region4: #{my_resnet_forward.22} parent=0 // pred_region
    _
  $region5: #{my_resnet_forward.22} parent=0 // pred_fallthru
    _
  // Predicated region
  $region6: #{my_resnet_forward.22} parent=0 // pred_check
    _
  $region7: #{my_resnet_forward.22} parent=0 // pred_check_branch
    %11 = sbr.rel (0) target = $region9
  $region8: #{my_resnet_forward.22} parent=0 // pred_region
    _
  $region9: #{my_resnet_forward.22} parent=0 // pred_fallthru
    _
  // Predicated region
  $region10: #{my_resnet_forward.22} parent=0 // pred_check
    _
  $region11: #{my_resnet_forward.22} parent=0 // pred_check_branch
    %13 = sbr.rel (0) target = $region13
  $region12: #{my_resnet_forward.22} parent=0 // pred_region
    _
  $region13: #{my_resnet_forward.22} parent=0 // pred_fallthru
    _
  %v15 = vld [vmem:[%s0] sm:$0xf]
  %v16 = vld [vmem:[%s0 + $0x4] sm:$0xf]
  %v17 = vld [vmem:[%s1] sm:$0xf]
  %v18 = vld [vmem:[%s1 + $0x4] sm:$0xf]
  %v19 = vld [vmem:[%s2] sm:$0x1]
  %v21 = vlaneseq
  %v22 = vshrl.u32 %v21, 7
  %v23 = vsub.s32 0, %v22
  %v24 = vrot.slane %v19, %v23
  %v28 = vunpack.c.l.b16 %v15
  %v29 = vunpack.c.l.b16 %v16
  %v30 = vpack.c.b16 %v29, %v28
  %v33 = vunpack.c.l.b16 %v17
  %v34 = vunpack.c.l.b16 %v18
  %v35 = vpack.c.b16 %v34, %v33
  %vm37 = vcmask 130048
  %v39 = vsel %vm37, %v30, 0
  %41 = vmatprep.subr.bf16.mxu0 0
  %42 = vmatpush1.bf16.msra.mxu0 %v35
  %43 = vmatprep.subr.bf16.mxu0 0
  %44 = vmatpush1.bf16.msra.mxu0 0
  %45 = vmatprep.subr.bf16.mxu0 0
  %46 = vmatpush1.bf16.msra.mxu0 0
  %47 = vmatprep.subr.bf16.mxu0 0
  %48 = vmatpush1.bf16.msra.mxu0 0
  %49 = vmatprep.subr.bf16.mxu0 0
  %50 = vmatpush1.bf16.msra.mxu0 0
  %51 = vmatprep.subr.bf16.mxu0 0
  %52 = vmatpush1.bf16.msra.mxu0 0
  %53 = vmatprep.subr.bf16.mxu0 0
  %54 = vmatpush1.bf16.msra.mxu0 0
  %55 = vmatprep.subr.bf16.mxu0 0
  %56 = vmatpush1.bf16.msra.mxu0 0
  %57 = vmatprep.subr.bf16.mxu0 0
  %58 = vmatpush1.bf16.msra.mxu0 0
  %59 = vmatprep.subr.bf16.mxu0 0
  %60 = vmatpush1.bf16.msra.mxu0 0
  %61 = vmatprep.subr.bf16.mxu0 0
  %62 = vmatpush1.bf16.msra.mxu0 0
  %63 = vmatprep.subr.bf16.mxu0 0
  %64 = vmatpush1.bf16.msra.mxu0 0
  %65 = vmatprep.subr.bf16.mxu0 0
  %66 = vmatpush1.bf16.msra.mxu0 0
  %67 = vmatprep.subr.bf16.mxu0 0
  %68 = vmatpush1.bf16.msra.mxu0 0
  %69 = vmatprep.subr.bf16.mxu0 0
  %70 = vmatpush1.bf16.msra.mxu0 0
  %71 = vmatprep.subr.bf16.mxu0 0
  %72 = vmatpush1.bf16.msra.mxu0 0
  %73 = vmatprep.mubr.bf16.mxu0 0
  %74 = vmatmul.mubr.bf16.gmra.mrb[0].mxu0 %v39
  %v75 = vpop.f32.mrb[0].mxu0
  %v76 = vadd.f32 %v24, %v75
  %v77 = vpop.f32.mrb[0].mxu0
  %v78 = vpop.f32.mrb[0].mxu0
  %v79 = vadd.f32 %v24, %v78
  %v80 = vpop.f32.mrb[0].mxu0
  %81 = vdwg.mxu0
  %82 = vst [vmem:[%s3] sm:$0xff] %v76
  %83 = vst [vmem:[%s3 + $0x8] sm:$0xff] %v79
  // Predicated region
  $region14: #{my_resnet_forward.22} parent=0 // pred_check
    _
  $region15: #{my_resnet_forward.22} parent=0 // pred_check_branch
    %85 = sbr.rel (0) target = $region17
  $region16: #{my_resnet_forward.22} parent=0 // pred_region
    _
  $region17: #{my_resnet_forward.22} parent=0 // pred_fallthru
    _
  // Predicated region
  $region18: #{my_resnet_forward.22} parent=0 // pred_check
    _
  $region19: #{my_resnet_forward.22} parent=0 // pred_check_branch
    %87 = sbr.rel (0) target = $region21
  $region20: #{my_resnet_forward.22} parent=0 // pred_region
    _
  $region21: #{my_resnet_forward.22} parent=0 // pred_fallthru
    _

// kernel: my_resnet_forward.23
$region0: #{my_resnet_forward.23}
  #allocation0 [shape = 'u32[]', space=smem, size = 0x4, offset = 0x4, fixed_abs, tag = 'smem constant byte address 0x4 - core index']
  #allocation1 [shape = 'u32[144,128]{1,0:T(1,128)}', space=vmem, size = 0x12000, scoped, tag = 'internal scratch']
  %s0 = inlined_call_operand.vmem [shape: bf16[16,288], index: 0, kind: input, shape index: {}]
  %s1 = inlined_call_operand.vmem [shape: bf16[288,128], index: 1, kind: input, shape index: {}]
  %s2 = inlined_call_operand.vmem [shape: f32[1,128], index: 2, kind: input, shape index: {}]
  %s3 = inlined_call_operand.vmem [shape: f32[16,128], index: 3, kind: input, shape index: {}]
  %s4 = inlined_call_operand.vmem [shape: f32[16,128], index: 4, kind: output, shape index: {}]
  %s5 = sld [smem:[#allocation0]]
  $region26: #{my_resnet_forward.23} parent=0
    _
  %s7 = ssub.s32 1, %s5
  %s8 = scalar_select 0, %s7, %s5
  // Predicated region
  $region2: #{my_resnet_forward.23} parent=0 // pred_check
    _
  $region3: #{my_resnet_forward.23} parent=0 // pred_check_branch
    %10 = sbr.rel (0) target = $region5
  $region4: #{my_resnet_forward.23} parent=0 // pred_region
    _
  $region5: #{my_resnet_forward.23} parent=0 // pred_fallthru
    _
  // Predicated region
  $region6: #{my_resnet_forward.23} parent=0 // pred_check
    _
  $region7: #{my_resnet_forward.23} parent=0 // pred_check_branch
    %12 = sbr.rel (0) target = $region9
  $region8: #{my_resnet_forward.23} parent=0 // pred_region
    _
  $region9: #{my_resnet_forward.23} parent=0 // pred_fallthru
    _
  // Predicated region
  $region10: #{my_resnet_forward.23} parent=0 // pred_check
    _
  $region11: #{my_resnet_forward.23} parent=0 // pred_check_branch
    %14 = sbr.rel (0) target = $region13
  $region12: #{my_resnet_forward.23} parent=0 // pred_region
    _
  $region13: #{my_resnet_forward.23} parent=0 // pred_fallthru
    _
  // Predicated region
  $region14: #{my_resnet_forward.23} parent=0 // pred_check
    _
  $region15: #{my_resnet_forward.23} parent=0 // pred_check_branch
    %16 = sbr.rel (0) target = $region17
  $region16: #{my_resnet_forward.23} parent=0 // pred_region
    _
  $region17: #{my_resnet_forward.23} parent=0 // pred_fallthru
    _
  %v18 = vld [vmem:[%s0] sm:$0xff]
  %v19 = vld [vmem:[%s0 + $0x8] sm:$0xf]
  %v20 = vld [vmem:[%s0 + $0xc] sm:$0xff]
  %v21 = vld [vmem:[%s0 + $0x14] sm:$0xf]
  %v22 = vld [vmem:[%s1] sm:$0xf]
  %v23 = vld [vmem:[%s1 + $0x4] sm:$0xf]
  %v24 = vld [vmem:[%s1 + $0x8] sm:$0xf]
  %v25 = vld [vmem:[%s1 + $0xc] sm:$0xf]
  %v26 = vld [vmem:[%s1 + $0x10] sm:$0xf]
  %v27 = vld [vmem:[%s1 + $0x14] sm:$0xf]
  %v28 = vld [vmem:[%s1 + $0x18] sm:$0xf]
  %v29 = vld [vmem:[%s1 + $0x1c] sm:$0xf]
  %v30 = vld [vmem:[%s1 + $0x20] sm:$0xf]
  %v31 = vld [vmem:[%s1 + $0x24] sm:$0xf]
  %v32 = vld [vmem:[%s1 + $0x28] sm:$0xf]
  %v33 = vld [vmem:[%s1 + $0x2c] sm:$0xf]
  %v34 = vld [vmem:[%s1 + $0x30] sm:$0xf]
  %v35 = vld [vmem:[%s1 + $0x34] sm:$0xf]
  %v36 = vld [vmem:[%s1 + $0x38] sm:$0xf]
  %v37 = vld [vmem:[%s1 + $0x3c] sm:$0xf]
  %v38 = vld [vmem:[%s1 + $0x40] sm:$0xf]
  %v39 = vld [vmem:[%s1 + $0x44] sm:$0xf]
  %v40 = vld [vmem:[%s1 + $0x48] sm:$0xf]
  %v41 = vld [vmem:[%s1 + $0x4c] sm:$0xf]
  %v42 = vld [vmem:[%s1 + $0x50] sm:$0xf]
  %v43 = vld [vmem:[%s1 + $0x54] sm:$0xf]
  %v44 = vld [vmem:[%s1 + $0x58] sm:$0xf]
  %v45 = vld [vmem:[%s1 + $0x5c] sm:$0xf]
  %v46 = vld [vmem:[%s1 + $0x60] sm:$0xf]
  %v47 = vld [vmem:[%s1 + $0x64] sm:$0xf]
  %v48 = vld [vmem:[%s1 + $0x68] sm:$0xf]
  %v49 = vld [vmem:[%s1 + $0x6c] sm:$0xf]
  %v50 = vld [vmem:[%s1 + $0x70] sm:$0xf]
  %v51 = vld [vmem:[%s1 + $0x74] sm:$0xf]
  %v52 = vld [vmem:[%s1 + $0x78] sm:$0xf]
  %v53 = vld [vmem:[%s1 + $0x7c] sm:$0xf]
  %v54 = vld [vmem:[%s1 + $0x80] sm:$0xf]
  %v55 = vld [vmem:[%s1 + $0x84] sm:$0xf]
  %v56 = vld [vmem:[%s1 + $0x88] sm:$0xf]
  %v57 = vld [vmem:[%s1 + $0x8c] sm:$0xf]
  %v58 = vld [vmem:[%s2] sm:$0x1]
  %v60 = vlaneseq
  %v61 = vshrl.u32 %v60, 7
  %v62 = vsub.s32 0, %v61
  %v63 = vrot.slane %v58, %v62
  %v69 = vunpack.c.l.b16 %v18
  %v70 = vunpack.c.h.b16 %v18
  %v71 = vunpack.c.l.b16 %v19
  %v72 = vunpack.c.l.b16 %v20
  %v73 = vunpack.c.h.b16 %v20
  %v74 = vunpack.c.l.b16 %v21
  %v75 = vpack.c.b16 %v72, %v69
  %v76 = vpack.c.b16 %v73, %v70
  %v77 = vpack.c.b16 %v74, %v71
  %v116 = vunpack.c.l.b16 %v22
  %v117 = vunpack.c.l.b16 %v23
  %v118 = vunpack.c.l.b16 %v24
  %v119 = vunpack.c.l.b16 %v25
  %v120 = vunpack.c.l.b16 %v26
  %v121 = vunpack.c.l.b16 %v27
  %v122 = vunpack.c.l.b16 %v28
  %v123 = vunpack.c.l.b16 %v29
  %v124 = vunpack.c.l.b16 %v30
  %v125 = vunpack.c.l.b16 %v31
  %v126 = vunpack.c.l.b16 %v32
  %v127 = vunpack.c.l.b16 %v33
  %v128 = vunpack.c.l.b16 %v34
  %v129 = vunpack.c.l.b16 %v35
  %v130 = vunpack.c.l.b16 %v36
  %v131 = vunpack.c.l.b16 %v37
  %v132 = vunpack.c.l.b16 %v38
  %v133 = vunpack.c.l.b16 %v39
  %v134 = vunpack.c.l.b16 %v40
  %v135 = vunpack.c.l.b16 %v41
  %v136 = vunpack.c.l.b16 %v42
  %v137 = vunpack.c.l.b16 %v43
  %v138 = vunpack.c.l.b16 %v44
  %v139 = vunpack.c.l.b16 %v45
  %v140 = vunpack.c.l.b16 %v46
  %v141 = vunpack.c.l.b16 %v47
  %v142 = vunpack.c.l.b16 %v48
  %v143 = vunpack.c.l.b16 %v49
  %v144 = vunpack.c.l.b16 %v50
  %v145 = vunpack.c.l.b16 %v51
  %v146 = vunpack.c.l.b16 %v52
  %v147 = vunpack.c.l.b16 %v53
  %v148 = vunpack.c.l.b16 %v54
  %v149 = vunpack.c.l.b16 %v55
  %v150 = vunpack.c.l.b16 %v56
  %v151 = vunpack.c.l.b16 %v57
  %v152 = vpack.c.b16 %v117, %v116
  %v153 = vpack.c.b16 %v119, %v118
  %v154 = vpack.c.b16 %v121, %v120
  %v155 = vpack.c.b16 %v123, %v122
  %v156 = vpack.c.b16 %v125, %v124
  %v157 = vpack.c.b16 %v127, %v126
  %v158 = vpack.c.b16 %v129, %v128
  %v159 = vpack.c.b16 %v131, %v130
  %v160 = vpack.c.b16 %v133, %v132
  %v161 = vpack.c.b16 %v135, %v134
  %v162 = vpack.c.b16 %v137, %v136
  %v163 = vpack.c.b16 %v139, %v138
  %v164 = vpack.c.b16 %v141, %v140
  %v165 = vpack.c.b16 %v143, %v142
  %v166 = vpack.c.b16 %v145, %v144
  %v167 = vpack.c.b16 %v147, %v146
  %v168 = vpack.c.b16 %v149, %v148
  %v169 = vpack.c.b16 %v151, %v150
  %vm188 = vcmask 261120
  %v190 = vsel %vm188, %v77, 0
  %192 = vmatprep.subr.bf16.mxu0 0
  %193 = vmatpush1.bf16.msra.mxu0 %v152
  %194 = vmatprep.subr.bf16.mxu0 0
  %195 = vmatpush1.bf16.msra.mxu0 %v153
  %196 = vmatprep.subr.bf16.mxu0 0
  %197 = vmatpush1.bf16.msra.mxu0 %v154
  %198 = vmatprep.subr.bf16.mxu0 0
  %199 = vmatpush1.bf16.msra.mxu0 %v155
  %200 = vmatprep.subr.bf16.mxu0 0
  %201 = vmatpush1.bf16.msra.mxu0 %v156
  %202 = vmatprep.subr.bf16.mxu0 0
  %203 = vmatpush1.bf16.msra.mxu0 %v157
  %204 = vmatprep.subr.bf16.mxu0 0
  %205 = vmatpush1.bf16.msra.mxu0 %v158
  %206 = vmatprep.subr.bf16.mxu0 0
  %207 = vmatpush1.bf16.msra.mxu0 %v159
  %208 = vmatprep.subr.bf16.mxu0 0
  %209 = vmatpush1.bf16.msra.mxu0 %v160
  %210 = vmatprep.subr.bf16.mxu0 0
  %211 = vmatpush1.bf16.msra.mxu0 %v161
  %212 = vmatprep.subr.bf16.mxu0 0
  %213 = vmatpush1.bf16.msra.mxu0 %v162
  %214 = vmatprep.subr.bf16.mxu0 0
  %215 = vmatpush1.bf16.msra.mxu0 %v163
  %216 = vmatprep.subr.bf16.mxu0 0
  %217 = vmatpush1.bf16.msra.mxu0 %v164
  %218 = vmatprep.subr.bf16.mxu0 0
  %219 = vmatpush1.bf16.msra.mxu0 %v165
  %220 = vmatprep.subr.bf16.mxu0 0
  %221 = vmatpush1.bf16.msra.mxu0 %v166
  %222 = vmatprep.subr.bf16.mxu0 0
  %223 = vmatpush1.bf16.msra.mxu0 %v167
  %224 = vmatprep.mubr.bf16.mxu0 %v76
  %225 = vmatmul.mubr.bf16.gmra.mrb[0].mxu0 %v75
  %v226 = vpop.f32.mrb[0].mxu0
  %v227 = vadd.f32 %v63, %v226
  %v228 = vpop.f32.mrb[0].mxu0
  %v229 = vpop.f32.mrb[0].mxu0
  %v230 = vadd.f32 %v63, %v229
  %v231 = vpop.f32.mrb[0].mxu0
  %232 = vdwg.mxu0
  %233 = vmatprep.subr.bf16.mxu0 0
  %234 = vmatpush1.bf16.msra.mxu0 %v168
  %235 = vmatprep.subr.bf16.mxu0 0
  %236 = vmatpush1.bf16.msra.mxu0 %v169
  %237 = vmatprep.subr.bf16.mxu0 0
  %238 = vmatpush1.bf16.msra.mxu0 0
  %239 = vmatprep.subr.bf16.mxu0 0
  %240 = vmatpush1.bf16.msra.mxu0 0
  %241 = vmatprep.subr.bf16.mxu0 0
  %242 = vmatpush1.bf16.msra.mxu0 0
  %243 = vmatprep.subr.bf16.mxu0 0
  %244 = vmatpush1.bf16.msra.mxu0 0
  %245 = vmatprep.subr.bf16.mxu0 0
  %246 = vmatpush1.bf16.msra.mxu0 0
  %247 = vmatprep.subr.bf16.mxu0 0
  %248 = vmatpush1.bf16.msra.mxu0 0
  %249 = vmatprep.subr.bf16.mxu0 0
  %250 = vmatpush1.bf16.msra.mxu0 0
  %251 = vmatprep.subr.bf16.mxu0 0
  %252 = vmatpush1.bf16.msra.mxu0 0
  %253 = vmatprep.subr.bf16.mxu0 0
  %254 = vmatpush1.bf16.msra.mxu0 0
  %255 = vmatprep.subr.bf16.mxu0 0
  %256 = vmatpush1.bf16.msra.mxu0 0
  %257 = vmatprep.subr.bf16.mxu0 0
  %258 = vmatpush1.bf16.msra.mxu0 0
  %259 = vmatprep.subr.bf16.mxu0 0
  %260 = vmatpush1.bf16.msra.mxu0 0
  %261 = vmatprep.subr.bf16.mxu0 0
  %262 = vmatpush1.bf16.msra.mxu0 0
  %263 = vmatprep.subr.bf16.mxu0 0
  %264 = vmatpush1.bf16.msra.mxu0 0
  %265 = vmatprep.mubr.bf16.mxu0 0
  %266 = vmatmul.mubr.bf16.gmra.mrb[0].mxu0 %v190
  %v267 = vpop.f32.mrb[0].mxu0
  %v268 = vadd.f32 %v227, %v267
  %v269 = vpop.f32.mrb[0].mxu0
  %v270 = vpop.f32.mrb[0].mxu0
  %v271 = vadd.f32 %v230, %v270
  %v272 = vpop.f32.mrb[0].mxu0
  %273 = vdwg.mxu0
  %v274 = vld [vmem:[%s3] sm:$0xff]
  %v275 = vld [vmem:[%s3 + $0x8] sm:$0xff]
  %v276 = vadd.f32 %v268, %v274
  %v277 = vadd.f32 %v271, %v275
  %v278 = vmax.f32 %v276, 0.0
  %v279 = vmax.f32 %v277, 0.0
  %280 = vst [vmem:[%s4] sm:$0xff] %v278
  %281 = vst [vmem:[%s4 + $0x8] sm:$0xff] %v279
  // Predicated region
  $region18: #{my_resnet_forward.23} parent=0 // pred_check
    _
  $region19: #{my_resnet_forward.23} parent=0 // pred_check_branch
    %283 = sbr.rel (0) target = $region21
  $region20: #{my_resnet_forward.23} parent=0 // pred_region
    _
  $region21: #{my_resnet_forward.23} parent=0 // pred_fallthru
    _
  // Predicated region
  $region22: #{my_resnet_forward.23} parent=0 // pred_check
    _
  $region23: #{my_resnet_forward.23} parent=0 // pred_check_branch
    %285 = sbr.rel (0) target = $region25
  $region24: #{my_resnet_forward.23} parent=0 // pred_region
    _
  $region25: #{my_resnet_forward.23} parent=0 // pred_fallthru
    _

// kernel: my_resnet_forward.25
$region0: #{my_resnet_forward.25}
  #allocation0 [shape = 'u32[]', space=smem, size = 0x4, offset = 0x4, fixed_abs, tag = 'smem constant byte address 0x4 - core index']
  #allocation1 [shape = 'u32[144,128]{1,0:T(1,128)}', space=vmem, size = 0x12000, scoped, tag = 'internal scratch']
  %s0 = inlined_call_operand.vmem [shape: bf16[8,32], index: 0, kind: input, shape index: {}]
  %s1 = inlined_call_operand.vmem [shape: bf16[32,128], index: 1, kind: input, shape index: {}]
  %s2 = inlined_call_operand.vmem [shape: f32[1,128], index: 2, kind: input, shape index: {}]
  %s3 = inlined_call_operand.vmem [shape: f32[8,128], index: 3, kind: output, shape index: {}]
  %s4 = sld [smem:[#allocation0]]
  $region22: #{my_resnet_forward.25} parent=0
    _
  %s6 = ssub.s32 1, %s4
  %s7 = scalar_select 0, %s6, %s4
  // Predicated region
  $region2: #{my_resnet_forward.25} parent=0 // pred_check
    _
  $region3: #{my_resnet_forward.25} parent=0 // pred_check_branch
    %9 = sbr.rel (0) target = $region5
  $region4: #{my_resnet_forward.25} parent=0 // pred_region
    _
  $region5: #{my_resnet_forward.25} parent=0 // pred_fallthru
    _
  // Predicated region
  $region6: #{my_resnet_forward.25} parent=0 // pred_check
    _
  $region7: #{my_resnet_forward.25} parent=0 // pred_check_branch
    %11 = sbr.rel (0) target = $region9
  $region8: #{my_resnet_forward.25} parent=0 // pred_region
    _
  $region9: #{my_resnet_forward.25} parent=0 // pred_fallthru
    _
  // Predicated region
  $region10: #{my_resnet_forward.25} parent=0 // pred_check
    _
  $region11: #{my_resnet_forward.25} parent=0 // pred_check_branch
    %13 = sbr.rel (0) target = $region13
  $region12: #{my_resnet_forward.25} parent=0 // pred_region
    _
  $region13: #{my_resnet_forward.25} parent=0 // pred_fallthru
    _
  %v15 = vld [vmem:[%s0] sm:$0xf]
  %v16 = vld [vmem:[%s1] sm:$0xf]
  %v17 = vld [vmem:[%s1 + $0x4] sm:$0xf]
  %v18 = vld [vmem:[%s1 + $0x8] sm:$0xf]
  %v19 = vld [vmem:[%s1 + $0xc] sm:$0xf]
  %v20 = vld [vmem:[%s2] sm:$0x1]
  %v22 = vlaneseq
  %v23 = vshrl.u32 %v22, 7
  %v24 = vsub.s32 0, %v23
  %v25 = vrot.slane %v20, %v24
  %v31 = vunpack.c.l.b16 %v16
  %v32 = vunpack.c.l.b16 %v17
  %v33 = vunpack.c.l.b16 %v18
  %v34 = vunpack.c.l.b16 %v19
  %v35 = vpack.c.b16 %v32, %v31
  %v36 = vpack.c.b16 %v34, %v33
  %vm39 = vcmask 261120
  %v41 = vsel %vm39, %v15, 0
  %43 = vmatprep.subr.bf16.mxu0 0
  %44 = vmatpush1.bf16.msra.mxu0 %v35
  %45 = vmatprep.subr.bf16.mxu0 0
  %46 = vmatpush1.bf16.msra.mxu0 %v36
  %47 = vmatprep.subr.bf16.mxu0 0
  %48 = vmatpush1.bf16.msra.mxu0 0
  %49 = vmatprep.subr.bf16.mxu0 0
  %50 = vmatpush1.bf16.msra.mxu0 0
  %51 = vmatprep.subr.bf16.mxu0 0
  %52 = vmatpush1.bf16.msra.mxu0 0
  %53 = vmatprep.subr.bf16.mxu0 0
  %54 = vmatpush1.bf16.msra.mxu0 0
  %55 = vmatprep.subr.bf16.mxu0 0
  %56 = vmatpush1.bf16.msra.mxu0 0
  %57 = vmatprep.subr.bf16.mxu0 0
  %58 = vmatpush1.bf16.msra.mxu0 0
  %59 = vmatprep.subr.bf16.mxu0 0
  %60 = vmatpush1.bf16.msra.mxu0 0
  %61 = vmatprep.subr.bf16.mxu0 0
  %62 = vmatpush1.bf16.msra.mxu0 0
  %63 = vmatprep.subr.bf16.mxu0 0
  %64 = vmatpush1.bf16.msra.mxu0 0
  %65 = vmatprep.subr.bf16.mxu0 0
  %66 = vmatpush1.bf16.msra.mxu0 0
  %67 = vmatprep.subr.bf16.mxu0 0
  %68 = vmatpush1.bf16.msra.mxu0 0
  %69 = vmatprep.subr.bf16.mxu0 0
  %70 = vmatpush1.bf16.msra.mxu0 0
  %71 = vmatprep.subr.bf16.mxu0 0
  %72 = vmatpush1.bf16.msra.mxu0 0
  %73 = vmatprep.subr.bf16.mxu0 0
  %74 = vmatpush1.bf16.msra.mxu0 0
  %75 = vmatprep.mubr.bf16.mxu0 0
  %76 = vmatmul.mubr.bf16.gmra.mrb[0].mxu0 %v41
  %v77 = vpop.f32.mrb[0].mxu0
  %v78 = vadd.f32 %v25, %v77
  %v79 = vpop.f32.mrb[0].mxu0
  %v80 = vpop.f32.mrb[0].mxu0
  %v81 = vpop.f32.mrb[0].mxu0
  %82 = vdwg.mxu0
  %83 = vst [vmem:[%s3] sm:$0xff] %v78
  // Predicated region
  $region14: #{my_resnet_forward.25} parent=0 // pred_check
    _
  $region15: #{my_resnet_forward.25} parent=0 // pred_check_branch
    %85 = sbr.rel (0) target = $region17
  $region16: #{my_resnet_forward.25} parent=0 // pred_region
    _
  $region17: #{my_resnet_forward.25} parent=0 // pred_fallthru
    _
  // Predicated region
  $region18: #{my_resnet_forward.25} parent=0 // pred_check
    _
  $region19: #{my_resnet_forward.25} parent=0 // pred_check_branch
    %87 = sbr.rel (0) target = $region21
  $region20: #{my_resnet_forward.25} parent=0 // pred_region
    _
  $region21: #{my_resnet_forward.25} parent=0 // pred_fallthru
    _

// kernel: my_resnet_forward.24
$region0: #{my_resnet_forward.24}
  #allocation0 [shape = 'u32[]', space=smem, size = 0x4, offset = 0x4, fixed_abs, tag = 'smem constant byte address 0x4 - core index']
  #allocation1 [shape = 'u32[144,128]{1,0:T(1,128)}', space=vmem, size = 0x12000, scoped, tag = 'internal scratch']
  %s0 = inlined_call_operand.vmem [shape: bf16[8,288], index: 0, kind: input, shape index: {}]
  %s1 = inlined_call_operand.vmem [shape: bf16[288,128], index: 1, kind: input, shape index: {}]
  %s2 = inlined_call_operand.vmem [shape: f32[1,128], index: 2, kind: input, shape index: {}]
  %s3 = inlined_call_operand.vmem [shape: f32[8,128], index: 3, kind: output, shape index: {}]
  %s4 = sld [smem:[#allocation0]]
  $region22: #{my_resnet_forward.24} parent=0
    _
  %s6 = ssub.s32 1, %s4
  %s7 = scalar_select 0, %s6, %s4
  // Predicated region
  $region2: #{my_resnet_forward.24} parent=0 // pred_check
    _
  $region3: #{my_resnet_forward.24} parent=0 // pred_check_branch
    %9 = sbr.rel (0) target = $region5
  $region4: #{my_resnet_forward.24} parent=0 // pred_region
    _
  $region5: #{my_resnet_forward.24} parent=0 // pred_fallthru
    _
  // Predicated region
  $region6: #{my_resnet_forward.24} parent=0 // pred_check
    _
  $region7: #{my_resnet_forward.24} parent=0 // pred_check_branch
    %11 = sbr.rel (0) target = $region9
  $region8: #{my_resnet_forward.24} parent=0 // pred_region
    _
  $region9: #{my_resnet_forward.24} parent=0 // pred_fallthru
    _
  // Predicated region
  $region10: #{my_resnet_forward.24} parent=0 // pred_check
    _
  $region11: #{my_resnet_forward.24} parent=0 // pred_check_branch
    %13 = sbr.rel (0) target = $region13
  $region12: #{my_resnet_forward.24} parent=0 // pred_region
    _
  $region13: #{my_resnet_forward.24} parent=0 // pred_fallthru
    _
  %v15 = vld [vmem:[%s0] sm:$0xff]
  %v16 = vld [vmem:[%s0 + $0x8] sm:$0xf]
  %v17 = vld [vmem:[%s1] sm:$0xf]
  %v18 = vld [vmem:[%s1 + $0x4] sm:$0xf]
  %v19 = vld [vmem:[%s1 + $0x8] sm:$0xf]
  %v20 = vld [vmem:[%s1 + $0xc] sm:$0xf]
  %v21 = vld [vmem:[%s1 + $0x10] sm:$0xf]
  %v22 = vld [vmem:[%s1 + $0x14] sm:$0xf]
  %v23 = vld [vmem:[%s1 + $0x18] sm:$0xf]
  %v24 = vld [vmem:[%s1 + $0x1c] sm:$0xf]
  %v25 = vld [vmem:[%s1 + $0x20] sm:$0xf]
  %v26 = vld [vmem:[%s1 + $0x24] sm:$0xf]
  %v27 = vld [vmem:[%s1 + $0x28] sm:$0xf]
  %v28 = vld [vmem:[%s1 + $0x2c] sm:$0xf]
  %v29 = vld [vmem:[%s1 + $0x30] sm:$0xf]
  %v30 = vld [vmem:[%s1 + $0x34] sm:$0xf]
  %v31 = vld [vmem:[%s1 + $0x38] sm:$0xf]
  %v32 = vld [vmem:[%s1 + $0x3c] sm:$0xf]
  %v33 = vld [vmem:[%s1 + $0x40] sm:$0xf]
  %v34 = vld [vmem:[%s1 + $0x44] sm:$0xf]
  %v35 = vld [vmem:[%s1 + $0x48] sm:$0xf]
  %v36 = vld [vmem:[%s1 + $0x4c] sm:$0xf]
  %v37 = vld [vmem:[%s1 + $0x50] sm:$0xf]
  %v38 = vld [vmem:[%s1 + $0x54] sm:$0xf]
  %v39 = vld [vmem:[%s1 + $0x58] sm:$0xf]
  %v40 = vld [vmem:[%s1 + $0x5c] sm:$0xf]
  %v41 = vld [vmem:[%s1 + $0x60] sm:$0xf]
  %v42 = vld [vmem:[%s1 + $0x64] sm:$0xf]
  %v43 = vld [vmem:[%s1 + $0x68] sm:$0xf]
  %v44 = vld [vmem:[%s1 + $0x6c] sm:$0xf]
  %v45 = vld [vmem:[%s1 + $0x70] sm:$0xf]
  %v46 = vld [vmem:[%s1 + $0x74] sm:$0xf]
  %v47 = vld [vmem:[%s1 + $0x78] sm:$0xf]
  %v48 = vld [vmem:[%s1 + $0x7c] sm:$0xf]
  %v49 = vld [vmem:[%s1 + $0x80] sm:$0xf]
  %v50 = vld [vmem:[%s1 + $0x84] sm:$0xf]
  %v51 = vld [vmem:[%s1 + $0x88] sm:$0xf]
  %v52 = vld [vmem:[%s1 + $0x8c] sm:$0xf]
  %v53 = vld [vmem:[%s2] sm:$0x1]
  %v55 = vlaneseq
  %v56 = vshrl.u32 %v55, 7
  %v57 = vsub.s32 0, %v56
  %v58 = vrot.slane %v53, %v57
  %v62 = vunpack.c.l.b16 %v15
  %v63 = vunpack.c.h.b16 %v15
  %v64 = vunpack.c.l.b16 %v16
  %v65 = vpack.c.b16 %v62, %v62
  %v66 = vpack.c.b16 %v63, %v63
  %v67 = vpack.c.b16 %v64, %v64
  %v106 = vunpack.c.l.b16 %v17
  %v107 = vunpack.c.l.b16 %v18
  %v108 = vunpack.c.l.b16 %v19
  %v109 = vunpack.c.l.b16 %v20
  %v110 = vunpack.c.l.b16 %v21
  %v111 = vunpack.c.l.b16 %v22
  %v112 = vunpack.c.l.b16 %v23
  %v113 = vunpack.c.l.b16 %v24
  %v114 = vunpack.c.l.b16 %v25
  %v115 = vunpack.c.l.b16 %v26
  %v116 = vunpack.c.l.b16 %v27
  %v117 = vunpack.c.l.b16 %v28
  %v118 = vunpack.c.l.b16 %v29
  %v119 = vunpack.c.l.b16 %v30
  %v120 = vunpack.c.l.b16 %v31
  %v121 = vunpack.c.l.b16 %v32
  %v122 = vunpack.c.l.b16 %v33
  %v123 = vunpack.c.l.b16 %v34
  %v124 = vunpack.c.l.b16 %v35
  %v125 = vunpack.c.l.b16 %v36
  %v126 = vunpack.c.l.b16 %v37
  %v127 = vunpack.c.l.b16 %v38
  %v128 = vunpack.c.l.b16 %v39
  %v129 = vunpack.c.l.b16 %v40
  %v130 = vunpack.c.l.b16 %v41
  %v131 = vunpack.c.l.b16 %v42
  %v132 = vunpack.c.l.b16 %v43
  %v133 = vunpack.c.l.b16 %v44
  %v134 = vunpack.c.l.b16 %v45
  %v135 = vunpack.c.l.b16 %v46
  %v136 = vunpack.c.l.b16 %v47
  %v137 = vunpack.c.l.b16 %v48
  %v138 = vunpack.c.l.b16 %v49
  %v139 = vunpack.c.l.b16 %v50
  %v140 = vunpack.c.l.b16 %v51
  %v141 = vunpack.c.l.b16 %v52
  %v142 = vpack.c.b16 %v107, %v106
  %v143 = vpack.c.b16 %v109, %v108
  %v144 = vpack.c.b16 %v111, %v110
  %v145 = vpack.c.b16 %v113, %v112
  %v146 = vpack.c.b16 %v115, %v114
  %v147 = vpack.c.b16 %v117, %v116
  %v148 = vpack.c.b16 %v119, %v118
  %v149 = vpack.c.b16 %v121, %v120
  %v150 = vpack.c.b16 %v123, %v122
  %v151 = vpack.c.b16 %v125, %v124
  %v152 = vpack.c.b16 %v127, %v126
  %v153 = vpack.c.b16 %v129, %v128
  %v154 = vpack.c.b16 %v131, %v130
  %v155 = vpack.c.b16 %v133, %v132
  %v156 = vpack.c.b16 %v135, %v134
  %v157 = vpack.c.b16 %v137, %v136
  %v158 = vpack.c.b16 %v139, %v138
  %v159 = vpack.c.b16 %v141, %v140
  %vm178 = vcmask 261120
  %v180 = vsel %vm178, %v67, 0
  %182 = vmatprep.subr.bf16.mxu0 0
  %183 = vmatpush1.bf16.msra.mxu0 %v142
  %184 = vmatprep.subr.bf16.mxu0 0
  %185 = vmatpush1.bf16.msra.mxu0 %v143
  %186 = vmatprep.subr.bf16.mxu0 0
  %187 = vmatpush1.bf16.msra.mxu0 %v144
  %188 = vmatprep.subr.bf16.mxu0 0
  %189 = vmatpush1.bf16.msra.mxu0 %v145
  %190 = vmatprep.subr.bf16.mxu0 0
  %191 = vmatpush1.bf16.msra.mxu0 %v146
  %192 = vmatprep.subr.bf16.mxu0 0
  %193 = vmatpush1.bf16.msra.mxu0 %v147
  %194 = vmatprep.subr.bf16.mxu0 0
  %195 = vmatpush1.bf16.msra.mxu0 %v148
  %196 = vmatprep.subr.bf16.mxu0 0
  %197 = vmatpush1.bf16.msra.mxu0 %v149
  %198 = vmatprep.subr.bf16.mxu0 0
  %199 = vmatpush1.bf16.msra.mxu0 %v150
  %200 = vmatprep.subr.bf16.mxu0 0
  %201 = vmatpush1.bf16.msra.mxu0 %v151
  %202 = vmatprep.subr.bf16.mxu0 0
  %203 = vmatpush1.bf16.msra.mxu0 %v152
  %204 = vmatprep.subr.bf16.mxu0 0
  %205 = vmatpush1.bf16.msra.mxu0 %v153
  %206 = vmatprep.subr.bf16.mxu0 0
  %207 = vmatpush1.bf16.msra.mxu0 %v154
  %208 = vmatprep.subr.bf16.mxu0 0
  %209 = vmatpush1.bf16.msra.mxu0 %v155
  %210 = vmatprep.subr.bf16.mxu0 0
  %211 = vmatpush1.bf16.msra.mxu0 %v156
  %212 = vmatprep.subr.bf16.mxu0 0
  %213 = vmatpush1.bf16.msra.mxu0 %v157
  %214 = vmatprep.mubr.bf16.mxu0 %v66
  %215 = vmatmul.mubr.bf16.gmra.mrb[0].mxu0 %v65
  %v216 = vpop.f32.mrb[0].mxu0
  %v217 = vadd.f32 %v58, %v216
  %v218 = vpop.f32.mrb[0].mxu0
  %v219 = vpop.f32.mrb[0].mxu0
  %v220 = vpop.f32.mrb[0].mxu0
  %221 = vdwg.mxu0
  %222 = vmatprep.subr.bf16.mxu0 0
  %223 = vmatpush1.bf16.msra.mxu0 %v158
  %224 = vmatprep.subr.bf16.mxu0 0
  %225 = vmatpush1.bf16.msra.mxu0 %v159
  %226 = vmatprep.subr.bf16.mxu0 0
  %227 = vmatpush1.bf16.msra.mxu0 0
  %228 = vmatprep.subr.bf16.mxu0 0
  %229 = vmatpush1.bf16.msra.mxu0 0
  %230 = vmatprep.subr.bf16.mxu0 0
  %231 = vmatpush1.bf16.msra.mxu0 0
  %232 = vmatprep.subr.bf16.mxu0 0
  %233 = vmatpush1.bf16.msra.mxu0 0
  %234 = vmatprep.subr.bf16.mxu0 0
  %235 = vmatpush1.bf16.msra.mxu0 0
  %236 = vmatprep.subr.bf16.mxu0 0
  %237 = vmatpush1.bf16.msra.mxu0 0
  %238 = vmatprep.subr.bf16.mxu0 0
  %239 = vmatpush1.bf16.msra.mxu0 0
  %240 = vmatprep.subr.bf16.mxu0 0
  %241 = vmatpush1.bf16.msra.mxu0 0
  %242 = vmatprep.subr.bf16.mxu0 0
  %243 = vmatpush1.bf16.msra.mxu0 0
  %244 = vmatprep.subr.bf16.mxu0 0
  %245 = vmatpush1.bf16.msra.mxu0 0
  %246 = vmatprep.subr.bf16.mxu0 0
  %247 = vmatpush1.bf16.msra.mxu0 0
  %248 = vmatprep.subr.bf16.mxu0 0
  %249 = vmatpush1.bf16.msra.mxu0 0
  %250 = vmatprep.subr.bf16.mxu0 0
  %251 = vmatpush1.bf16.msra.mxu0 0
  %252 = vmatprep.subr.bf16.mxu0 0
  %253 = vmatpush1.bf16.msra.mxu0 0
  %254 = vmatprep.mubr.bf16.mxu0 0
  %255 = vmatmul.mubr.bf16.gmra.mrb[0].mxu0 %v180
  %v256 = vpop.f32.mrb[0].mxu0
  %v257 = vadd.f32 %v217, %v256
  %v258 = vpop.f32.mrb[0].mxu0
  %v259 = vpop.f32.mrb[0].mxu0
  %v260 = vpop.f32.mrb[0].mxu0
  %261 = vdwg.mxu0
  %v262 = vmax.f32 %v257, 0.0
  %263 = vst [vmem:[%s3] sm:$0xff] %v262
  // Predicated region
  $region14: #{my_resnet_forward.24} parent=0 // pred_check
    _
  $region15: #{my_resnet_forward.24} parent=0 // pred_check_branch
    %265 = sbr.rel (0) target = $region17
  $region16: #{my_resnet_forward.24} parent=0 // pred_region
    _
  $region17: #{my_resnet_forward.24} parent=0 // pred_fallthru
    _
  // Predicated region
  $region18: #{my_resnet_forward.24} parent=0 // pred_check
    _
  $region19: #{my_resnet_forward.24} parent=0 // pred_check_branch
    %267 = sbr.rel (0) target = $region21
  $region20: #{my_resnet_forward.24} parent=0 // pred_region
    _
  $region21: #{my_resnet_forward.24} parent=0 // pred_fallthru
    _

// kernel: my_resnet_forward.26
$region0: #{my_resnet_forward.26}
  #allocation0 [shape = 'u32[]', space=smem, size = 0x4, offset = 0x4, fixed_abs, tag = 'smem constant byte address 0x4 - core index']
  #allocation1 [shape = 'u32[144,128]{1,0:T(1,128)}', space=vmem, size = 0x12000, scoped, tag = 'internal scratch']
  %s0 = inlined_call_operand.vmem [shape: bf16[8,576], index: 0, kind: input, shape index: {}]
  %s1 = inlined_call_operand.vmem [shape: bf16[576,128], index: 1, kind: input, shape index: {}]
  %s2 = inlined_call_operand.vmem [shape: f32[1,128], index: 2, kind: input, shape index: {}]
  %s3 = inlined_call_operand.vmem [shape: f32[8,128], index: 3, kind: input, shape index: {}]
  %s4 = inlined_call_operand.vmem [shape: f32[8,128], index: 4, kind: output, shape index: {}]
  %s5 = sld [smem:[#allocation0]]
  $region26: #{my_resnet_forward.26} parent=0
    _
  %s7 = ssub.s32 1, %s5
  %s8 = scalar_select 0, %s7, %s5
  // Predicated region
  $region2: #{my_resnet_forward.26} parent=0 // pred_check
    _
  $region3: #{my_resnet_forward.26} parent=0 // pred_check_branch
    %10 = sbr.rel (0) target = $region5
  $region4: #{my_resnet_forward.26} parent=0 // pred_region
    _
  $region5: #{my_resnet_forward.26} parent=0 // pred_fallthru
    _
  // Predicated region
  $region6: #{my_resnet_forward.26} parent=0 // pred_check
    _
  $region7: #{my_resnet_forward.26} parent=0 // pred_check_branch
    %12 = sbr.rel (0) target = $region9
  $region8: #{my_resnet_forward.26} parent=0 // pred_region
    _
  $region9: #{my_resnet_forward.26} parent=0 // pred_fallthru
    _
  // Predicated region
  $region10: #{my_resnet_forward.26} parent=0 // pred_check
    _
  $region11: #{my_resnet_forward.26} parent=0 // pred_check_branch
    %14 = sbr.rel (0) target = $region13
  $region12: #{my_resnet_forward.26} parent=0 // pred_region
    _
  $region13: #{my_resnet_forward.26} parent=0 // pred_fallthru
    _
  // Predicated region
  $region14: #{my_resnet_forward.26} parent=0 // pred_check
    _
  $region15: #{my_resnet_forward.26} parent=0 // pred_check_branch
    %16 = sbr.rel (0) target = $region17
  $region16: #{my_resnet_forward.26} parent=0 // pred_region
    _
  $region17: #{my_resnet_forward.26} parent=0 // pred_fallthru
    _
  %v18 = vld [vmem:[%s0] sm:$0xff]
  %v19 = vld [vmem:[%s0 + $0x8] sm:$0xff]
  %v20 = vld [vmem:[%s0 + $0x10] sm:$0xf]
  %v21 = vld [vmem:[%s1] sm:$0xf]
  %v22 = vld [vmem:[%s1 + $0x4] sm:$0xf]
  %v23 = vld [vmem:[%s1 + $0x8] sm:$0xf]
  %v24 = vld [vmem:[%s1 + $0xc] sm:$0xf]
  %v25 = vld [vmem:[%s1 + $0x10] sm:$0xf]
  %v26 = vld [vmem:[%s1 + $0x14] sm:$0xf]
  %v27 = vld [vmem:[%s1 + $0x18] sm:$0xf]
  %v28 = vld [vmem:[%s1 + $0x1c] sm:$0xf]
  %v29 = vld [vmem:[%s1 + $0x20] sm:$0xf]
  %v30 = vld [vmem:[%s1 + $0x24] sm:$0xf]
  %v31 = vld [vmem:[%s1 + $0x28] sm:$0xf]
  %v32 = vld [vmem:[%s1 + $0x2c] sm:$0xf]
  %v33 = vld [vmem:[%s1 + $0x30] sm:$0xf]
  %v34 = vld [vmem:[%s1 + $0x34] sm:$0xf]
  %v35 = vld [vmem:[%s1 + $0x38] sm:$0xf]
  %v36 = vld [vmem:[%s1 + $0x3c] sm:$0xf]
  %v37 = vld [vmem:[%s1 + $0x40] sm:$0xf]
  %v38 = vld [vmem:[%s1 + $0x44] sm:$0xf]
  %v39 = vld [vmem:[%s1 + $0x48] sm:$0xf]
  %v40 = vld [vmem:[%s1 + $0x4c] sm:$0xf]
  %v41 = vld [vmem:[%s1 + $0x50] sm:$0xf]
  %v42 = vld [vmem:[%s1 + $0x54] sm:$0xf]
  %v43 = vld [vmem:[%s1 + $0x58] sm:$0xf]
  %v44 = vld [vmem:[%s1 + $0x5c] sm:$0xf]
  %v45 = vld [vmem:[%s1 + $0x60] sm:$0xf]
  %v46 = vld [vmem:[%s1 + $0x64] sm:$0xf]
  %v47 = vld [vmem:[%s1 + $0x68] sm:$0xf]
  %v48 = vld [vmem:[%s1 + $0x6c] sm:$0xf]
  %v49 = vld [vmem:[%s1 + $0x70] sm:$0xf]
  %v50 = vld [vmem:[%s1 + $0x74] sm:$0xf]
  %v51 = vld [vmem:[%s1 + $0x78] sm:$0xf]
  %v52 = vld [vmem:[%s1 + $0x7c] sm:$0xf]
  %v53 = vld [vmem:[%s1 + $0x80] sm:$0xf]
  %v54 = vld [vmem:[%s1 + $0x84] sm:$0xf]
  %v55 = vld [vmem:[%s1 + $0x88] sm:$0xf]
  %v56 = vld [vmem:[%s1 + $0x8c] sm:$0xf]
  %v57 = vld [vmem:[%s1 + $0x90] sm:$0xf]
  %v58 = vld [vmem:[%s1 + $0x94] sm:$0xf]
  %v59 = vld [vmem:[%s1 + $0x98] sm:$0xf]
  %v60 = vld [vmem:[%s1 + $0x9c] sm:$0xf]
  %v61 = vld [vmem:[%s1 + $0xa0] sm:$0xf]
  %v62 = vld [vmem:[%s1 + $0xa4] sm:$0xf]
  %v63 = vld [vmem:[%s1 + $0xa8] sm:$0xf]
  %v64 = vld [vmem:[%s1 + $0xac] sm:$0xf]
  %v65 = vld [vmem:[%s1 + $0xb0] sm:$0xf]
  %v66 = vld [vmem:[%s1 + $0xb4] sm:$0xf]
  %v67 = vld [vmem:[%s1 + $0xb8] sm:$0xf]
  %v68 = vld [vmem:[%s1 + $0xbc] sm:$0xf]
  %v69 = vld [vmem:[%s1 + $0xc0] sm:$0xf]
  %v70 = vld [vmem:[%s1 + $0xc4] sm:$0xf]
  %v71 = vld [vmem:[%s1 + $0xc8] sm:$0xf]
  %v72 = vld [vmem:[%s1 + $0xcc] sm:$0xf]
  %v73 = vld [vmem:[%s1 + $0xd0] sm:$0xf]
  %v74 = vld [vmem:[%s1 + $0xd4] sm:$0xf]
  %v75 = vld [vmem:[%s1 + $0xd8] sm:$0xf]
  %v76 = vld [vmem:[%s1 + $0xdc] sm:$0xf]
  %v77 = vld [vmem:[%s1 + $0xe0] sm:$0xf]
  %v78 = vld [vmem:[%s1 + $0xe4] sm:$0xf]
  %v79 = vld [vmem:[%s1 + $0xe8] sm:$0xf]
  %v80 = vld [vmem:[%s1 + $0xec] sm:$0xf]
  %v81 = vld [vmem:[%s1 + $0xf0] sm:$0xf]
  %v82 = vld [vmem:[%s1 + $0xf4] sm:$0xf]
  %v83 = vld [vmem:[%s1 + $0xf8] sm:$0xf]
  %v84 = vld [vmem:[%s1 + $0xfc] sm:$0xf]
  %v85 = vld [vmem:[%s1 + $0x100] sm:$0xf]
  %v86 = vld [vmem:[%s1 + $0x104] sm:$0xf]
  %v87 = vld [vmem:[%s1 + $0x108] sm:$0xf]
  %v88 = vld [vmem:[%s1 + $0x10c] sm:$0xf]
  %v89 = vld [vmem:[%s1 + $0x110] sm:$0xf]
  %v90 = vld [vmem:[%s1 + $0x114] sm:$0xf]
  %v91 = vld [vmem:[%s1 + $0x118] sm:$0xf]
  %v92 = vld [vmem:[%s1 + $0x11c] sm:$0xf]
  %v93 = vld [vmem:[%s2] sm:$0x1]
  %v95 = vlaneseq
  %v96 = vshrl.u32 %v95, 7
  %v97 = vsub.s32 0, %v96
  %v98 = vrot.slane %v93, %v97
  %v103 = vunpack.c.l.b16 %v18
  %v104 = vunpack.c.h.b16 %v18
  %v105 = vunpack.c.l.b16 %v19
  %v106 = vunpack.c.h.b16 %v19
  %v107 = vunpack.c.l.b16 %v20
  %v108 = vpack.c.b16 %v103, %v103
  %v109 = vpack.c.b16 %v104, %v104
  %v110 = vpack.c.b16 %v105, %v105
  %v111 = vpack.c.b16 %v106, %v106
  %v112 = vpack.c.b16 %v107, %v107
  %v189 = vunpack.c.l.b16 %v21
  %v190 = vunpack.c.l.b16 %v22
  %v191 = vunpack.c.l.b16 %v23
  %v192 = vunpack.c.l.b16 %v24
  %v193 = vunpack.c.l.b16 %v25
  %v194 = vunpack.c.l.b16 %v26
  %v195 = vunpack.c.l.b16 %v27
  %v196 = vunpack.c.l.b16 %v28
  %v197 = vunpack.c.l.b16 %v29
  %v198 = vunpack.c.l.b16 %v30
  %v199 = vunpack.c.l.b16 %v31
  %v200 = vunpack.c.l.b16 %v32
  %v201 = vunpack.c.l.b16 %v33
  %v202 = vunpack.c.l.b16 %v34
  %v203 = vunpack.c.l.b16 %v35
  %v204 = vunpack.c.l.b16 %v36
  %v205 = vunpack.c.l.b16 %v37
  %v206 = vunpack.c.l.b16 %v38
  %v207 = vunpack.c.l.b16 %v39
  %v208 = vunpack.c.l.b16 %v40
  %v209 = vunpack.c.l.b16 %v41
  %v210 = vunpack.c.l.b16 %v42
  %v211 = vunpack.c.l.b16 %v43
  %v212 = vunpack.c.l.b16 %v44
  %v213 = vunpack.c.l.b16 %v45
  %v214 = vunpack.c.l.b16 %v46
  %v215 = vunpack.c.l.b16 %v47
  %v216 = vunpack.c.l.b16 %v48
  %v217 = vunpack.c.l.b16 %v49
  %v218 = vunpack.c.l.b16 %v50
  %v219 = vunpack.c.l.b16 %v51
  %v220 = vunpack.c.l.b16 %v52
  %v221 = vunpack.c.l.b16 %v53
  %v222 = vunpack.c.l.b16 %v54
  %v223 = vunpack.c.l.b16 %v55
  %v224 = vunpack.c.l.b16 %v56
  %v225 = vunpack.c.l.b16 %v57
  %v226 = vunpack.c.l.b16 %v58
  %v227 = vunpack.c.l.b16 %v59
  %v228 = vunpack.c.l.b16 %v60
  %v229 = vunpack.c.l.b16 %v61
  %v230 = vunpack.c.l.b16 %v62
  %v231 = vunpack.c.l.b16 %v63
  %v232 = vunpack.c.l.b16 %v64
  %v233 = vunpack.c.l.b16 %v65
  %v234 = vunpack.c.l.b16 %v66
  %v235 = vunpack.c.l.b16 %v67
  %v236 = vunpack.c.l.b16 %v68
  %v237 = vunpack.c.l.b16 %v69
  %v238 = vunpack.c.l.b16 %v70
  %v239 = vunpack.c.l.b16 %v71
  %v240 = vunpack.c.l.b16 %v72
  %v241 = vunpack.c.l.b16 %v73
  %v242 = vunpack.c.l.b16 %v74
  %v243 = vunpack.c.l.b16 %v75
  %v244 = vunpack.c.l.b16 %v76
  %v245 = vunpack.c.l.b16 %v77
  %v246 = vunpack.c.l.b16 %v78
  %v247 = vunpack.c.l.b16 %v79
  %v248 = vunpack.c.l.b16 %v80
  %v249 = vunpack.c.l.b16 %v81
  %v250 = vunpack.c.l.b16 %v82
  %v251 = vunpack.c.l.b16 %v83
  %v252 = vunpack.c.l.b16 %v84
  %v253 = vunpack.c.l.b16 %v85
  %v254 = vunpack.c.l.b16 %v86
  %v255 = vunpack.c.l.b16 %v87
  %v256 = vunpack.c.l.b16 %v88
  %v257 = vunpack.c.l.b16 %v89
  %v258 = vunpack.c.l.b16 %v90
  %v259 = vunpack.c.l.b16 %v91
  %v260 = vunpack.c.l.b16 %v92
  %v261 = vpack.c.b16 %v190, %v189
  %v262 = vpack.c.b16 %v192, %v191
  %v263 = vpack.c.b16 %v194, %v193
  %v264 = vpack.c.b16 %v196, %v195
  %v265 = vpack.c.b16 %v198, %v197
  %v266 = vpack.c.b16 %v200, %v199
  %v267 = vpack.c.b16 %v202, %v201
  %v268 = vpack.c.b16 %v204, %v203
  %v269 = vpack.c.b16 %v206, %v205
  %v270 = vpack.c.b16 %v208, %v207
  %v271 = vpack.c.b16 %v210, %v209
  %v272 = vpack.c.b16 %v212, %v211
  %v273 = vpack.c.b16 %v214, %v213
  %v274 = vpack.c.b16 %v216, %v215
  %v275 = vpack.c.b16 %v218, %v217
  %v276 = vpack.c.b16 %v220, %v219
  %v277 = vpack.c.b16 %v222, %v221
  %v278 = vpack.c.b16 %v224, %v223
  %v279 = vpack.c.b16 %v226, %v225
  %v280 = vpack.c.b16 %v228, %v227
  %v281 = vpack.c.b16 %v230, %v229
  %v282 = vpack.c.b16 %v232, %v231
  %v283 = vpack.c.b16 %v234, %v233
  %v284 = vpack.c.b16 %v236, %v235
  %v285 = vpack.c.b16 %v238, %v237
  %v286 = vpack.c.b16 %v240, %v239
  %v287 = vpack.c.b16 %v242, %v241
  %v288 = vpack.c.b16 %v244, %v243
  %v289 = vpack.c.b16 %v246, %v245
  %v290 = vpack.c.b16 %v248, %v247
  %v291 = vpack.c.b16 %v250, %v249
  %v292 = vpack.c.b16 %v252, %v251
  %v293 = vpack.c.b16 %v254, %v253
  %v294 = vpack.c.b16 %v256, %v255
  %v295 = vpack.c.b16 %v258, %v257
  %v296 = vpack.c.b16 %v260, %v259
  %vm333 = vcmask 523264
  %v335 = vsel %vm333, %v112, 0
  %337 = vmatprep.subr.bf16.mxu0 0
  %338 = vmatpush1.bf16.msra.mxu0 %v261
  %339 = vmatprep.subr.bf16.mxu0 0
  %340 = vmatpush1.bf16.msra.mxu0 %v262
  %341 = vmatprep.subr.bf16.mxu0 0
  %342 = vmatpush1.bf16.msra.mxu0 %v263
  %343 = vmatprep.subr.bf16.mxu0 0
  %344 = vmatpush1.bf16.msra.mxu0 %v264
  %345 = vmatprep.subr.bf16.mxu0 0
  %346 = vmatpush1.bf16.msra.mxu0 %v265
  %347 = vmatprep.subr.bf16.mxu0 0
  %348 = vmatpush1.bf16.msra.mxu0 %v266
  %349 = vmatprep.subr.bf16.mxu0 0
  %350 = vmatpush1.bf16.msra.mxu0 %v267
  %351 = vmatprep.subr.bf16.mxu0 0
  %352 = vmatpush1.bf16.msra.mxu0 %v268
  %353 = vmatprep.subr.bf16.mxu0 0
  %354 = vmatpush1.bf16.msra.mxu0 %v269
  %355 = vmatprep.subr.bf16.mxu0 0
  %356 = vmatpush1.bf16.msra.mxu0 %v270
  %357 = vmatprep.subr.bf16.mxu0 0
  %358 = vmatpush1.bf16.msra.mxu0 %v271
  %359 = vmatprep.subr.bf16.mxu0 0
  %360 = vmatpush1.bf16.msra.mxu0 %v272
  %361 = vmatprep.subr.bf16.mxu0 0
  %362 = vmatpush1.bf16.msra.mxu0 %v273
  %363 = vmatprep.subr.bf16.mxu0 0
  %364 = vmatpush1.bf16.msra.mxu0 %v274
  %365 = vmatprep.subr.bf16.mxu0 0
  %366 = vmatpush1.bf16.msra.mxu0 %v275
  %367 = vmatprep.subr.bf16.mxu0 0
  %368 = vmatpush1.bf16.msra.mxu0 %v276
  %369 = vmatprep.mubr.bf16.mxu0 %v109
  %370 = vmatmul.mubr.bf16.gmra.mrb[0].mxu0 %v108
  %v371 = vpop.f32.mrb[0].mxu0
  %v372 = vadd.f32 %v98, %v371
  %v373 = vpop.f32.mrb[0].mxu0
  %v374 = vpop.f32.mrb[0].mxu0
  %v375 = vpop.f32.mrb[0].mxu0
  %376 = vdwg.mxu0
  %377 = vmatprep.subr.bf16.mxu0 0
  %378 = vmatpush1.bf16.msra.mxu0 %v277
  %379 = vmatprep.subr.bf16.mxu0 0
  %380 = vmatpush1.bf16.msra.mxu0 %v278
  %381 = vmatprep.subr.bf16.mxu0 0
  %382 = vmatpush1.bf16.msra.mxu0 %v279
  %383 = vmatprep.subr.bf16.mxu0 0
  %384 = vmatpush1.bf16.msra.mxu0 %v280
  %385 = vmatprep.subr.bf16.mxu0 0
  %386 = vmatpush1.bf16.msra.mxu0 %v281
  %387 = vmatprep.subr.bf16.mxu0 0
  %388 = vmatpush1.bf16.msra.mxu0 %v282
  %389 = vmatprep.subr.bf16.mxu0 0
  %390 = vmatpush1.bf16.msra.mxu0 %v283
  %391 = vmatprep.subr.bf16.mxu0 0
  %392 = vmatpush1.bf16.msra.mxu0 %v284
  %393 = vmatprep.subr.bf16.mxu0 0
  %394 = vmatpush1.bf16.msra.mxu0 %v285
  %395 = vmatprep.subr.bf16.mxu0 0
  %396 = vmatpush1.bf16.msra.mxu0 %v286
  %397 = vmatprep.subr.bf16.mxu0 0
  %398 = vmatpush1.bf16.msra.mxu0 %v287
  %399 = vmatprep.subr.bf16.mxu0 0
  %400 = vmatpush1.bf16.msra.mxu0 %v288
  %401 = vmatprep.subr.bf16.mxu0 0
  %402 = vmatpush1.bf16.msra.mxu0 %v289
  %403 = vmatprep.subr.bf16.mxu0 0
  %404 = vmatpush1.bf16.msra.mxu0 %v290
  %405 = vmatprep.subr.bf16.mxu0 0
  %406 = vmatpush1.bf16.msra.mxu0 %v291
  %407 = vmatprep.subr.bf16.mxu0 0
  %408 = vmatpush1.bf16.msra.mxu0 %v292
  %409 = vmatprep.mubr.bf16.mxu0 %v111
  %410 = vmatmul.mubr.bf16.gmra.mrb[0].mxu0 %v110
  %v411 = vpop.f32.mrb[0].mxu0
  %v412 = vadd.f32 %v372, %v411
  %v413 = vpop.f32.mrb[0].mxu0
  %v414 = vpop.f32.mrb[0].mxu0
  %v415 = vpop.f32.mrb[0].mxu0
  %416 = vdwg.mxu0
  %417 = vmatprep.subr.bf16.mxu0 0
  %418 = vmatpush1.bf16.msra.mxu0 %v293
  %419 = vmatprep.subr.bf16.mxu0 0
  %420 = vmatpush1.bf16.msra.mxu0 %v294
  %421 = vmatprep.subr.bf16.mxu0 0
  %422 = vmatpush1.bf16.msra.mxu0 %v295
  %423 = vmatprep.subr.bf16.mxu0 0
  %424 = vmatpush1.bf16.msra.mxu0 %v296
  %425 = vmatprep.subr.bf16.mxu0 0
  %426 = vmatpush1.bf16.msra.mxu0 0
  %427 = vmatprep.subr.bf16.mxu0 0
  %428 = vmatpush1.bf16.msra.mxu0 0
  %429 = vmatprep.subr.bf16.mxu0 0
  %430 = vmatpush1.bf16.msra.mxu0 0
  %431 = vmatprep.subr.bf16.mxu0 0
  %432 = vmatpush1.bf16.msra.mxu0 0
  %433 = vmatprep.subr.bf16.mxu0 0
  %434 = vmatpush1.bf16.msra.mxu0 0
  %435 = vmatprep.subr.bf16.mxu0 0
  %436 = vmatpush1.bf16.msra.mxu0 0
  %437 = vmatprep.subr.bf16.mxu0 0
  %438 = vmatpush1.bf16.msra.mxu0 0
  %439 = vmatprep.subr.bf16.mxu0 0
  %440 = vmatpush1.bf16.msra.mxu0 0
  %441 = vmatprep.subr.bf16.mxu0 0
  %442 = vmatpush1.bf16.msra.mxu0 0
  %443 = vmatprep.subr.bf16.mxu0 0
  %444 = vmatpush1.bf16.msra.mxu0 0
  %445 = vmatprep.subr.bf16.mxu0 0
  %446 = vmatpush1.bf16.msra.mxu0 0
  %447 = vmatprep.subr.bf16.mxu0 0
  %448 = vmatpush1.bf16.msra.mxu0 0
  %449 = vmatprep.mubr.bf16.mxu0 0
  %450 = vmatmul.mubr.bf16.gmra.mrb[0].mxu0 %v335
  %v451 = vpop.f32.mrb[0].mxu0
  %v452 = vadd.f32 %v412, %v451
  %v453 = vpop.f32.mrb[0].mxu0
  %v454 = vpop.f32.mrb[0].mxu0
  %v455 = vpop.f32.mrb[0].mxu0
  %456 = vdwg.mxu0
  %v457 = vld [vmem:[%s3] sm:$0xff]
  %v458 = vadd.f32 %v452, %v457
  %v459 = vmax.f32 %v458, 0.0
  %460 = vst [vmem:[%s4] sm:$0xff] %v459
  // Predicated region
  $region18: #{my_resnet_forward.26} parent=0 // pred_check
    _
  $region19: #{my_resnet_forward.26} parent=0 // pred_check_branch
    %462 = sbr.rel (0) target = $region21
  $region20: #{my_resnet_forward.26} parent=0 // pred_region
    _
  $region21: #{my_resnet_forward.26} parent=0 // pred_fallthru
    _
  // Predicated region
  $region22: #{my_resnet_forward.26} parent=0 // pred_check
    _
  $region23: #{my_resnet_forward.26} parent=0 // pred_check_branch
    %464 = sbr.rel (0) target = $region25
  $region24: #{my_resnet_forward.26} parent=0 // pred_region
    _
  $region25: #{my_resnet_forward.26} parent=0 // pred_fallthru
    _

// kernel: my_resnet_forward.27
$region0: #{my_resnet_forward.27}
  #allocation0 [shape = 'u32[]', space=smem, size = 0x4, offset = 0x4, fixed_abs, tag = 'smem constant byte address 0x4 - core index']
  #allocation1 [shape = 'u32[144,128]{1,0:T(1,128)}', space=vmem, size = 0x12000, scoped, tag = 'internal scratch']
  %s0 = inlined_call_operand.vmem [shape: bf16[248,16], index: 0, kind: input, shape index: {}]
  %s1 = inlined_call_operand.vmem [shape: bf16[16,128], index: 1, kind: input, shape index: {}]
  %s2 = inlined_call_operand.vmem [shape: f32[1,128], index: 2, kind: input, shape index: {}]
  %s3 = inlined_call_operand.vmem [shape: f32[248,128], index: 3, kind: output, shape index: {}]
  %s4 = sld [smem:[#allocation0]]
  $region22: #{my_resnet_forward.27} parent=0
    _
  %s6 = ssub.s32 1, %s4
  %s7 = scalar_select 0, %s6, %s4
  // Predicated region
  $region2: #{my_resnet_forward.27} parent=0 // pred_check
    _
  $region3: #{my_resnet_forward.27} parent=0 // pred_check_branch
    %9 = sbr.rel (0) target = $region5
  $region4: #{my_resnet_forward.27} parent=0 // pred_region
    _
  $region5: #{my_resnet_forward.27} parent=0 // pred_fallthru
    _
  // Predicated region
  $region6: #{my_resnet_forward.27} parent=0 // pred_check
    _
  $region7: #{my_resnet_forward.27} parent=0 // pred_check_branch
    %11 = sbr.rel (0) target = $region9
  $region8: #{my_resnet_forward.27} parent=0 // pred_region
    _
  $region9: #{my_resnet_forward.27} parent=0 // pred_fallthru
    _
  // Predicated region
  $region10: #{my_resnet_forward.27} parent=0 // pred_check
    _
  $region11: #{my_resnet_forward.27} parent=0 // pred_check_branch
    %13 = sbr.rel (0) target = $region13
  $region12: #{my_resnet_forward.27} parent=0 // pred_region
    _
  $region13: #{my_resnet_forward.27} parent=0 // pred_fallthru
    _
  %v15 = vld [vmem:[%s0] sm:$0xf]
  %v16 = vld [vmem:[%s0 + $0x4] sm:$0xf]
  %v17 = vld [vmem:[%s0 + $0x8] sm:$0xf]
  %v18 = vld [vmem:[%s0 + $0xc] sm:$0xf]
  %v19 = vld [vmem:[%s0 + $0x10] sm:$0xf]
  %v20 = vld [vmem:[%s0 + $0x14] sm:$0xf]
  %v21 = vld [vmem:[%s0 + $0x18] sm:$0xf]
  %v22 = vld [vmem:[%s0 + $0x1c] sm:$0xf]
  %v23 = vld [vmem:[%s0 + $0x20] sm:$0xf]
  %v24 = vld [vmem:[%s0 + $0x24] sm:$0xf]
  %v25 = vld [vmem:[%s0 + $0x28] sm:$0xf]
  %v26 = vld [vmem:[%s0 + $0x2c] sm:$0xf]
  %v27 = vld [vmem:[%s0 + $0x30] sm:$0xf]
  %v28 = vld [vmem:[%s0 + $0x34] sm:$0xf]
  %v29 = vld [vmem:[%s0 + $0x38] sm:$0xf]
  %v30 = vld [vmem:[%s0 + $0x3c] sm:$0xf]
  %v31 = vld [vmem:[%s0 + $0x40] sm:$0xf]
  %v32 = vld [vmem:[%s0 + $0x44] sm:$0xf]
  %v33 = vld [vmem:[%s0 + $0x48] sm:$0xf]
  %v34 = vld [vmem:[%s0 + $0x4c] sm:$0xf]
  %v35 = vld [vmem:[%s0 + $0x50] sm:$0xf]
  %v36 = vld [vmem:[%s0 + $0x54] sm:$0xf]
  %v37 = vld [vmem:[%s0 + $0x58] sm:$0xf]
  %v38 = vld [vmem:[%s0 + $0x5c] sm:$0xf]
  %v39 = vld [vmem:[%s0 + $0x60] sm:$0xf]
  %v40 = vld [vmem:[%s0 + $0x64] sm:$0xf]
  %v41 = vld [vmem:[%s0 + $0x68] sm:$0xf]
  %v42 = vld [vmem:[%s0 + $0x6c] sm:$0xf]
  %v43 = vld [vmem:[%s0 + $0x70] sm:$0xf]
  %v44 = vld [vmem:[%s0 + $0x74] sm:$0xf]
  %v45 = vld [vmem:[%s0 + $0x78] sm:$0xf]
  %v46 = vld [vmem:[%s1] sm:$0xf]
  %v47 = vld [vmem:[%s1 + $0x4] sm:$0xf]
  %v48 = vld [vmem:[%s2] sm:$0x1]
  %v50 = vlaneseq
  %v51 = vshrl.u32 %v50, 7
  %v52 = vsub.s32 0, %v51
  %v53 = vrot.slane %v48, %v52
  %v86 = vunpack.c.l.b16 %v15
  %v87 = vunpack.c.l.b16 %v16
  %v88 = vunpack.c.l.b16 %v17
  %v89 = vunpack.c.l.b16 %v18
  %v90 = vunpack.c.l.b16 %v19
  %v91 = vunpack.c.l.b16 %v20
  %v92 = vunpack.c.l.b16 %v21
  %v93 = vunpack.c.l.b16 %v22
  %v94 = vunpack.c.l.b16 %v23
  %v95 = vunpack.c.l.b16 %v24
  %v96 = vunpack.c.l.b16 %v25
  %v97 = vunpack.c.l.b16 %v26
  %v98 = vunpack.c.l.b16 %v27
  %v99 = vunpack.c.l.b16 %v28
  %v100 = vunpack.c.l.b16 %v29
  %v101 = vunpack.c.l.b16 %v30
  %v102 = vunpack.c.l.b16 %v31
  %v103 = vunpack.c.l.b16 %v32
  %v104 = vunpack.c.l.b16 %v33
  %v105 = vunpack.c.l.b16 %v34
  %v106 = vunpack.c.l.b16 %v35
  %v107 = vunpack.c.l.b16 %v36
  %v108 = vunpack.c.l.b16 %v37
  %v109 = vunpack.c.l.b16 %v38
  %v110 = vunpack.c.l.b16 %v39
  %v111 = vunpack.c.l.b16 %v40
  %v112 = vunpack.c.l.b16 %v41
  %v113 = vunpack.c.l.b16 %v42
  %v114 = vunpack.c.l.b16 %v43
  %v115 = vunpack.c.l.b16 %v44
  %v116 = vunpack.c.l.b16 %v45
  %v117 = vpack.c.b16 %v87, %v86
  %v118 = vpack.c.b16 %v89, %v88
  %v119 = vpack.c.b16 %v91, %v90
  %v120 = vpack.c.b16 %v93, %v92
  %v121 = vpack.c.b16 %v95, %v94
  %v122 = vpack.c.b16 %v97, %v96
  %v123 = vpack.c.b16 %v99, %v98
  %v124 = vpack.c.b16 %v101, %v100
  %v125 = vpack.c.b16 %v103, %v102
  %v126 = vpack.c.b16 %v105, %v104
  %v127 = vpack.c.b16 %v107, %v106
  %v128 = vpack.c.b16 %v109, %v108
  %v129 = vpack.c.b16 %v111, %v110
  %v130 = vpack.c.b16 %v113, %v112
  %v131 = vpack.c.b16 %v115, %v114
  %v132 = vpack.c.b16 %v116, %v116
  %v135 = vunpack.c.l.b16 %v46
  %v136 = vunpack.c.l.b16 %v47
  %v137 = vpack.c.b16 %v136, %v135
  %vm139 = vcmask 130048
  %v141 = vsel %vm139, %v117, 0
  %v144 = vsel %vm139, %v118, 0
  %v147 = vsel %vm139, %v119, 0
  %v150 = vsel %vm139, %v120, 0
  %v153 = vsel %vm139, %v121, 0
  %v156 = vsel %vm139, %v122, 0
  %v159 = vsel %vm139, %v123, 0
  %v162 = vsel %vm139, %v124, 0
  %v165 = vsel %vm139, %v125, 0
  %v168 = vsel %vm139, %v126, 0
  %v171 = vsel %vm139, %v127, 0
  %v174 = vsel %vm139, %v128, 0
  %v177 = vsel %vm139, %v129, 0
  %v180 = vsel %vm139, %v130, 0
  %v183 = vsel %vm139, %v131, 0
  %v186 = vsel %vm139, %v132, 0
  %188 = vmatprep.subr.bf16.mxu0 0
  %189 = vmatpush1.bf16.msra.mxu0 %v137
  %190 = vmatprep.subr.bf16.mxu0 0
  %191 = vmatpush1.bf16.msra.mxu0 0
  %192 = vmatprep.subr.bf16.mxu0 0
  %193 = vmatpush1.bf16.msra.mxu0 0
  %194 = vmatprep.subr.bf16.mxu0 0
  %195 = vmatpush1.bf16.msra.mxu0 0
  %196 = vmatprep.subr.bf16.mxu0 0
  %197 = vmatpush1.bf16.msra.mxu0 0
  %198 = vmatprep.subr.bf16.mxu0 0
  %199 = vmatpush1.bf16.msra.mxu0 0
  %200 = vmatprep.subr.bf16.mxu0 0
  %201 = vmatpush1.bf16.msra.mxu0 0
  %202 = vmatprep.subr.bf16.mxu0 0
  %203 = vmatpush1.bf16.msra.mxu0 0
  %204 = vmatprep.subr.bf16.mxu0 0
  %205 = vmatpush1.bf16.msra.mxu0 0
  %206 = vmatprep.subr.bf16.mxu0 0
  %207 = vmatpush1.bf16.msra.mxu0 0
  %208 = vmatprep.subr.bf16.mxu0 0
  %209 = vmatpush1.bf16.msra.mxu0 0
  %210 = vmatprep.subr.bf16.mxu0 0
  %211 = vmatpush1.bf16.msra.mxu0 0
  %212 = vmatprep.subr.bf16.mxu0 0
  %213 = vmatpush1.bf16.msra.mxu0 0
  %214 = vmatprep.subr.bf16.mxu0 0
  %215 = vmatpush1.bf16.msra.mxu0 0
  %216 = vmatprep.subr.bf16.mxu0 0
  %217 = vmatpush1.bf16.msra.mxu0 0
  %218 = vmatprep.subr.bf16.mxu0 0
  %219 = vmatpush1.bf16.msra.mxu0 0
  %220 = vmatprep.mubr.bf16.mxu0 0
  %221 = vmatmul.mubr.bf16.gmra.mrb[0].mxu0 %v141
  %v222 = vpop.f32.mrb[0].mxu0
  %v223 = vadd.f32 %v53, %v222
  %v224 = vpop.f32.mrb[0].mxu0
  %v225 = vpop.f32.mrb[0].mxu0
  %v226 = vadd.f32 %v53, %v225
  %v227 = vpop.f32.mrb[0].mxu0
  %228 = vmatprep.mubr.bf16.mxu0 0
  %229 = vmatmul.mubr.bf16.gmra.mrb[0].mxu0 %v144
  %v230 = vpop.f32.mrb[0].mxu0
  %v231 = vadd.f32 %v53, %v230
  %v232 = vpop.f32.mrb[0].mxu0
  %v233 = vpop.f32.mrb[0].mxu0
  %v234 = vadd.f32 %v53, %v233
  %v235 = vpop.f32.mrb[0].mxu0
  %236 = vmatprep.mubr.bf16.mxu0 0
  %237 = vmatmul.mubr.bf16.gmra.mrb[0].mxu0 %v147
  %v238 = vpop.f32.mrb[0].mxu0
  %v239 = vadd.f32 %v53, %v238
  %v240 = vpop.f32.mrb[0].mxu0
  %v241 = vpop.f32.mrb[0].mxu0
  %v242 = vadd.f32 %v53, %v241
  %v243 = vpop.f32.mrb[0].mxu0
  %244 = vmatprep.mubr.bf16.mxu0 0
  %245 = vmatmul.mubr.bf16.gmra.mrb[0].mxu0 %v150
  %v246 = vpop.f32.mrb[0].mxu0
  %v247 = vadd.f32 %v53, %v246
  %v248 = vpop.f32.mrb[0].mxu0
  %v249 = vpop.f32.mrb[0].mxu0
  %v250 = vadd.f32 %v53, %v249
  %v251 = vpop.f32.mrb[0].mxu0
  %252 = vmatprep.mubr.bf16.mxu0 0
  %253 = vmatmul.mubr.bf16.gmra.mrb[0].mxu0 %v153
  %v254 = vpop.f32.mrb[0].mxu0
  %v255 = vadd.f32 %v53, %v254
  %v256 = vpop.f32.mrb[0].mxu0
  %v257 = vpop.f32.mrb[0].mxu0
  %v258 = vadd.f32 %v53, %v257
  %v259 = vpop.f32.mrb[0].mxu0
  %260 = vmatprep.mubr.bf16.mxu0 0
  %261 = vmatmul.mubr.bf16.gmra.mrb[0].mxu0 %v156
  %v262 = vpop.f32.mrb[0].mxu0
  %v263 = vadd.f32 %v53, %v262
  %v264 = vpop.f32.mrb[0].mxu0
  %v265 = vpop.f32.mrb[0].mxu0
  %v266 = vadd.f32 %v53, %v265
  %v267 = vpop.f32.mrb[0].mxu0
  %268 = vmatprep.mubr.bf16.mxu0 0
  %269 = vmatmul.mubr.bf16.gmra.mrb[0].mxu0 %v159
  %v270 = vpop.f32.mrb[0].mxu0
  %v271 = vadd.f32 %v53, %v270
  %v272 = vpop.f32.mrb[0].mxu0
  %v273 = vpop.f32.mrb[0].mxu0
  %v274 = vadd.f32 %v53, %v273
  %v275 = vpop.f32.mrb[0].mxu0
  %276 = vmatprep.mubr.bf16.mxu0 0
  %277 = vmatmul.mubr.bf16.gmra.mrb[0].mxu0 %v162
  %v278 = vpop.f32.mrb[0].mxu0
  %v279 = vadd.f32 %v53, %v278
  %v280 = vpop.f32.mrb[0].mxu0
  %v281 = vpop.f32.mrb[0].mxu0
  %v282 = vadd.f32 %v53, %v281
  %v283 = vpop.f32.mrb[0].mxu0
  %284 = vmatprep.mubr.bf16.mxu0 0
  %285 = vmatmul.mubr.bf16.gmra.mrb[0].mxu0 %v165
  %v286 = vpop.f32.mrb[0].mxu0
  %v287 = vadd.f32 %v53, %v286
  %v288 = vpop.f32.mrb[0].mxu0
  %v289 = vpop.f32.mrb[0].mxu0
  %v290 = vadd.f32 %v53, %v289
  %v291 = vpop.f32.mrb[0].mxu0
  %292 = vmatprep.mubr.bf16.mxu0 0
  %293 = vmatmul.mubr.bf16.gmra.mrb[0].mxu0 %v168
  %v294 = vpop.f32.mrb[0].mxu0
  %v295 = vadd.f32 %v53, %v294
  %v296 = vpop.f32.mrb[0].mxu0
  %v297 = vpop.f32.mrb[0].mxu0
  %v298 = vadd.f32 %v53, %v297
  %v299 = vpop.f32.mrb[0].mxu0
  %300 = vmatprep.mubr.bf16.mxu0 0
  %301 = vmatmul.mubr.bf16.gmra.mrb[0].mxu0 %v171
  %v302 = vpop.f32.mrb[0].mxu0
  %v303 = vadd.f32 %v53, %v302
  %v304 = vpop.f32.mrb[0].mxu0
  %v305 = vpop.f32.mrb[0].mxu0
  %v306 = vadd.f32 %v53, %v305
  %v307 = vpop.f32.mrb[0].mxu0
  %308 = vmatprep.mubr.bf16.mxu0 0
  %309 = vmatmul.mubr.bf16.gmra.mrb[0].mxu0 %v174
  %v310 = vpop.f32.mrb[0].mxu0
  %v311 = vadd.f32 %v53, %v310
  %v312 = vpop.f32.mrb[0].mxu0
  %v313 = vpop.f32.mrb[0].mxu0
  %v314 = vadd.f32 %v53, %v313
  %v315 = vpop.f32.mrb[0].mxu0
  %316 = vmatprep.mubr.bf16.mxu0 0
  %317 = vmatmul.mubr.bf16.gmra.mrb[0].mxu0 %v177
  %v318 = vpop.f32.mrb[0].mxu0
  %v319 = vadd.f32 %v53, %v318
  %v320 = vpop.f32.mrb[0].mxu0
  %v321 = vpop.f32.mrb[0].mxu0
  %v322 = vadd.f32 %v53, %v321
  %v323 = vpop.f32.mrb[0].mxu0
  %324 = vmatprep.mubr.bf16.mxu0 0
  %325 = vmatmul.mubr.bf16.gmra.mrb[0].mxu0 %v180
  %v326 = vpop.f32.mrb[0].mxu0
  %v327 = vadd.f32 %v53, %v326
  %v328 = vpop.f32.mrb[0].mxu0
  %v329 = vpop.f32.mrb[0].mxu0
  %v330 = vadd.f32 %v53, %v329
  %v331 = vpop.f32.mrb[0].mxu0
  %332 = vmatprep.mubr.bf16.mxu0 0
  %333 = vmatmul.mubr.bf16.gmra.mrb[0].mxu0 %v183
  %v334 = vpop.f32.mrb[0].mxu0
  %v335 = vadd.f32 %v53, %v334
  %v336 = vpop.f32.mrb[0].mxu0
  %v337 = vpop.f32.mrb[0].mxu0
  %v338 = vadd.f32 %v53, %v337
  %v339 = vpop.f32.mrb[0].mxu0
  %340 = vmatprep.mubr.bf16.mxu0 0
  %341 = vmatmul.mubr.bf16.gmra.mrb[0].mxu0 %v186
  %v342 = vpop.f32.mrb[0].mxu0
  %v343 = vadd.f32 %v53, %v342
  %v344 = vpop.f32.mrb[0].mxu0
  %v345 = vpop.f32.mrb[0].mxu0
  %v346 = vpop.f32.mrb[0].mxu0
  %347 = vdwg.mxu0
  %348 = vst [vmem:[%s3] sm:$0xff] %v223
  %349 = vst [vmem:[%s3 + $0x8] sm:$0xff] %v226
  %350 = vst [vmem:[%s3 + $0x10] sm:$0xff] %v231
  %351 = vst [vmem:[%s3 + $0x18] sm:$0xff] %v234
  %352 = vst [vmem:[%s3 + $0x20] sm:$0xff] %v239
  %353 = vst [vmem:[%s3 + $0x28] sm:$0xff] %v242
  %354 = vst [vmem:[%s3 + $0x30] sm:$0xff] %v247
  %355 = vst [vmem:[%s3 + $0x38] sm:$0xff] %v250
  %356 = vst [vmem:[%s3 + $0x40] sm:$0xff] %v255
  %357 = vst [vmem:[%s3 + $0x48] sm:$0xff] %v258
  %358 = vst [vmem:[%s3 + $0x50] sm:$0xff] %v263
  %359 = vst [vmem:[%s3 + $0x58] sm:$0xff] %v266
  %360 = vst [vmem:[%s3 + $0x60] sm:$0xff] %v271
  %361 = vst [vmem:[%s3 + $0x68] sm:$0xff] %v274
  %362 = vst [vmem:[%s3 + $0x70] sm:$0xff] %v279
  %363 = vst [vmem:[%s3 + $0x78] sm:$0xff] %v282
  %364 = vst [vmem:[%s3 + $0x80] sm:$0xff] %v287
  %365 = vst [vmem:[%s3 + $0x88] sm:$0xff] %v290
  %366 = vst [vmem:[%s3 + $0x90] sm:$0xff] %v295
  %367 = vst [vmem:[%s3 + $0x98] sm:$0xff] %v298
  %368 = vst [vmem:[%s3 + $0xa0] sm:$0xff] %v303
  %369 = vst [vmem:[%s3 + $0xa8] sm:$0xff] %v306
  %370 = vst [vmem:[%s3 + $0xb0] sm:$0xff] %v311
  %371 = vst [vmem:[%s3 + $0xb8] sm:$0xff] %v314
  %372 = vst [vmem:[%s3 + $0xc0] sm:$0xff] %v319
  %373 = vst [vmem:[%s3 + $0xc8] sm:$0xff] %v322
  %374 = vst [vmem:[%s3 + $0xd0] sm:$0xff] %v327
  %375 = vst [vmem:[%s3 + $0xd8] sm:$0xff] %v330
  %376 = vst [vmem:[%s3 + $0xe0] sm:$0xff] %v335
  %377 = vst [vmem:[%s3 + $0xe8] sm:$0xff] %v338
  %378 = vst [vmem:[%s3 + $0xf0] sm:$0xff] %v343
  // Predicated region
  $region14: #{my_resnet_forward.27} parent=0 // pred_check
    _
  $region15: #{my_resnet_forward.27} parent=0 // pred_check_branch
    %380 = sbr.rel (0) target = $region17
  $region16: #{my_resnet_forward.27} parent=0 // pred_region
    _
  $region17: #{my_resnet_forward.27} parent=0 // pred_fallthru
    _
  // Predicated region
  $region18: #{my_resnet_forward.27} parent=0 // pred_check
    _
  $region19: #{my_resnet_forward.27} parent=0 // pred_check_branch
    %382 = sbr.rel (0) target = $region21
  $region20: #{my_resnet_forward.27} parent=0 // pred_region
    _
  $region21: #{my_resnet_forward.27} parent=0 // pred_fallthru
    _

</llo_original>
